<compile_context>
chip_gen: v7x
topology: tpu7x:2x2x1
jax: 0.10.0
libtpu: 0.0.40
codegen_flags: <defaults>
</compile_context>

<pallas_src>
import jax
import jax.numpy as jnp
import numpy as np
from jax.experimental import pallas as pl
from jax.experimental.pallas import tpu as pltpu

# Small, forward-consistent shapes.
BLOCK_SIZE = 64      # max context of the reference module
B = 2                # batch
T = 8                # sequence length (<= BLOCK_SIZE)
C = 32               # n_embd
N_HEAD = 4
HEAD_SIZE = C // N_HEAD
N_LAYER = 2
VOCAB = 128          # multiple of 128 -> lane-dense logits


def gpt_forward_kernel(idx_ref, emb_ref, wattn_ref, w1_ref, w2_ref, wh_ref,
                       vecc_ref, vecw_ref, logits_ref):
    """Full GPT forward (eval mode) for ONE batch row (grid axis 0 = batch)."""
    f32 = jnp.float32
    t = idx_ref.shape[-1]
    c, v = wh_ref.shape
    n_layer = wattn_ref.shape[0]
    n_head = wattn_ref.shape[1] // 4
    # hs = wattn_ref.shape[3]  (implied by the slab layout)

    vec_c = vecc_ref[...]                      # (6*n_layer + 2, c)
    vec_w = vecw_ref[...]                      # (n_layer + 1, max(4c, v))

    def layer_norm(z, g, beta):                # z: (t, c); g, beta: (1, c)
        mu = jnp.mean(z, axis=-1, keepdims=True)
        d = z - mu
        var = jnp.mean(d * d, axis=-1, keepdims=True)
        return d * jax.lax.rsqrt(var + 1e-5) * g + beta

    # ---- token + position embeddings (gather as a one-hot matmul on MXU) ----
    ids = idx_ref[0]                                               # (1, t) int32
    vocab_iota = jax.lax.broadcasted_iota(jnp.int32, (1, t, v), 2)
    one_hot = jnp.where(vocab_iota == ids[:, :, None], f32(1.0), f32(0.0))
    tok = jnp.dot(one_hot.reshape(t, v), emb_ref[0:v, :],
                  preferred_element_type=f32)                      # (t, c)
    x = tok + emb_ref[v:v + t, :]                                  # + pos emb

    # causal mask shared by all layers / heads
    row = jax.lax.broadcasted_iota(jnp.int32, (t, t), 0)
    col = jax.lax.broadcasted_iota(jnp.int32, (t, t), 1)
    causal = (row >= col)[None, :, :]                              # (1, t, t)
    neg_big = f32(-1e30)          # finite "minus inf": exp underflows to 0.0

    for l in range(n_layer):                                       # static unroll
        base = 6 * l
        # -------- attention sub-block: x = x + Wp(MHA(LN1(x))) + bp --------
        h_in = layer_norm(x, vec_c[base + 0:base + 1],
                          vec_c[base + 1:base + 2])                # (t, c)
        w_l = wattn_ref[l]                                         # (4*n_head, c, hs)
        # Q/K/V for all heads in ONE batched dot (1/sqrt(hs) folded into Wq).
        h_in_b = jnp.broadcast_to(h_in, (3 * n_head, t, c))
        qkv = jnp.einsum("htc,hcd->htd", h_in_b, w_l[0:3 * n_head],
                         preferred_element_type=f32)               # (3*n_head, t, hs)
        qh = qkv[0:n_head]
        kh = qkv[n_head:2 * n_head]
        vh = qkv[2 * n_head:3 * n_head]
        s = jnp.einsum("hqd,hkd->hqk", qh, kh,
                       preferred_element_type=f32)                 # (n_head, t, t)
        s = jnp.where(causal, s, neg_big)
        e = jnp.exp(s - jnp.max(s, axis=-1, keepdims=True))
        probs = e * pl.reciprocal(jnp.sum(e, axis=-1, keepdims=True),
                                  approx=True)
        ctx = jnp.einsum("hqk,hkd->hqd", probs, vh,
                         preferred_element_type=f32)               # (n_head, t, hs)
        # output projection: one batched dot against the Wp^T slab + head sum
        # (single op + leading-axis reduce; no concat, no per-head loop).
        attn = jnp.sum(
            jnp.einsum("htd,hcd->htc", ctx, w_l[3 * n_head:4 * n_head],
                       preferred_element_type=f32), axis=0)        # (t, c)
        x = x + attn + vec_c[base + 4:base + 5]
        # TODO(synk): attention / projection dropout omitted (eval mode).

        # -------- feed-forward sub-block: x = x + W2(relu(W1(LN2(x)))) --------
        f_in = layer_norm(x, vec_c[base + 2:base + 3],
                          vec_c[base + 3:base + 4])
        hid = jnp.maximum(
            jnp.dot(f_in, w1_ref[l], preferred_element_type=f32)
            + vec_w[l:l + 1, 0:4 * c], 0.0)                        # (t, 4c)
        x = (x + jnp.dot(hid, w2_ref[l], preferred_element_type=f32)
             + vec_c[base + 5:base + 6])

    # ------------- final LayerNorm + LM head (lane-dense V = 128) -------------
    x = layer_norm(x, vec_c[6 * n_layer:6 * n_layer + 1],
                   vec_c[6 * n_layer + 1:6 * n_layer + 2])
    logits = (jnp.dot(x, wh_ref[...], preferred_element_type=f32)
              + vec_w[n_layer:n_layer + 1, 0:v])
    logits_ref[...] = logits.reshape(1, t, v).astype(logits_ref.dtype)


@jax.jit
def gpt_forward(idx, params):
    """Whole-model forward (targets=None path). Returns logits (B, T, VOCAB)."""
    n_layer, c, _ = params["wq"].shape
    n_head = N_HEAD
    hs = c // n_head
    v = params["tok_table"].shape[0]
    b, t = idx.shape

    # ---- host-side (one-time) weight packing: 18 kernel inputs -> 8 ----------
    def per_head_cols(w):            # (L, C, C) -> (L, n_head, C, hs)
        return jnp.transpose(w.reshape(n_layer, c, n_head, hs), (0, 2, 1, 3))

    w_attn = jnp.concatenate(
        [per_head_cols(params["wq"] * (hs ** -0.5)),   # Q (scale folded in)
         per_head_cols(params["wk"]),                  # K
         per_head_cols(params["wv"]),                  # V
         # Wp rows grouped per head, transposed -> (L, n_head, C, hs)
         jnp.transpose(params["wp"].reshape(n_layer, n_head, hs, c),
                       (0, 1, 3, 2))],
        axis=1)                                        # (L, 4*n_head, C, hs)

    vec_c = jnp.concatenate([
        jnp.stack([params["ln1g"], params["ln1b"], params["ln2g"],
                   params["ln2b"], params["bp"], params["b2"]],
                  axis=1).reshape(6 * n_layer, c),
        params["lnfg"].reshape(1, c),
        params["lnfb"].reshape(1, c)], axis=0)         # (6L + 2, C)

    wide = max(4 * c, v)
    pad_w = lambda a: jnp.pad(a, ((0, 0), (0, wide - a.shape[-1])))
    vec_w = jnp.concatenate([pad_w(params["b1"]),
                             pad_w(params["bh"].reshape(1, v))],
                            axis=0)                    # (L + 1, wide)

    emb = jnp.concatenate([params["tok_table"], params["pos_table"]], axis=0)
    idx3 = idx.astype(jnp.int32).reshape(b, 1, t)

    args = [idx3, emb, w_attn, params["w1"], params["w2"], params["wh"],
            vec_c, vec_w]

    def rep_spec(a):   # whole-array block, replicated across the batch grid
        return pl.BlockSpec(a.shape, lambda i, nd=a.ndim: (0,) * nd)

    return pl.pallas_call(
        gpt_forward_kernel,
        out_shape=jax.ShapeDtypeStruct((b, t, v), jnp.float32),
        grid=(b,),                                     # one batch row per step
        in_specs=[pl.BlockSpec((1, 1, t), lambda i: (i, 0, 0))]
                 + [rep_spec(a) for a in args[1:]],
        out_specs=pl.BlockSpec((1, t, v), lambda i: (i, 0, 0)),
        compiler_params=pltpu.CompilerParams(
            dimension_semantics=("parallel",)),        # v7x: rows on both TCs
    )(*args)


# ----------------------------- pure-JAX reference -----------------------------
def _ln_ref(x, g, b, eps=1e-5):
    mu = x.mean(axis=-1, keepdims=True)
    var = ((x - mu) ** 2).mean(axis=-1, keepdims=True)
    return (x - mu) / jnp.sqrt(var + eps) * g + b


def reference_forward(idx, p):
    """Pure-JAX mirror of GPTLanguageModel.forward (eval mode, targets=None)."""
    _, t = idx.shape
    x = p["tok_table"][idx] + p["pos_table"][:t]
    n_layer, c, _ = p["wq"].shape
    hs = c // N_HEAD
    tril = jnp.tril(jnp.ones((t, t), dtype=bool))
    for l in range(n_layer):
        h_in = _ln_ref(x, p["ln1g"][l], p["ln1b"][l])
        heads = []
        for h in range(N_HEAD):
            sl = slice(h * hs, (h + 1) * hs)
            q = h_in @ p["wq"][l][:, sl]
            k = h_in @ p["wk"][l][:, sl]
            vv = h_in @ p["wv"][l][:, sl]
            wei = (q @ jnp.swapaxes(k, -1, -2)) * hs ** -0.5
            wei = jnp.where(tril, wei, -jnp.inf)
            wei = jax.nn.softmax(wei, axis=-1)
            heads.append(wei @ vv)
        cat = jnp.concatenate(heads, axis=-1)
        x = x + cat @ p["wp"][l] + p["bp"][l]
        f_in = _ln_ref(x, p["ln2g"][l], p["ln2b"][l])
        hid = jax.nn.relu(f_in @ p["w1"][l] + p["b1"][l])
        x = x + hid @ p["w2"][l] + p["b2"][l]
    x = _ln_ref(x, p["lnfg"], p["lnfb"])
    return x @ p["wh"] + p["bh"]


if __name__ == "__main__":
    key = jax.random.PRNGKey(0)
    ks = jax.random.split(key, 20)

    def nrm(k, shape, std=0.02):
        return std * jax.random.normal(k, shape, dtype=jnp.float32)

    # normal(0, 0.02) like _init_weights; biases / LN affine params randomized
    # (non-zero) so the bias-add and affine-LN paths are actually exercised.
    params = {
        "tok_table": nrm(ks[0], (VOCAB, C)),
        "pos_table": nrm(ks[1], (BLOCK_SIZE, C)),
        "wq": nrm(ks[2], (N_LAYER, C, C)),
        "wk": nrm(ks[3], (N_LAYER, C, C)),
        "wv": nrm(ks[4], (N_LAYER, C, C)),
        "wp": nrm(ks[5], (N_LAYER, C, C)),
        "bp": nrm(ks[6], (N_LAYER, C)),
        "ln1g": 1.0 + nrm(ks[7], (N_LAYER, C), 0.1),
        "ln1b": nrm(ks[8], (N_LAYER, C), 0.1),
        "ln2g": 1.0 + nrm(ks[9], (N_LAYER, C), 0.1),
        "ln2b": nrm(ks[10], (N_LAYER, C), 0.1),
        "w1": nrm(ks[11], (N_LAYER, C, 4 * C)),
        "b1": nrm(ks[12], (N_LAYER, 4 * C)),
        "w2": nrm(ks[13], (N_LAYER, 4 * C, C)),
        "b2": nrm(ks[14], (N_LAYER, C)),
        "lnfg": 1.0 + nrm(ks[15], (C,), 0.1),
        "lnfb": nrm(ks[16], (C,), 0.1),
        "wh": nrm(ks[17], (C, VOCAB)),
        "bh": nrm(ks[18], (VOCAB,)),
    }
    idx = jax.random.randint(ks[19], (B, T), 0, VOCAB, dtype=jnp.int32)

    logits = gpt_forward(idx, params)
    logits = jax.block_until_ready(logits)
    assert logits.shape == (B, T, VOCAB)

    ref = reference_forward(idx, params)
    # tolerance covers the EUP approximate reciprocal used in the softmax
    np.testing.assert_allclose(np.asarray(logits), np.asarray(ref),
                               rtol=1e-2, atol=5e-3)

    print("KERNEL_OK")
</pallas_src>

<mosaic_0001>
module attributes {stable_mosaic.version = 11 : i64} {
  func.func @gpt_forward_kernel(%arg0: i32, %arg1: memref<1x1x8xi32, #tpu.memory_space<vmem>>, %arg2: memref<192x32xf32, #tpu.memory_space<vmem>>, %arg3: memref<2x16x32x8xf32, #tpu.memory_space<vmem>>, %arg4: memref<2x32x128xf32, #tpu.memory_space<vmem>>, %arg5: memref<2x128x32xf32, #tpu.memory_space<vmem>>, %arg6: memref<32x128xf32, #tpu.memory_space<vmem>>, %arg7: memref<14x32xf32, #tpu.memory_space<vmem>>, %arg8: memref<3x128xf32, #tpu.memory_space<vmem>>, %arg9: memref<1x8x128xf32, #tpu.memory_space<vmem>>) attributes {dimension_semantics = [#tpu.dimension_semantics<parallel>], iteration_bounds = array<i64: 2>, scalar_prefetch = 0 : i64, scratch_operands = 0 : i64, tpu.core_type = #tpu.core_type<tc>, window_params = [{transform_indices = @transform_0, window_bounds = array<i64: 1, 1, 8>}, {pipeline_mode = #tpu.pipeline_mode<synchronous>, transform_indices = @transform_1, window_bounds = array<i64: 192, 32>}, {pipeline_mode = #tpu.pipeline_mode<synchronous>, transform_indices = @transform_2, window_bounds = array<i64: 2, 16, 32, 8>}, {pipeline_mode = #tpu.pipeline_mode<synchronous>, transform_indices = @transform_3, window_bounds = array<i64: 2, 32, 128>}, {pipeline_mode = #tpu.pipeline_mode<synchronous>, transform_indices = @transform_4, window_bounds = array<i64: 2, 128, 32>}, {pipeline_mode = #tpu.pipeline_mode<synchronous>, transform_indices = @transform_5, window_bounds = array<i64: 32, 128>}, {pipeline_mode = #tpu.pipeline_mode<synchronous>, transform_indices = @transform_6, window_bounds = array<i64: 14, 32>}, {pipeline_mode = #tpu.pipeline_mode<synchronous>, transform_indices = @transform_7, window_bounds = array<i64: 3, 128>}, {transform_indices = @transform_8, window_bounds = array<i64: 1, 8, 128>}]} {
    %c0 = arith.constant 0 : index
    %c0_0 = arith.constant 0 : index
    %0 = vector.load %arg7[%c0, %c0_0] : memref<14x32xf32, #tpu.memory_space<vmem>>, vector<14x32xf32>
    %c0_1 = arith.constant 0 : index
    %c0_2 = arith.constant 0 : index
    %1 = vector.load %arg8[%c0_1, %c0_2] : memref<3x128xf32, #tpu.memory_space<vmem>>, vector<3x128xf32>
    %c0_3 = arith.constant 0 : index
    %c0_4 = arith.constant 0 : index
    %c0_5 = arith.constant 0 : index
    %2 = vector.load %arg1[%c0_3, %c0_4, %c0_5] : memref<1x1x8xi32, #tpu.memory_space<vmem>>, vector<1x1x8xi32>
    %3 = vector.shape_cast %2 : vector<1x1x8xi32> to vector<1x8xi32>
    %4 = tpu.iota {dimensions = array<i32: 2>} : vector<1x8x128xi32>
    %5 = vector.shape_cast %3 : vector<1x8xi32> to vector<1x8x1xi32>
    %6 = vector.broadcast %5 : vector<1x8x1xi32> to vector<1x8x128xi32>
    %7 = arith.cmpi eq, %4, %6 : vector<1x8x128xi32>
    %cst = arith.constant 1.000000e+00 : f32
    %cst_6 = arith.constant 0.000000e+00 : f32
    %8 = vector.broadcast %cst : f32 to vector<1x8x128xf32>
    %9 = vector.broadcast %cst_6 : f32 to vector<1x8x128xf32>
    %10 = arith.select %7, %8, %9 : vector<1x8x128xi1>, vector<1x8x128xf32>
    %11 = vector.shape_cast %10 : vector<1x8x128xf32> to vector<8x128xf32>
    %c0_7 = arith.constant 0 : index
    %c0_8 = arith.constant 0 : index
    %12 = vector.load %arg2[%c0_7, %c0_8] : memref<192x32xf32, #tpu.memory_space<vmem>>, vector<128x32xf32>
    %cst_9 = arith.constant dense<0.000000e+00> : vector<8x32xf32>
    %13 = tpu.matmul %11, %12, %cst_9 {dimension_numbers = #tpu.dot_dimension_numbers<[1], [0], [0], [1], [0, 0, 1, 1], [], []>} : vector<8x128xf32>, vector<128x32xf32>, vector<8x32xf32> -> vector<8x32xf32>
    %c128 = arith.constant 128 : index
    %c0_10 = arith.constant 0 : index
    %14 = vector.load %arg2[%c128, %c0_10] : memref<192x32xf32, #tpu.memory_space<vmem>>, vector<8x32xf32>
    %15 = arith.addf %13, %14 : vector<8x32xf32>
    %16 = tpu.iota {dimensions = array<i32: 0>} : vector<8x8xi32>
    %17 = tpu.iota {dimensions = array<i32: 1>} : vector<8x8xi32>
    %18 = arith.cmpi sge, %16, %17 : vector<8x8xi32>
    %19 = vector.shape_cast %18 : vector<8x8xi1> to vector<1x8x8xi1>
    %20 = vector.extract_strided_slice %0 {offsets = [0, 0], sizes = [1, 32], strides = [1, 1]} : vector<14x32xf32> to vector<1x32xf32>
    %21 = vector.extract_strided_slice %0 {offsets = [1, 0], sizes = [1, 32], strides = [1, 1]} : vector<14x32xf32> to vector<1x32xf32>
    %cst_11 = arith.constant dense<0.000000e+00> : vector<8xf32>
    %22 = vector.multi_reduction <add>, %15, %cst_11 [1] : vector<8x32xf32> to vector<8xf32>
    %23 = vector.shape_cast %22 : vector<8xf32> to vector<8x1xf32>
    %cst_12 = arith.constant 3.200000e+01 : f32
    %24 = vector.broadcast %cst_12 : f32 to vector<8x1xf32>
    %25 = arith.divf %23, %24 : vector<8x1xf32>
    %26 = vector.broadcast %25 : vector<8x1xf32> to vector<8x32xf32>
    %27 = arith.subf %15, %26 : vector<8x32xf32>
    %28 = arith.mulf %27, %27 : vector<8x32xf32>
    %cst_13 = arith.constant dense<0.000000e+00> : vector<8xf32>
    %29 = vector.multi_reduction <add>, %28, %cst_13 [1] : vector<8x32xf32> to vector<8xf32>
    %30 = vector.shape_cast %29 : vector<8xf32> to vector<8x1xf32>
    %cst_14 = arith.constant 3.200000e+01 : f32
    %31 = vector.broadcast %cst_14 : f32 to vector<8x1xf32>
    %32 = arith.divf %30, %31 : vector<8x1xf32>
    %cst_15 = arith.constant 9.99999974E-6 : f32
    %33 = vector.broadcast %cst_15 : f32 to vector<8x1xf32>
    %34 = arith.addf %32, %33 : vector<8x1xf32>
    %35 = math.rsqrt %34 : vector<8x1xf32>
    %36 = vector.broadcast %35 : vector<8x1xf32> to vector<8x32xf32>
    %37 = arith.mulf %27, %36 : vector<8x32xf32>
    %38 = vector.broadcast %20 : vector<1x32xf32> to vector<8x32xf32>
    %39 = arith.mulf %37, %38 : vector<8x32xf32>
    %40 = vector.broadcast %21 : vector<1x32xf32> to vector<8x32xf32>
    %41 = arith.addf %39, %40 : vector<8x32xf32>
    %c0_16 = arith.constant 0 : index
    %c0_17 = arith.constant 0 : index
    %c0_18 = arith.constant 0 : index
    %c0_19 = arith.constant 0 : index
    %42 = vector.load %arg3[%c0_16, %c0_17, %c0_18, %c0_19] : memref<2x16x32x8xf32, #tpu.memory_space<vmem>>, vector<1x16x32x8xf32>
    %43 = vector.shape_cast %42 : vector<1x16x32x8xf32> to vector<16x32x8xf32>
    %44 = vector.shape_cast %41 : vector<8x32xf32> to vector<1x8x32xf32>
    %45 = vector.broadcast %44 : vector<1x8x32xf32> to vector<12x8x32xf32>
    %46 = vector.extract_strided_slice %43 {offsets = [0, 0, 0], sizes = [12, 32, 8], strides = [1, 1, 1]} : vector<16x32x8xf32> to vector<12x32x8xf32>
    "tpu.trace_start"() <{level = 10 : i32, message = "htc,hcd->htd"}> : () -> ()
    %cst_20 = arith.constant dense<0.000000e+00> : vector<12x8x8xf32>
    %47 = tpu.matmul %45, %46, %cst_20 {dimension_numbers = #tpu.dot_dimension_numbers<[2], [1], [1], [2], [0, 0, 0, 1, 1, 2], [0], [0]>} : vector<12x8x32xf32>, vector<12x32x8xf32>, vector<12x8x8xf32> -> vector<12x8x8xf32>
    "tpu.trace_stop"() : () -> ()
    %48 = vector.extract_strided_slice %47 {offsets = [0, 0, 0], sizes = [4, 8, 8], strides = [1, 1, 1]} : vector<12x8x8xf32> to vector<4x8x8xf32>
    %49 = vector.extract_strided_slice %47 {offsets = [4, 0, 0], sizes = [4, 8, 8], strides = [1, 1, 1]} : vector<12x8x8xf32> to vector<4x8x8xf32>
    %50 = vector.extract_strided_slice %47 {offsets = [8, 0, 0], sizes = [4, 8, 8], strides = [1, 1, 1]} : vector<12x8x8xf32> to vector<4x8x8xf32>
    "tpu.trace_start"() <{level = 10 : i32, message = "hqd,hkd->hqk"}> : () -> ()
    %cst_21 = arith.constant dense<0.000000e+00> : vector<4x8x8xf32>
    %51 = tpu.matmul %48, %49, %cst_21 {dimension_numbers = #tpu.dot_dimension_numbers<[2], [2], [1], [1], [0, 0, 0, 1, 1, 1], [0], [0]>} : vector<4x8x8xf32>, vector<4x8x8xf32>, vector<4x8x8xf32> -> vector<4x8x8xf32>
    %cst_22 = arith.constant -1.000000e+30 : f32
    "tpu.trace_stop"() : () -> ()
    %52 = vector.shape_cast %19 : vector<1x8x8xi1> to vector<1x8x8xi1>
    %53 = vector.broadcast %52 : vector<1x8x8xi1> to vector<4x8x8xi1>
    %54 = vector.broadcast %cst_22 : f32 to vector<4x8x8xf32>
    %55 = arith.select %53, %51, %54 : vector<4x8x8xi1>, vector<4x8x8xf32>
    %cst_23 = arith.constant dense<0xFF800000> : vector<4x8xf32>
    %56 = vector.multi_reduction <maximumf>, %55, %cst_23 [2] : vector<4x8x8xf32> to vector<4x8xf32>
    %57 = vector.shape_cast %56 : vector<4x8xf32> to vector<4x8x1xf32>
    %58 = vector.broadcast %57 : vector<4x8x1xf32> to vector<4x8x8xf32>
    %59 = arith.subf %55, %58 : vector<4x8x8xf32>
    %60 = math.exp %59 : vector<4x8x8xf32>
    %cst_24 = arith.constant dense<0.000000e+00> : vector<4x8xf32>
    %61 = vector.multi_reduction <add>, %60, %cst_24 [2] : vector<4x8x8xf32> to vector<4x8xf32>
    %62 = vector.shape_cast %61 : vector<4x8xf32> to vector<4x8x1xf32>
    %63 = tpu.reciprocal %62 {approx = true} : vector<4x8x1xf32> -> vector<4x8x1xf32>
    %64 = vector.broadcast %63 : vector<4x8x1xf32> to vector<4x8x8xf32>
    %65 = arith.mulf %60, %64 : vector<4x8x8xf32>
    "tpu.trace_start"() <{level = 10 : i32, message = "hqk,hkd->hqd"}> : () -> ()
    %cst_25 = arith.constant dense<0.000000e+00> : vector<4x8x8xf32>
    %66 = tpu.matmul %65, %50, %cst_25 {dimension_numbers = #tpu.dot_dimension_numbers<[2], [1], [1], [2], [0, 0, 0, 1, 1, 2], [0], [0]>} : vector<4x8x8xf32>, vector<4x8x8xf32>, vector<4x8x8xf32> -> vector<4x8x8xf32>
    "tpu.trace_stop"() : () -> ()
    %67 = vector.extract_strided_slice %43 {offsets = [12, 0, 0], sizes = [4, 32, 8], strides = [1, 1, 1]} : vector<16x32x8xf32> to vector<4x32x8xf32>
    "tpu.trace_start"() <{level = 10 : i32, message = "htd,hcd->htc"}> : () -> ()
    %cst_26 = arith.constant dense<0.000000e+00> : vector<4x8x32xf32>
    %68 = tpu.matmul %66, %67, %cst_26 {dimension_numbers = #tpu.dot_dimension_numbers<[2], [2], [1], [1], [0, 0, 0, 1, 1, 1], [0], [0]>} : vector<4x8x8xf32>, vector<4x32x8xf32>, vector<4x8x32xf32> -> vector<4x8x32xf32>
    "tpu.trace_stop"() : () -> ()
    %cst_27 = arith.constant dense<0.000000e+00> : vector<8x32xf32>
    %69 = vector.multi_reduction <add>, %68, %cst_27 [0] : vector<4x8x32xf32> to vector<8x32xf32>
    %70 = arith.addf %15, %69 : vector<8x32xf32>
    %71 = vector.extract_strided_slice %0 {offsets = [4, 0], sizes = [1, 32], strides = [1, 1]} : vector<14x32xf32> to vector<1x32xf32>
    %72 = vector.broadcast %71 : vector<1x32xf32> to vector<8x32xf32>
    %73 = arith.addf %70, %72 : vector<8x32xf32>
    %74 = vector.extract_strided_slice %0 {offsets = [2, 0], sizes = [1, 32], strides = [1, 1]} : vector<14x32xf32> to vector<1x32xf32>
    %75 = vector.extract_strided_slice %0 {offsets = [3, 0], sizes = [1, 32], strides = [1, 1]} : vector<14x32xf32> to vector<1x32xf32>
    %cst_28 = arith.constant dense<0.000000e+00> : vector<8xf32>
    %76 = vector.multi_reduction <add>, %73, %cst_28 [1] : vector<8x32xf32> to vector<8xf32>
    %77 = vector.shape_cast %76 : vector<8xf32> to vector<8x1xf32>
    %cst_29 = arith.constant 3.200000e+01 : f32
    %78 = vector.broadcast %cst_29 : f32 to vector<8x1xf32>
    %79 = arith.divf %77, %78 : vector<8x1xf32>
    %80 = vector.broadcast %79 : vector<8x1xf32> to vector<8x32xf32>
    %81 = arith.subf %73, %80 : vector<8x32xf32>
    %82 = arith.mulf %81, %81 : vector<8x32xf32>
    %cst_30 = arith.constant dense<0.000000e+00> : vector<8xf32>
    %83 = vector.multi_reduction <add>, %82, %cst_30 [1] : vector<8x32xf32> to vector<8xf32>
    %84 = vector.shape_cast %83 : vector<8xf32> to vector<8x1xf32>
    %cst_31 = arith.constant 3.200000e+01 : f32
    %85 = vector.broadcast %cst_31 : f32 to vector<8x1xf32>
    %86 = arith.divf %84, %85 : vector<8x1xf32>
    %cst_32 = arith.constant 9.99999974E-6 : f32
    %87 = vector.broadcast %cst_32 : f32 to vector<8x1xf32>
    %88 = arith.addf %86, %87 : vector<8x1xf32>
    %89 = math.rsqrt %88 : vector<8x1xf32>
    %90 = vector.broadcast %89 : vector<8x1xf32> to vector<8x32xf32>
    %91 = arith.mulf %81, %90 : vector<8x32xf32>
    %92 = vector.broadcast %74 : vector<1x32xf32> to vector<8x32xf32>
    %93 = arith.mulf %91, %92 : vector<8x32xf32>
    %94 = vector.broadcast %75 : vector<1x32xf32> to vector<8x32xf32>
    %95 = arith.addf %93, %94 : vector<8x32xf32>
    %c0_33 = arith.constant 0 : index
    %c0_34 = arith.constant 0 : index
    %c0_35 = arith.constant 0 : index
    %96 = vector.load %arg4[%c0_33, %c0_34, %c0_35] : memref<2x32x128xf32, #tpu.memory_space<vmem>>, vector<1x32x128xf32>
    %97 = vector.shape_cast %96 : vector<1x32x128xf32> to vector<32x128xf32>
    %cst_36 = arith.constant dense<0.000000e+00> : vector<8x128xf32>
    %98 = tpu.matmul %95, %97, %cst_36 {dimension_numbers = #tpu.dot_dimension_numbers<[1], [0], [0], [1], [0, 0, 1, 1], [], []>} : vector<8x32xf32>, vector<32x128xf32>, vector<8x128xf32> -> vector<8x128xf32>
    %99 = vector.extract_strided_slice %1 {offsets = [0, 0], sizes = [1, 128], strides = [1, 1]} : vector<3x128xf32> to vector<1x128xf32>
    %100 = vector.broadcast %99 : vector<1x128xf32> to vector<8x128xf32>
    %101 = arith.addf %98, %100 : vector<8x128xf32>
    %cst_37 = arith.constant 0.000000e+00 : f32
    %102 = vector.broadcast %cst_37 : f32 to vector<8x128xf32>
    %103 = arith.maximumf %101, %102 : vector<8x128xf32>
    %c0_38 = arith.constant 0 : index
    %c0_39 = arith.constant 0 : index
    %c0_40 = arith.constant 0 : index
    %104 = vector.load %arg5[%c0_38, %c0_39, %c0_40] : memref<2x128x32xf32, #tpu.memory_space<vmem>>, vector<1x128x32xf32>
    %105 = vector.shape_cast %104 : vector<1x128x32xf32> to vector<128x32xf32>
    %cst_41 = arith.constant dense<0.000000e+00> : vector<8x32xf32>
    %106 = tpu.matmul %103, %105, %cst_41 {dimension_numbers = #tpu.dot_dimension_numbers<[1], [0], [0], [1], [0, 0, 1, 1], [], []>} : vector<8x128xf32>, vector<128x32xf32>, vector<8x32xf32> -> vector<8x32xf32>
    %107 = arith.addf %73, %106 : vector<8x32xf32>
    %108 = vector.extract_strided_slice %0 {offsets = [5, 0], sizes = [1, 32], strides = [1, 1]} : vector<14x32xf32> to vector<1x32xf32>
    %109 = vector.broadcast %108 : vector<1x32xf32> to vector<8x32xf32>
    %110 = arith.addf %107, %109 : vector<8x32xf32>
    %111 = vector.extract_strided_slice %0 {offsets = [6, 0], sizes = [1, 32], strides = [1, 1]} : vector<14x32xf32> to vector<1x32xf32>
    %112 = vector.extract_strided_slice %0 {offsets = [7, 0], sizes = [1, 32], strides = [1, 1]} : vector<14x32xf32> to vector<1x32xf32>
    %cst_42 = arith.constant dense<0.000000e+00> : vector<8xf32>
    %113 = vector.multi_reduction <add>, %110, %cst_42 [1] : vector<8x32xf32> to vector<8xf32>
    %114 = vector.shape_cast %113 : vector<8xf32> to vector<8x1xf32>
    %cst_43 = arith.constant 3.200000e+01 : f32
    %115 = vector.broadcast %cst_43 : f32 to vector<8x1xf32>
    %116 = arith.divf %114, %115 : vector<8x1xf32>
    %117 = vector.broadcast %116 : vector<8x1xf32> to vector<8x32xf32>
    %118 = arith.subf %110, %117 : vector<8x32xf32>
    %119 = arith.mulf %118, %118 : vector<8x32xf32>
    %cst_44 = arith.constant dense<0.000000e+00> : vector<8xf32>
    %120 = vector.multi_reduction <add>, %119, %cst_44 [1] : vector<8x32xf32> to vector<8xf32>
    %121 = vector.shape_cast %120 : vector<8xf32> to vector<8x1xf32>
    %cst_45 = arith.constant 3.200000e+01 : f32
    %122 = vector.broadcast %cst_45 : f32 to vector<8x1xf32>
    %123 = arith.divf %121, %122 : vector<8x1xf32>
    %cst_46 = arith.constant 9.99999974E-6 : f32
    %124 = vector.broadcast %cst_46 : f32 to vector<8x1xf32>
    %125 = arith.addf %123, %124 : vector<8x1xf32>
    %126 = math.rsqrt %125 : vector<8x1xf32>
    %127 = vector.broadcast %126 : vector<8x1xf32> to vector<8x32xf32>
    %128 = arith.mulf %118, %127 : vector<8x32xf32>
    %129 = vector.broadcast %111 : vector<1x32xf32> to vector<8x32xf32>
    %130 = arith.mulf %128, %129 : vector<8x32xf32>
    %131 = vector.broadcast %112 : vector<1x32xf32> to vector<8x32xf32>
    %132 = arith.addf %130, %131 : vector<8x32xf32>
    %c1 = arith.constant 1 : index
    %c0_47 = arith.constant 0 : index
    %c0_48 = arith.constant 0 : index
    %c0_49 = arith.constant 0 : index
    %133 = vector.load %arg3[%c1, %c0_47, %c0_48, %c0_49] : memref<2x16x32x8xf32, #tpu.memory_space<vmem>>, vector<1x16x32x8xf32>
    %134 = vector.shape_cast %133 : vector<1x16x32x8xf32> to vector<16x32x8xf32>
    %135 = vector.shape_cast %132 : vector<8x32xf32> to vector<1x8x32xf32>
    %136 = vector.broadcast %135 : vector<1x8x32xf32> to vector<12x8x32xf32>
    %137 = vector.extract_strided_slice %134 {offsets = [0, 0, 0], sizes = [12, 32, 8], strides = [1, 1, 1]} : vector<16x32x8xf32> to vector<12x32x8xf32>
    "tpu.trace_start"() <{level = 10 : i32, message = "htc,hcd->htd"}> : () -> ()
    %cst_50 = arith.constant dense<0.000000e+00> : vector<12x8x8xf32>
    %138 = tpu.matmul %136, %137, %cst_50 {dimension_numbers = #tpu.dot_dimension_numbers<[2], [1], [1], [2], [0, 0, 0, 1, 1, 2], [0], [0]>} : vector<12x8x32xf32>, vector<12x32x8xf32>, vector<12x8x8xf32> -> vector<12x8x8xf32>
    "tpu.trace_stop"() : () -> ()
    %139 = vector.extract_strided_slice %138 {offsets = [0, 0, 0], sizes = [4, 8, 8], strides = [1, 1, 1]} : vector<12x8x8xf32> to vector<4x8x8xf32>
    %140 = vector.extract_strided_slice %138 {offsets = [4, 0, 0], sizes = [4, 8, 8], strides = [1, 1, 1]} : vector<12x8x8xf32> to vector<4x8x8xf32>
    %141 = vector.extract_strided_slice %138 {offsets = [8, 0, 0], sizes = [4, 8, 8], strides = [1, 1, 1]} : vector<12x8x8xf32> to vector<4x8x8xf32>
    "tpu.trace_start"() <{level = 10 : i32, message = "hqd,hkd->hqk"}> : () -> ()
    %cst_51 = arith.constant dense<0.000000e+00> : vector<4x8x8xf32>
    %142 = tpu.matmul %139, %140, %cst_51 {dimension_numbers = #tpu.dot_dimension_numbers<[2], [2], [1], [1], [0, 0, 0, 1, 1, 1], [0], [0]>} : vector<4x8x8xf32>, vector<4x8x8xf32>, vector<4x8x8xf32> -> vector<4x8x8xf32>
    %cst_52 = arith.constant -1.000000e+30 : f32
    "tpu.trace_stop"() : () -> ()
    %143 = vector.shape_cast %19 : vector<1x8x8xi1> to vector<1x8x8xi1>
    %144 = vector.broadcast %143 : vector<1x8x8xi1> to vector<4x8x8xi1>
    %145 = vector.broadcast %cst_52 : f32 to vector<4x8x8xf32>
    %146 = arith.select %144, %142, %145 : vector<4x8x8xi1>, vector<4x8x8xf32>
    %cst_53 = arith.constant dense<0xFF800000> : vector<4x8xf32>
    %147 = vector.multi_reduction <maximumf>, %146, %cst_53 [2] : vector<4x8x8xf32> to vector<4x8xf32>
    %148 = vector.shape_cast %147 : vector<4x8xf32> to vector<4x8x1xf32>
    %149 = vector.broadcast %148 : vector<4x8x1xf32> to vector<4x8x8xf32>
    %150 = arith.subf %146, %149 : vector<4x8x8xf32>
    %151 = math.exp %150 : vector<4x8x8xf32>
    %cst_54 = arith.constant dense<0.000000e+00> : vector<4x8xf32>
    %152 = vector.multi_reduction <add>, %151, %cst_54 [2] : vector<4x8x8xf32> to vector<4x8xf32>
    %153 = vector.shape_cast %152 : vector<4x8xf32> to vector<4x8x1xf32>
    %154 = tpu.reciprocal %153 {approx = true} : vector<4x8x1xf32> -> vector<4x8x1xf32>
    %155 = vector.broadcast %154 : vector<4x8x1xf32> to vector<4x8x8xf32>
    %156 = arith.mulf %151, %155 : vector<4x8x8xf32>
    "tpu.trace_start"() <{level = 10 : i32, message = "hqk,hkd->hqd"}> : () -> ()
    %cst_55 = arith.constant dense<0.000000e+00> : vector<4x8x8xf32>
    %157 = tpu.matmul %156, %141, %cst_55 {dimension_numbers = #tpu.dot_dimension_numbers<[2], [1], [1], [2], [0, 0, 0, 1, 1, 2], [0], [0]>} : vector<4x8x8xf32>, vector<4x8x8xf32>, vector<4x8x8xf32> -> vector<4x8x8xf32>
    "tpu.trace_stop"() : () -> ()
    %158 = vector.extract_strided_slice %134 {offsets = [12, 0, 0], sizes = [4, 32, 8], strides = [1, 1, 1]} : vector<16x32x8xf32> to vector<4x32x8xf32>
    "tpu.trace_start"() <{level = 10 : i32, message = "htd,hcd->htc"}> : () -> ()
    %cst_56 = arith.constant dense<0.000000e+00> : vector<4x8x32xf32>
    %159 = tpu.matmul %157, %158, %cst_56 {dimension_numbers = #tpu.dot_dimension_numbers<[2], [2], [1], [1], [0, 0, 0, 1, 1, 1], [0], [0]>} : vector<4x8x8xf32>, vector<4x32x8xf32>, vector<4x8x32xf32> -> vector<4x8x32xf32>
    "tpu.trace_stop"() : () -> ()
    %cst_57 = arith.constant dense<0.000000e+00> : vector<8x32xf32>
    %160 = vector.multi_reduction <add>, %159, %cst_57 [0] : vector<4x8x32xf32> to vector<8x32xf32>
    %161 = arith.addf %110, %160 : vector<8x32xf32>
    %162 = vector.extract_strided_slice %0 {offsets = [10, 0], sizes = [1, 32], strides = [1, 1]} : vector<14x32xf32> to vector<1x32xf32>
    %163 = vector.broadcast %162 : vector<1x32xf32> to vector<8x32xf32>
    %164 = arith.addf %161, %163 : vector<8x32xf32>
    %165 = vector.extract_strided_slice %0 {offsets = [8, 0], sizes = [1, 32], strides = [1, 1]} : vector<14x32xf32> to vector<1x32xf32>
    %166 = vector.extract_strided_slice %0 {offsets = [9, 0], sizes = [1, 32], strides = [1, 1]} : vector<14x32xf32> to vector<1x32xf32>
    %cst_58 = arith.constant dense<0.000000e+00> : vector<8xf32>
    %167 = vector.multi_reduction <add>, %164, %cst_58 [1] : vector<8x32xf32> to vector<8xf32>
    %168 = vector.shape_cast %167 : vector<8xf32> to vector<8x1xf32>
    %cst_59 = arith.constant 3.200000e+01 : f32
    %169 = vector.broadcast %cst_59 : f32 to vector<8x1xf32>
    %170 = arith.divf %168, %169 : vector<8x1xf32>
    %171 = vector.broadcast %170 : vector<8x1xf32> to vector<8x32xf32>
    %172 = arith.subf %164, %171 : vector<8x32xf32>
    %173 = arith.mulf %172, %172 : vector<8x32xf32>
    %cst_60 = arith.constant dense<0.000000e+00> : vector<8xf32>
    %174 = vector.multi_reduction <add>, %173, %cst_60 [1] : vector<8x32xf32> to vector<8xf32>
    %175 = vector.shape_cast %174 : vector<8xf32> to vector<8x1xf32>
    %cst_61 = arith.constant 3.200000e+01 : f32
    %176 = vector.broadcast %cst_61 : f32 to vector<8x1xf32>
    %177 = arith.divf %175, %176 : vector<8x1xf32>
    %cst_62 = arith.constant 9.99999974E-6 : f32
    %178 = vector.broadcast %cst_62 : f32 to vector<8x1xf32>
    %179 = arith.addf %177, %178 : vector<8x1xf32>
    %180 = math.rsqrt %179 : vector<8x1xf32>
    %181 = vector.broadcast %180 : vector<8x1xf32> to vector<8x32xf32>
    %182 = arith.mulf %172, %181 : vector<8x32xf32>
    %183 = vector.broadcast %165 : vector<1x32xf32> to vector<8x32xf32>
    %184 = arith.mulf %182, %183 : vector<8x32xf32>
    %185 = vector.broadcast %166 : vector<1x32xf32> to vector<8x32xf32>
    %186 = arith.addf %184, %185 : vector<8x32xf32>
    %c1_63 = arith.constant 1 : index
    %c0_64 = arith.constant 0 : index
    %c0_65 = arith.constant 0 : index
    %187 = vector.load %arg4[%c1_63, %c0_64, %c0_65] : memref<2x32x128xf32, #tpu.memory_space<vmem>>, vector<1x32x128xf32>
    %188 = vector.shape_cast %187 : vector<1x32x128xf32> to vector<32x128xf32>
    %cst_66 = arith.constant dense<0.000000e+00> : vector<8x128xf32>
    %189 = tpu.matmul %186, %188, %cst_66 {dimension_numbers = #tpu.dot_dimension_numbers<[1], [0], [0], [1], [0, 0, 1, 1], [], []>} : vector<8x32xf32>, vector<32x128xf32>, vector<8x128xf32> -> vector<8x128xf32>
    %190 = vector.extract_strided_slice %1 {offsets = [1, 0], sizes = [1, 128], strides = [1, 1]} : vector<3x128xf32> to vector<1x128xf32>
    %191 = vector.broadcast %190 : vector<1x128xf32> to vector<8x128xf32>
    %192 = arith.addf %189, %191 : vector<8x128xf32>
    %cst_67 = arith.constant 0.000000e+00 : f32
    %193 = vector.broadcast %cst_67 : f32 to vector<8x128xf32>
    %194 = arith.maximumf %192, %193 : vector<8x128xf32>
    %c1_68 = arith.constant 1 : index
    %c0_69 = arith.constant 0 : index
    %c0_70 = arith.constant 0 : index
    %195 = vector.load %arg5[%c1_68, %c0_69, %c0_70] : memref<2x128x32xf32, #tpu.memory_space<vmem>>, vector<1x128x32xf32>
    %196 = vector.shape_cast %195 : vector<1x128x32xf32> to vector<128x32xf32>
    %cst_71 = arith.constant dense<0.000000e+00> : vector<8x32xf32>
    %197 = tpu.matmul %194, %196, %cst_71 {dimension_numbers = #tpu.dot_dimension_numbers<[1], [0], [0], [1], [0, 0, 1, 1], [], []>} : vector<8x128xf32>, vector<128x32xf32>, vector<8x32xf32> -> vector<8x32xf32>
    %198 = arith.addf %164, %197 : vector<8x32xf32>
    %199 = vector.extract_strided_slice %0 {offsets = [11, 0], sizes = [1, 32], strides = [1, 1]} : vector<14x32xf32> to vector<1x32xf32>
    %200 = vector.broadcast %199 : vector<1x32xf32> to vector<8x32xf32>
    %201 = arith.addf %198, %200 : vector<8x32xf32>
    %202 = vector.extract_strided_slice %0 {offsets = [12, 0], sizes = [1, 32], strides = [1, 1]} : vector<14x32xf32> to vector<1x32xf32>
    %203 = vector.extract_strided_slice %0 {offsets = [13, 0], sizes = [1, 32], strides = [1, 1]} : vector<14x32xf32> to vector<1x32xf32>
    %cst_72 = arith.constant dense<0.000000e+00> : vector<8xf32>
    %204 = vector.multi_reduction <add>, %201, %cst_72 [1] : vector<8x32xf32> to vector<8xf32>
    %205 = vector.shape_cast %204 : vector<8xf32> to vector<8x1xf32>
    %cst_73 = arith.constant 3.200000e+01 : f32
    %206 = vector.broadcast %cst_73 : f32 to vector<8x1xf32>
    %207 = arith.divf %205, %206 : vector<8x1xf32>
    %208 = vector.broadcast %207 : vector<8x1xf32> to vector<8x32xf32>
    %209 = arith.subf %201, %208 : vector<8x32xf32>
    %210 = arith.mulf %209, %209 : vector<8x32xf32>
    %cst_74 = arith.constant dense<0.000000e+00> : vector<8xf32>
    %211 = vector.multi_reduction <add>, %210, %cst_74 [1] : vector<8x32xf32> to vector<8xf32>
    %212 = vector.shape_cast %211 : vector<8xf32> to vector<8x1xf32>
    %cst_75 = arith.constant 3.200000e+01 : f32
    %213 = vector.broadcast %cst_75 : f32 to vector<8x1xf32>
    %214 = arith.divf %212, %213 : vector<8x1xf32>
    %cst_76 = arith.constant 9.99999974E-6 : f32
    %215 = vector.broadcast %cst_76 : f32 to vector<8x1xf32>
    %216 = arith.addf %214, %215 : vector<8x1xf32>
    %217 = math.rsqrt %216 : vector<8x1xf32>
    %218 = vector.broadcast %217 : vector<8x1xf32> to vector<8x32xf32>
    %219 = arith.mulf %209, %218 : vector<8x32xf32>
    %220 = vector.broadcast %202 : vector<1x32xf32> to vector<8x32xf32>
    %221 = arith.mulf %219, %220 : vector<8x32xf32>
    %222 = vector.broadcast %203 : vector<1x32xf32> to vector<8x32xf32>
    %223 = arith.addf %221, %222 : vector<8x32xf32>
    %c0_77 = arith.constant 0 : index
    %c0_78 = arith.constant 0 : index
    %224 = vector.load %arg6[%c0_77, %c0_78] : memref<32x128xf32, #tpu.memory_space<vmem>>, vector<32x128xf32>
    %cst_79 = arith.constant dense<0.000000e+00> : vector<8x128xf32>
    %225 = tpu.matmul %223, %224, %cst_79 {dimension_numbers = #tpu.dot_dimension_numbers<[1], [0], [0], [1], [0, 0, 1, 1], [], []>} : vector<8x32xf32>, vector<32x128xf32>, vector<8x128xf32> -> vector<8x128xf32>
    %226 = vector.extract_strided_slice %1 {offsets = [2, 0], sizes = [1, 128], strides = [1, 1]} : vector<3x128xf32> to vector<1x128xf32>
    %227 = vector.broadcast %226 : vector<1x128xf32> to vector<8x128xf32>
    %228 = arith.addf %225, %227 : vector<8x128xf32>
    %229 = vector.shape_cast %228 : vector<8x128xf32> to vector<1x8x128xf32>
    %c0_80 = arith.constant 0 : index
    %c0_81 = arith.constant 0 : index
    %c0_82 = arith.constant 0 : index
    %230 = vector.load %arg9[%c0_80, %c0_81, %c0_82] : memref<1x8x128xf32, #tpu.memory_space<vmem>>, vector<1x8x128xf32>
    tpu.vector_store %arg9[%c0_80, %c0_81, %c0_82], %229 {strides = array<i32>} : memref<1x8x128xf32, #tpu.memory_space<vmem>>, vector<1x8x128xf32>,
    return
  }
  func.func @transform_0(%arg0: i32) -> (i32, i32, i32) {
    %c0_i32 = arith.constant 0 : i32
    %c0_i32_0 = arith.constant 0 : i32
    %c0_i32_1 = arith.constant 0 : i32
    return %arg0, %c0_i32, %c0_i32_0 : i32, i32, i32
  }
  func.func @transform_1(%arg0: i32) -> (i32, i32) {
    %c0_i32 = arith.constant 0 : i32
    %c0_i32_0 = arith.constant 0 : i32
    %c0_i32_1 = arith.constant 0 : i32
    return %c0_i32, %c0_i32_0 : i32, i32
  }
  func.func @transform_2(%arg0: i32) -> (i32, i32, i32, i32) {
    %c0_i32 = arith.constant 0 : i32
    %c0_i32_0 = arith.constant 0 : i32
    %c0_i32_1 = arith.constant 0 : i32
    %c0_i32_2 = arith.constant 0 : i32
    %c0_i32_3 = arith.constant 0 : i32
    return %c0_i32, %c0_i32_0, %c0_i32_1, %c0_i32_2 : i32, i32, i32, i32
  }
  func.func @transform_3(%arg0: i32) -> (i32, i32, i32) {
    %c0_i32 = arith.constant 0 : i32
    %c0_i32_0 = arith.constant 0 : i32
    %c0_i32_1 = arith.constant 0 : i32
    %c0_i32_2 = arith.constant 0 : i32
    return %c0_i32, %c0_i32_0, %c0_i32_1 : i32, i32, i32
  }
  func.func @transform_4(%arg0: i32) -> (i32, i32, i32) {
    %c0_i32 = arith.constant 0 : i32
    %c0_i32_0 = arith.constant 0 : i32
    %c0_i32_1 = arith.constant 0 : i32
    %c0_i32_2 = arith.constant 0 : i32
    return %c0_i32, %c0_i32_0, %c0_i32_1 : i32, i32, i32
  }
  func.func @transform_5(%arg0: i32) -> (i32, i32) {
    %c0_i32 = arith.constant 0 : i32
    %c0_i32_0 = arith.constant 0 : i32
    %c0_i32_1 = arith.constant 0 : i32
    return %c0_i32, %c0_i32_0 : i32, i32
  }
  func.func @transform_6(%arg0: i32) -> (i32, i32) {
    %c0_i32 = arith.constant 0 : i32
    %c0_i32_0 = arith.constant 0 : i32
    %c0_i32_1 = arith.constant 0 : i32
    return %c0_i32, %c0_i32_0 : i32, i32
  }
  func.func @transform_7(%arg0: i32) -> (i32, i32) {
    %c0_i32 = arith.constant 0 : i32
    %c0_i32_0 = arith.constant 0 : i32
    %c0_i32_1 = arith.constant 0 : i32
    return %c0_i32, %c0_i32_0 : i32, i32
  }
  func.func @transform_8(%arg0: i32) -> (i32, i32, i32) {
    %c0_i32 = arith.constant 0 : i32
    %c0_i32_0 = arith.constant 0 : i32
    %c0_i32_1 = arith.constant 0 : i32
    return %arg0, %c0_i32, %c0_i32_0 : i32, i32, i32
  }
}

</mosaic_0001>

<llo_original>
// kernel: gpt_forward.1
$region0: #{gpt_forward.1}
  #allocation0 [shape = 'u32[]', space=smem, size = 0x4, offset = 0x4, fixed_abs, tag = 'smem constant byte address 0x4 - core index']
  #allocation1 [shape = 'u32[144,128]{1,0:T(1,128)}', space=vmem, size = 0x12000, scoped, tag = 'internal scratch']
  %s0 = inlined_call_operand.vmem [shape: s32[2,1,8], index: 0, kind: input, shape index: {}]
  %s1 = inlined_call_operand.vmem [shape: f32[192,32], index: 1, kind: input, shape index: {}]
  %s2 = inlined_call_operand.vmem [shape: f32[2,16,32,8], index: 2, kind: input, shape index: {}]
  %s3 = inlined_call_operand.vmem [shape: f32[2,32,128], index: 3, kind: input, shape index: {}]
  %s4 = inlined_call_operand.vmem [shape: f32[2,128,32], index: 4, kind: input, shape index: {}]
  %s5 = inlined_call_operand.vmem [shape: f32[32,128], index: 5, kind: input, shape index: {}]
  %s6 = inlined_call_operand.vmem [shape: f32[14,32], index: 6, kind: input, shape index: {}]
  %s7 = inlined_call_operand.vmem [shape: f32[3,128], index: 7, kind: input, shape index: {}]
  %s8 = inlined_call_operand.hbm [shape: f32[2,8,128], index: 8, kind: output, shape index: {}]
  %s9 = sld [smem:[#allocation0]]
  $region65: #{gpt_forward.1} parent=0
    _
  %s11 = ssub.s32 1, %s9
  %s12 = scalar_select 0, %s11, %s9
  $region1: #{gpt_forward.1} parent=0
    #allocation2 [shape = 'u8[8192]{0}', space=vmem, size = 0x2000, scoped, tag = 'output window, operand 0']
    #allocation3 [shape = 's32[2]{0}', space=sflag, size = 0x8, scoped, tag = 'scoped memory for gpt_forward.1']
    %13 = vsyncpa [#allocation3], 0
    %s14 = scalar_lea.sflag [#allocation3], 1
    %15 = vsyncpa %s14, 0
    loop: start=0, step=1, limit=4
    $region2: #{gpt_forward.1} parent=1 // loop_pre_header
      _
    $region3: #{gpt_forward.1} parent=1 // loop_header
      %s17 = sphi 0, %s21
      %p18 = scmp.ge.s32.totalorder %s17, 4
      %s27 = sphi 0, %s29
      %s30 = sphi 0, %s27
      %s31 = sphi 0, %s30
      %s47 = sphi 0, %s31
      %s51 = sphi 0, %s51
      %s53 = sphi 0, %s51
      %s54 = sphi 0, %s53
      %s68 = sphi 0, %s54
      %s72 = sphi 0, %s72
      %s74 = sphi 0, %s72
      %s75 = sphi 0, %s74
      %s89 = sphi 0, %s75
      %s93 = sphi 0, %s93
      %s95 = sphi 0, %s93
      %s96 = sphi 0, %s95
      %s110 = sphi 0, %s96
      %s114 = sphi 0, %s114
      %s116 = sphi 0, %s114
      %s117 = sphi 0, %s116
      %s131 = sphi 0, %s117
      %s135 = sphi 0, %s135
      %s137 = sphi 0, %s135
      %s138 = sphi 0, %s137
      %s152 = sphi 0, %s138
      %s156 = sphi 0, %s156
      %s158 = sphi 0, %s156
      %s159 = sphi 0, %s158
      %s173 = sphi 0, %s159
      %s177 = sphi 0, %s177
      %s179 = sphi 0, %s177
      %s180 = sphi 0, %s179
      %s194 = sphi 0, %s180
      %s200 = sphi 0, %s202
      %s203 = sphi 0, %s200
      %s204 = sphi 0, %s203
      %s220 = sphi 0, %s204
    $region4: #{gpt_forward.1} parent=1 // loop_header_branch
      %20 = sbr.rel (%p18) target = $region8
    $region5: #{gpt_forward.1} parent=1 // loop_body
      %s22 = ssub.s32 %s17, 1
      %s23 = ssub.s32 %s17, 2
      %s24 = sadd.s32 %s17, 1
      %s25 = ssub.s32 %s17, %s24
      %p26 = scmp.eq.s32.totalorder %s25, 0
      %s28 = sadd.s32 %s27, 1
      %s29 = scalar_select %p26, %s27, %s28
      %p32 = pneg %p26
      %p33 = scmp.eq.s32.totalorder %s17, 1
      %p34 = por %p32, %p33
      %p35 = scmp.ne.s32.totalorder %s27, %s30
      %p36 = scmp.eq.s32.totalorder %s17, 0
      %p37 = por %p35, %p36
      %p38 = scmp.ne.s32.totalorder %s27, %s30
      %p39 = scmp.eq.s32.totalorder %s22, 1
      %p40 = por %p38, %p39
      %p41 = scmp.ne.s32.totalorder %s30, %s31
      %p42 = scmp.eq.s32.totalorder %s22, 0
      %p43 = por %p41, %p42
      %p44 = scmp.ne.s32.totalorder %s30, %s31
      %p45 = scmp.eq.s32.totalorder %s23, 1
      %p46 = por %p44, %p45
      %p48 = scmp.ne.s32.totalorder %s31, %s47
      %p49 = scmp.eq.s32.totalorder %s23, 0
      %p50 = por %p48, %p49
      %s52 = sadd.s32 %s51, 1
      %p55 = scmp.eq.s32.totalorder %s17, 1
      %p56 = scmp.ne.s32.totalorder %s51, %s53
      %p57 = scmp.eq.s32.totalorder %s17, 0
      %p58 = por %p56, %p57
      %p59 = scmp.ne.s32.totalorder %s51, %s53
      %p60 = scmp.eq.s32.totalorder %s22, 1
      %p61 = por %p59, %p60
      %p62 = scmp.ne.s32.totalorder %s53, %s54
      %p63 = scmp.eq.s32.totalorder %s22, 0
      %p64 = por %p62, %p63
      %p65 = scmp.ne.s32.totalorder %s53, %s54
      %p66 = scmp.eq.s32.totalorder %s23, 1
      %p67 = por %p65, %p66
      %p69 = scmp.ne.s32.totalorder %s54, %s68
      %p70 = scmp.eq.s32.totalorder %s23, 0
      %p71 = por %p69, %p70
      %s73 = sadd.s32 %s72, 1
      %p76 = scmp.eq.s32.totalorder %s17, 1
      %p77 = scmp.ne.s32.totalorder %s72, %s74
      %p78 = scmp.eq.s32.totalorder %s17, 0
      %p79 = por %p77, %p78
      %p80 = scmp.ne.s32.totalorder %s72, %s74
      %p81 = scmp.eq.s32.totalorder %s22, 1
      %p82 = por %p80, %p81
      %p83 = scmp.ne.s32.totalorder %s74, %s75
      %p84 = scmp.eq.s32.totalorder %s22, 0
      %p85 = por %p83, %p84
      %p86 = scmp.ne.s32.totalorder %s74, %s75
      %p87 = scmp.eq.s32.totalorder %s23, 1
      %p88 = por %p86, %p87
      %p90 = scmp.ne.s32.totalorder %s75, %s89
      %p91 = scmp.eq.s32.totalorder %s23, 0
      %p92 = por %p90, %p91
      %s94 = sadd.s32 %s93, 1
      %p97 = scmp.eq.s32.totalorder %s17, 1
      %p98 = scmp.ne.s32.totalorder %s93, %s95
      %p99 = scmp.eq.s32.totalorder %s17, 0
      %p100 = por %p98, %p99
      %p101 = scmp.ne.s32.totalorder %s93, %s95
      %p102 = scmp.eq.s32.totalorder %s22, 1
      %p103 = por %p101, %p102
      %p104 = scmp.ne.s32.totalorder %s95, %s96
      %p105 = scmp.eq.s32.totalorder %s22, 0
      %p106 = por %p104, %p105
      %p107 = scmp.ne.s32.totalorder %s95, %s96
      %p108 = scmp.eq.s32.totalorder %s23, 1
      %p109 = por %p107, %p108
      %p111 = scmp.ne.s32.totalorder %s96, %s110
      %p112 = scmp.eq.s32.totalorder %s23, 0
      %p113 = por %p111, %p112
      %s115 = sadd.s32 %s114, 1
      %p118 = scmp.eq.s32.totalorder %s17, 1
      %p119 = scmp.ne.s32.totalorder %s114, %s116
      %p120 = scmp.eq.s32.totalorder %s17, 0
      %p121 = por %p119, %p120
      %p122 = scmp.ne.s32.totalorder %s114, %s116
      %p123 = scmp.eq.s32.totalorder %s22, 1
      %p124 = por %p122, %p123
      %p125 = scmp.ne.s32.totalorder %s116, %s117
      %p126 = scmp.eq.s32.totalorder %s22, 0
      %p127 = por %p125, %p126
      %p128 = scmp.ne.s32.totalorder %s116, %s117
      %p129 = scmp.eq.s32.totalorder %s23, 1
      %p130 = por %p128, %p129
      %p132 = scmp.ne.s32.totalorder %s117, %s131
      %p133 = scmp.eq.s32.totalorder %s23, 0
      %p134 = por %p132, %p133
      %s136 = sadd.s32 %s135, 1
      %p139 = scmp.eq.s32.totalorder %s17, 1
      %p140 = scmp.ne.s32.totalorder %s135, %s137
      %p141 = scmp.eq.s32.totalorder %s17, 0
      %p142 = por %p140, %p141
      %p143 = scmp.ne.s32.totalorder %s135, %s137
      %p144 = scmp.eq.s32.totalorder %s22, 1
      %p145 = por %p143, %p144
      %p146 = scmp.ne.s32.totalorder %s137, %s138
      %p147 = scmp.eq.s32.totalorder %s22, 0
      %p148 = por %p146, %p147
      %p149 = scmp.ne.s32.totalorder %s137, %s138
      %p150 = scmp.eq.s32.totalorder %s23, 1
      %p151 = por %p149, %p150
      %p153 = scmp.ne.s32.totalorder %s138, %s152
      %p154 = scmp.eq.s32.totalorder %s23, 0
      %p155 = por %p153, %p154
      %s157 = sadd.s32 %s156, 1
      %p160 = scmp.eq.s32.totalorder %s17, 1
      %p161 = scmp.ne.s32.totalorder %s156, %s158
      %p162 = scmp.eq.s32.totalorder %s17, 0
      %p163 = por %p161, %p162
      %p164 = scmp.ne.s32.totalorder %s156, %s158
      %p165 = scmp.eq.s32.totalorder %s22, 1
      %p166 = por %p164, %p165
      %p167 = scmp.ne.s32.totalorder %s158, %s159
      %p168 = scmp.eq.s32.totalorder %s22, 0
      %p169 = por %p167, %p168
      %p170 = scmp.ne.s32.totalorder %s158, %s159
      %p171 = scmp.eq.s32.totalorder %s23, 1
      %p172 = por %p170, %p171
      %p174 = scmp.ne.s32.totalorder %s159, %s173
      %p175 = scmp.eq.s32.totalorder %s23, 0
      %p176 = por %p174, %p175
      %s178 = sadd.s32 %s177, 1
      %p181 = scmp.eq.s32.totalorder %s17, 1
      %p182 = scmp.ne.s32.totalorder %s177, %s179
      %p183 = scmp.eq.s32.totalorder %s17, 0
      %p184 = por %p182, %p183
      %p185 = scmp.ne.s32.totalorder %s177, %s179
      %p186 = scmp.eq.s32.totalorder %s22, 1
      %p187 = por %p185, %p186
      %p188 = scmp.ne.s32.totalorder %s179, %s180
      %p189 = scmp.eq.s32.totalorder %s22, 0
      %p190 = por %p188, %p189
      %p191 = scmp.ne.s32.totalorder %s179, %s180
      %p192 = scmp.eq.s32.totalorder %s23, 1
      %p193 = por %p191, %p192
      %p195 = scmp.ne.s32.totalorder %s180, %s194
      %p196 = scmp.eq.s32.totalorder %s23, 0
      %p197 = por %p195, %p196
      %s198 = ssub.s32 %s17, %s24
      %p199 = scmp.eq.s32.totalorder %s198, 0
      %s201 = sadd.s32 %s200, 1
      %s202 = scalar_select %p199, %s200, %s201
      %p205 = pneg %p199
      %p206 = scmp.eq.s32.totalorder %s17, 1
      %p207 = por %p205, %p206
      %p208 = scmp.ne.s32.totalorder %s200, %s203
      %p209 = scmp.eq.s32.totalorder %s17, 0
      %p210 = por %p208, %p209
      %p211 = scmp.ne.s32.totalorder %s200, %s203
      %p212 = scmp.eq.s32.totalorder %s22, 1
      %p213 = por %p211, %p212
      %p214 = scmp.ne.s32.totalorder %s203, %s204
      %p215 = scmp.eq.s32.totalorder %s22, 0
      %p216 = por %p214, %p215
      %p217 = scmp.ne.s32.totalorder %s203, %s204
      %p218 = scmp.eq.s32.totalorder %s23, 1
      %p219 = por %p217, %p218
      %p221 = scmp.ne.s32.totalorder %s204, %s220
      %p222 = scmp.eq.s32.totalorder %s23, 0
      %p223 = por %p221, %p222
      %p224 = scmp.le.s32.totalorder 1, %s17
      %p225 = scmp.lt.s32.totalorder %s17, 3
      %p226 = pnand %p224, %p225
      %p227 = pneg %p226
      // Predicated region
      $region9: #{gpt_forward.1} parent=5 // pred_check
        _
      $region10: #{gpt_forward.1} parent=5 // pred_check_branch
        %229 = sbr.rel (%p226) target = $region12
      $region11: #{gpt_forward.1} parent=5 // pred_region
        %s230 = ssub.s32 %s17, 1
        // Predicated region
        $region13: #{gpt_forward.1} parent=11 // pred_check
          %p231 = pneg %p64
        $region14: #{gpt_forward.1} parent=11 // pred_check_branch
          %233 = sbr.rel (%p231) target = $region16
        $region15: #{gpt_forward.1} parent=11 // pred_region
          _
        $region16: #{gpt_forward.1} parent=11 // pred_fallthru
          _
        // Predicated region
        $region17: #{gpt_forward.1} parent=11 // pred_check
          %p234 = pneg %p85
        $region18: #{gpt_forward.1} parent=11 // pred_check_branch
          %236 = sbr.rel (%p234) target = $region20
        $region19: #{gpt_forward.1} parent=11 // pred_region
          _
        $region20: #{gpt_forward.1} parent=11 // pred_fallthru
          _
        // Predicated region
        $region21: #{gpt_forward.1} parent=11 // pred_check
          %p237 = pneg %p106
        $region22: #{gpt_forward.1} parent=11 // pred_check_branch
          %239 = sbr.rel (%p237) target = $region24
        $region23: #{gpt_forward.1} parent=11 // pred_region
          _
        $region24: #{gpt_forward.1} parent=11 // pred_fallthru
          _
        // Predicated region
        $region25: #{gpt_forward.1} parent=11 // pred_check
          %p240 = pneg %p127
        $region26: #{gpt_forward.1} parent=11 // pred_check_branch
          %242 = sbr.rel (%p240) target = $region28
        $region27: #{gpt_forward.1} parent=11 // pred_region
          _
        $region28: #{gpt_forward.1} parent=11 // pred_fallthru
          _
        // Predicated region
        $region29: #{gpt_forward.1} parent=11 // pred_check
          %p243 = pneg %p148
        $region30: #{gpt_forward.1} parent=11 // pred_check_branch
          %245 = sbr.rel (%p243) target = $region32
        $region31: #{gpt_forward.1} parent=11 // pred_region
          _
        $region32: #{gpt_forward.1} parent=11 // pred_fallthru
          _
        // Predicated region
        $region33: #{gpt_forward.1} parent=11 // pred_check
          %p246 = pneg %p169
        $region34: #{gpt_forward.1} parent=11 // pred_check_branch
          %248 = sbr.rel (%p246) target = $region36
        $region35: #{gpt_forward.1} parent=11 // pred_region
          _
        $region36: #{gpt_forward.1} parent=11 // pred_fallthru
          _
        // Predicated region
        $region37: #{gpt_forward.1} parent=11 // pred_check
          %p249 = pneg %p190
        $region38: #{gpt_forward.1} parent=11 // pred_check_branch
          %251 = sbr.rel (%p249) target = $region40
        $region39: #{gpt_forward.1} parent=11 // pred_region
          _
        $region40: #{gpt_forward.1} parent=11 // pred_fallthru
          _
      $region12: #{gpt_forward.1} parent=5 // pred_fallthru
        _
      %p252 = scmp.lt.s32.totalorder %s17, 2
      // Predicated region
      $region41: #{gpt_forward.1} parent=5 // pred_check
        %p253 = pneg %p252
      $region42: #{gpt_forward.1} parent=5 // pred_check_branch
        %255 = sbr.rel (%p253) target = $region44
      $region43: #{gpt_forward.1} parent=5 // pred_region
        // Predicated region
        $region45: #{gpt_forward.1} parent=43 // pred_check
          %p256 = pneg %p37
        $region46: #{gpt_forward.1} parent=43 // pred_check_branch
          %258 = sbr.rel (%p256) target = $region48
        $region47: #{gpt_forward.1} parent=43 // pred_region
          %p259 = scmp.lt.s32.totalorder %s17, 1
          %s260 = scalar_select %p259, %s17, 1
          %s261 = scalar_lea.vmem %s0, %s260
        $region48: #{gpt_forward.1} parent=43 // pred_fallthru
          _
      $region44: #{gpt_forward.1} parent=5 // pred_fallthru
        _
      %p262 = scmp.le.s32.totalorder 1, %s17
      %p263 = scmp.lt.s32.totalorder %s17, 3
      %p264 = pnand %p262, %p263
      %p265 = pneg %p264
      // Predicated region
      $region49: #{gpt_forward.1} parent=5 // pred_check
        _
      $region50: #{gpt_forward.1} parent=5 // pred_check_branch
        %267 = sbr.rel (%p264) target = $region52
      $region51: #{gpt_forward.1} parent=5 // pred_region
        %s268 = ssub.s32 %s17, 1
        %p269 = scmp.lt.s32.totalorder %s22, 1
        %s270 = scalar_select %p269, %s22, 1
        %s271 = scalar_lea.vmem %s0, %s270
        %p272 = pneg %p43
        %p273 = pneg %p40
        %p274 = pneg %p64
        %p275 = pneg %p61
        %p276 = pneg %p85
        %p277 = pneg %p82
        %p278 = pneg %p106
        %p279 = pneg %p103
        %p280 = pneg %p127
        %p281 = pneg %p124
        %p282 = pneg %p148
        %p283 = pneg %p145
        %p284 = pneg %p169
        %p285 = pneg %p166
        %p286 = pneg %p190
        %p287 = pneg %p187
        %p288 = pneg %p216
        %p289 = pneg %p213
        %s290 = sand.u32 %s203, 1
        %s291 = scalar_lea.sflag [#allocation3], %s290
        %s292 = sand.u32 %s203, 1
        %s293 = smul.addr %s292, 8
        %s294 = scalar_lea.vmem [#allocation2], %s293
        %p295 = scmp.lt.s32.totalorder %s22, 1
        %s296 = scalar_select %p295, %s22, 1
        %s297 = scalar_lea.vmem %s0, %s296
        %v298 = vld [vmem:[%s6] sm:$0xff]
        %v299 = vld [vmem:[%s6 + $0x8] sm:$0x3f]
        %v300 = vld [vmem:[%s7] sm:$0x7]
        %v301 = vld [vmem:[%s297] sm:$0x1]
        %v302 = vlaneseq
        %v303 = vand.u32 %v302, 127
        %v304 = vlaneseq
        %v305 = vshrl.u32 %v304, 7
        %v306 = vsub.s32 0, %v305
        %v307 = vrot.slane %v301, %v306
        %309 = vbcast.lane.b32.xlu0 %v307, 256
        %v310 = vpop.permute.xlu0 %309
        %vm311 = vcmp.eq.s32.totalorder %v303, %v310
        %v312 = vsel %vm311, 1.0, 0.0
        %v313 = vld [vmem:[%s1] sm:$0xff]
        %v314 = vld [vmem:[%s1 + $0x8] sm:$0xff]
        %v315 = vld [vmem:[%s1 + $0x10] sm:$0xff]
        %v316 = vld [vmem:[%s1 + $0x18] sm:$0xff]
        %v317 = vld [vmem:[%s1 + $0x20] sm:$0xff]
        %v318 = vld [vmem:[%s1 + $0x28] sm:$0xff]
        %v319 = vld [vmem:[%s1 + $0x30] sm:$0xff]
        %v320 = vld [vmem:[%s1 + $0x38] sm:$0xff]
        %v321 = vld [vmem:[%s1 + $0x40] sm:$0xff]
        %v322 = vld [vmem:[%s1 + $0x48] sm:$0xff]
        %v323 = vld [vmem:[%s1 + $0x50] sm:$0xff]
        %v324 = vld [vmem:[%s1 + $0x58] sm:$0xff]
        %v325 = vld [vmem:[%s1 + $0x60] sm:$0xff]
        %v326 = vld [vmem:[%s1 + $0x68] sm:$0xff]
        %v327 = vld [vmem:[%s1 + $0x70] sm:$0xff]
        %v328 = vld [vmem:[%s1 + $0x78] sm:$0xff]
        %v329 = vld [vmem:[%s1 + $0x80] sm:$0xff]
        %330 = vmatprep.subr.mxu0 0.0
        %331 = vmatpush1.msra.mxu0 %v313
        %332 = vmatprep.subr.mxu0 0.0
        %333 = vmatpush1.msra.mxu0 %v314
        %334 = vmatprep.subr.mxu0 0.0
        %335 = vmatpush1.msra.mxu0 %v315
        %336 = vmatprep.subr.mxu0 0.0
        %337 = vmatpush1.msra.mxu0 %v316
        %338 = vmatprep.subr.mxu0 0.0
        %339 = vmatpush1.msra.mxu0 %v317
        %340 = vmatprep.subr.mxu0 0.0
        %341 = vmatpush1.msra.mxu0 %v318
        %342 = vmatprep.subr.mxu0 0.0
        %343 = vmatpush1.msra.mxu0 %v319
        %344 = vmatprep.subr.mxu0 0.0
        %345 = vmatpush1.msra.mxu0 %v320
        %346 = vmatprep.subr.mxu0 0.0
        %347 = vmatpush1.msra.mxu0 %v321
        %348 = vmatprep.subr.mxu0 0.0
        %349 = vmatpush1.msra.mxu0 %v322
        %350 = vmatprep.subr.mxu0 0.0
        %351 = vmatpush1.msra.mxu0 %v323
        %352 = vmatprep.subr.mxu0 0.0
        %353 = vmatpush1.msra.mxu0 %v324
        %354 = vmatprep.subr.mxu0 0.0
        %355 = vmatpush1.msra.mxu0 %v325
        %356 = vmatprep.subr.mxu0 0.0
        %357 = vmatpush1.msra.mxu0 %v326
        %358 = vmatprep.subr.mxu0 0.0
        %359 = vmatpush1.msra.mxu0 %v327
        %360 = vmatprep.subr.mxu0 0.0
        %361 = vmatpush1.msra.mxu0 %v328
        %362 = vmatprep.subr.mxu0 0.0
        %363 = vmatpush1.msra.mxu0 0.0
        %364 = vmatprep.subr.mxu0 0.0
        %365 = vmatpush1.msra.mxu0 0.0
        %366 = vmatprep.subr.mxu0 0.0
        %367 = vmatpush1.msra.mxu0 0.0
        %368 = vmatprep.subr.mxu0 0.0
        %369 = vmatpush1.msra.mxu0 0.0
        %370 = vmatprep.subr.mxu0 0.0
        %371 = vmatpush1.msra.mxu0 0.0
        %372 = vmatprep.subr.mxu0 0.0
        %373 = vmatpush1.msra.mxu0 0.0
        %374 = vmatprep.subr.mxu0 0.0
        %375 = vmatpush1.msra.mxu0 0.0
        %376 = vmatprep.subr.mxu0 0.0
        %377 = vmatpush1.msra.mxu0 0.0
        %378 = vmatprep.subr.mxu0 0.0
        %379 = vmatpush1.msra.mxu0 0.0
        %380 = vmatprep.subr.mxu0 0.0
        %381 = vmatpush1.msra.mxu0 0.0
        %382 = vmatprep.subr.mxu0 0.0
        %383 = vmatpush1.msra.mxu0 0.0
        %384 = vmatprep.subr.mxu0 0.0
        %385 = vmatpush1.msra.mxu0 0.0
        %386 = vmatprep.subr.mxu0 0.0
        %387 = vmatpush1.msra.mxu0 0.0
        %388 = vmatprep.subr.mxu0 0.0
        %389 = vmatpush1.msra.mxu0 0.0
        %390 = vmatprep.subr.mxu0 0.0
        %391 = vmatpush1.msra.mxu0 0.0
        %392 = vmatprep.subr.mxu0 0.0
        %393 = vmatpush1.msra.mxu0 0.0
        %394 = vmatprep.mubr.f32.mxu0 0.0
        %395 = vmatmul.mubr.f32.gmra.mrb[0].mxu0 %v312
        %v396 = vpop.f32.mrb[0].mxu0
        %v397 = vadd.f32 %v329, %v396
        %v398 = vpop.f32.mrb[0].mxu0
        %399 = vdwg.mxu0
        %v400 = vlaneseq
        %v401 = vshrl.u32 %v400, 7
        %vm402 = vcmp.ge.s32.totalorder %v401, %v303
        %vm403 = vcmask 261120
        %v404 = vsel %vm403, %v397, 0.0
        %405 = vadd.xlane.f32.xlu0 %v404
        %v406 = vpop.xlane.xlu0 %405
        %v407 = vrcp.pop 32.0
        %v408 = vmul.f32 %v406, %v407
        %v409 = vsub.f32 %v397, %v408
        %v410 = vmul.f32 %v409, %v409
        %v411 = vsel %vm403, %v410, 0.0
        %412 = vadd.xlane.f32.xlu0 %v411
        %v413 = vpop.xlane.xlu0 %412
        %v414 = vmul.f32 %v413, %v407
        %v415 = vadd.f32 %v414, 1e-05
        %v416 = vrsqrt.pop %v415
        %v417 = vmul.f32 %v409, %v416
        %v418 = vlaneseq
        %v419 = vshrl.u32 %v418, 7
        %v420 = vsub.s32 0, %v419
        %v421 = vrot.slane %v298, %v420
        %v422 = vmul.f32 %v417, %v421
        %v423 = vlaneseq
        %v424 = vshrl.u32 %v423, 7
        %v425 = vsub.s32 1, %v424
        %v426 = vrot.slane %v298, %v425
        %v427 = vadd.f32 %v422, %v426
        %v428 = vld [vmem:[%s2] sm:$0xff]
        %v429 = vld [vmem:[%s2 + $0x8] sm:$0xff]
        %v430 = vld [vmem:[%s2 + $0x10] sm:$0xff]
        %v431 = vld [vmem:[%s2 + $0x18] sm:$0xff]
        %v432 = vld [vmem:[%s2 + $0x20] sm:$0xff]
        %v433 = vld [vmem:[%s2 + $0x28] sm:$0xff]
        %v434 = vld [vmem:[%s2 + $0x30] sm:$0xff]
        %v435 = vld [vmem:[%s2 + $0x38] sm:$0xff]
        %v436 = vld [vmem:[%s2 + $0x40] sm:$0xff]
        %v437 = vld [vmem:[%s2 + $0x48] sm:$0xff]
        %v438 = vld [vmem:[%s2 + $0x50] sm:$0xff]
        %v439 = vld [vmem:[%s2 + $0x58] sm:$0xff]
        %v440 = vld [vmem:[%s2 + $0x60] sm:$0xff]
        %v441 = vld [vmem:[%s2 + $0x68] sm:$0xff]
        %v442 = vld [vmem:[%s2 + $0x70] sm:$0xff]
        %v443 = vld [vmem:[%s2 + $0x78] sm:$0xff]
        %v444 = vld [vmem:[%s2 + $0x80] sm:$0xff]
        %v445 = vld [vmem:[%s2 + $0x88] sm:$0xff]
        %v446 = vld [vmem:[%s2 + $0x90] sm:$0xff]
        %v447 = vld [vmem:[%s2 + $0x98] sm:$0xff]
        %v448 = vld [vmem:[%s2 + $0xa0] sm:$0xff]
        %v449 = vld [vmem:[%s2 + $0xa8] sm:$0xff]
        %v450 = vld [vmem:[%s2 + $0xb0] sm:$0xff]
        %v451 = vld [vmem:[%s2 + $0xb8] sm:$0xff]
        %v452 = vld [vmem:[%s2 + $0xc0] sm:$0xff]
        %v453 = vld [vmem:[%s2 + $0xc8] sm:$0xff]
        %v454 = vld [vmem:[%s2 + $0xd0] sm:$0xff]
        %v455 = vld [vmem:[%s2 + $0xd8] sm:$0xff]
        %v456 = vld [vmem:[%s2 + $0xe0] sm:$0xff]
        %v457 = vld [vmem:[%s2 + $0xe8] sm:$0xff]
        %v458 = vld [vmem:[%s2 + $0xf0] sm:$0xff]
        %v459 = vld [vmem:[%s2 + $0xf8] sm:$0xff]
        %v460 = vld [vmem:[%s2 + $0x100] sm:$0xff]
        %v461 = vld [vmem:[%s2 + $0x108] sm:$0xff]
        %v462 = vld [vmem:[%s2 + $0x110] sm:$0xff]
        %v463 = vld [vmem:[%s2 + $0x118] sm:$0xff]
        %v464 = vld [vmem:[%s2 + $0x120] sm:$0xff]
        %v465 = vld [vmem:[%s2 + $0x128] sm:$0xff]
        %v466 = vld [vmem:[%s2 + $0x130] sm:$0xff]
        %v467 = vld [vmem:[%s2 + $0x138] sm:$0xff]
        %v468 = vld [vmem:[%s2 + $0x140] sm:$0xff]
        %v469 = vld [vmem:[%s2 + $0x148] sm:$0xff]
        %v470 = vld [vmem:[%s2 + $0x150] sm:$0xff]
        %v471 = vld [vmem:[%s2 + $0x158] sm:$0xff]
        %v472 = vld [vmem:[%s2 + $0x160] sm:$0xff]
        %v473 = vld [vmem:[%s2 + $0x168] sm:$0xff]
        %v474 = vld [vmem:[%s2 + $0x170] sm:$0xff]
        %v475 = vld [vmem:[%s2 + $0x178] sm:$0xff]
        %v476 = vld [vmem:[%s2 + $0x180] sm:$0xff]
        %v477 = vld [vmem:[%s2 + $0x188] sm:$0xff]
        %v478 = vld [vmem:[%s2 + $0x190] sm:$0xff]
        %v479 = vld [vmem:[%s2 + $0x198] sm:$0xff]
        %v480 = vld [vmem:[%s2 + $0x1a0] sm:$0xff]
        %v481 = vld [vmem:[%s2 + $0x1a8] sm:$0xff]
        %v482 = vld [vmem:[%s2 + $0x1b0] sm:$0xff]
        %v483 = vld [vmem:[%s2 + $0x1b8] sm:$0xff]
        %v484 = vld [vmem:[%s2 + $0x1c0] sm:$0xff]
        %v485 = vld [vmem:[%s2 + $0x1c8] sm:$0xff]
        %v486 = vld [vmem:[%s2 + $0x1d0] sm:$0xff]
        %v487 = vld [vmem:[%s2 + $0x1d8] sm:$0xff]
        %v488 = vld [vmem:[%s2 + $0x1e0] sm:$0xff]
        %v489 = vld [vmem:[%s2 + $0x1e8] sm:$0xff]
        %v490 = vld [vmem:[%s2 + $0x1f0] sm:$0xff]
        %v491 = vld [vmem:[%s2 + $0x1f8] sm:$0xff]
        %v493 = vsel %vm403, %v427, 0
        %495 = vmatprep.subr.mxu0 0.0
        %496 = vmatpush1.msra.mxu0 %v428
        %497 = vmatprep.subr.mxu0 0.0
        %498 = vmatpush1.msra.mxu0 %v429
        %499 = vmatprep.subr.mxu0 0.0
        %500 = vmatpush1.msra.mxu0 %v430
        %501 = vmatprep.subr.mxu0 0.0
        %502 = vmatpush1.msra.mxu0 %v431
        %503 = vmatprep.subr.mxu0 0.0
        %504 = vmatpush1.msra.mxu0 0.0
        %505 = vmatprep.subr.mxu0 0.0
        %506 = vmatpush1.msra.mxu0 0.0
        %507 = vmatprep.subr.mxu0 0.0
        %508 = vmatpush1.msra.mxu0 0.0
        %509 = vmatprep.subr.mxu0 0.0
        %510 = vmatpush1.msra.mxu0 0.0
        %511 = vmatprep.subr.mxu0 0.0
        %512 = vmatpush1.msra.mxu0 0.0
        %513 = vmatprep.subr.mxu0 0.0
        %514 = vmatpush1.msra.mxu0 0.0
        %515 = vmatprep.subr.mxu0 0.0
        %516 = vmatpush1.msra.mxu0 0.0
        %517 = vmatprep.subr.mxu0 0.0
        %518 = vmatpush1.msra.mxu0 0.0
        %519 = vmatprep.subr.mxu0 0.0
        %520 = vmatpush1.msra.mxu0 0.0
        %521 = vmatprep.subr.mxu0 0.0
        %522 = vmatpush1.msra.mxu0 0.0
        %523 = vmatprep.subr.mxu0 0.0
        %524 = vmatpush1.msra.mxu0 0.0
        %525 = vmatprep.subr.mxu0 0.0
        %526 = vmatpush1.msra.mxu0 0.0
        %527 = vmatprep.subr.mxu0 0.0
        %528 = vmatpush1.msra.mxu0 0.0
        %529 = vmatprep.subr.mxu0 0.0
        %530 = vmatpush1.msra.mxu0 0.0
        %531 = vmatprep.subr.mxu0 0.0
        %532 = vmatpush1.msra.mxu0 0.0
        %533 = vmatprep.subr.mxu0 0.0
        %534 = vmatpush1.msra.mxu0 0.0
        %535 = vmatprep.subr.mxu0 0.0
        %536 = vmatpush1.msra.mxu0 0.0
        %537 = vmatprep.subr.mxu0 0.0
        %538 = vmatpush1.msra.mxu0 0.0
        %539 = vmatprep.subr.mxu0 0.0
        %540 = vmatpush1.msra.mxu0 0.0
        %541 = vmatprep.subr.mxu0 0.0
        %542 = vmatpush1.msra.mxu0 0.0
        %543 = vmatprep.subr.mxu0 0.0
        %544 = vmatpush1.msra.mxu0 0.0
        %545 = vmatprep.subr.mxu0 0.0
        %546 = vmatpush1.msra.mxu0 0.0
        %547 = vmatprep.subr.mxu0 0.0
        %548 = vmatpush1.msra.mxu0 0.0
        %549 = vmatprep.subr.mxu0 0.0
        %550 = vmatpush1.msra.mxu0 0.0
        %551 = vmatprep.subr.mxu0 0.0
        %552 = vmatpush1.msra.mxu0 0.0
        %553 = vmatprep.subr.mxu0 0.0
        %554 = vmatpush1.msra.mxu0 0.0
        %555 = vmatprep.subr.mxu0 0.0
        %556 = vmatpush1.msra.mxu0 0.0
        %557 = vmatprep.subr.mxu0 0.0
        %558 = vmatpush1.msra.mxu0 0.0
        %559 = vmatprep.mubr.f32.mxu0 0.0
        %560 = vmatmul.mubr.f32.gmra.mrb[0].mxu0 %v493
        %v561 = vpop.f32.mrb[0].mxu0
        %v562 = vadd.f32 0.0, %v561
        %v563 = vpop.f32.mrb[0].mxu0
        %564 = vdwg.mxu0
        %565 = vmatprep.subr.mxu0 0.0
        %566 = vmatpush1.msra.mxu0 %v432
        %567 = vmatprep.subr.mxu0 0.0
        %568 = vmatpush1.msra.mxu0 %v433
        %569 = vmatprep.subr.mxu0 0.0
        %570 = vmatpush1.msra.mxu0 %v434
        %571 = vmatprep.subr.mxu0 0.0
        %572 = vmatpush1.msra.mxu0 %v435
        %573 = vmatprep.subr.mxu0 0.0
        %574 = vmatpush1.msra.mxu0 0.0
        %575 = vmatprep.subr.mxu0 0.0
        %576 = vmatpush1.msra.mxu0 0.0
        %577 = vmatprep.subr.mxu0 0.0
        %578 = vmatpush1.msra.mxu0 0.0
        %579 = vmatprep.subr.mxu0 0.0
        %580 = vmatpush1.msra.mxu0 0.0
        %581 = vmatprep.subr.mxu0 0.0
        %582 = vmatpush1.msra.mxu0 0.0
        %583 = vmatprep.subr.mxu0 0.0
        %584 = vmatpush1.msra.mxu0 0.0
        %585 = vmatprep.subr.mxu0 0.0
        %586 = vmatpush1.msra.mxu0 0.0
        %587 = vmatprep.subr.mxu0 0.0
        %588 = vmatpush1.msra.mxu0 0.0
        %589 = vmatprep.subr.mxu0 0.0
        %590 = vmatpush1.msra.mxu0 0.0
        %591 = vmatprep.subr.mxu0 0.0
        %592 = vmatpush1.msra.mxu0 0.0
        %593 = vmatprep.subr.mxu0 0.0
        %594 = vmatpush1.msra.mxu0 0.0
        %595 = vmatprep.subr.mxu0 0.0
        %596 = vmatpush1.msra.mxu0 0.0
        %597 = vmatprep.subr.mxu0 0.0
        %598 = vmatpush1.msra.mxu0 0.0
        %599 = vmatprep.subr.mxu0 0.0
        %600 = vmatpush1.msra.mxu0 0.0
        %601 = vmatprep.subr.mxu0 0.0
        %602 = vmatpush1.msra.mxu0 0.0
        %603 = vmatprep.subr.mxu0 0.0
        %604 = vmatpush1.msra.mxu0 0.0
        %605 = vmatprep.subr.mxu0 0.0
        %606 = vmatpush1.msra.mxu0 0.0
        %607 = vmatprep.subr.mxu0 0.0
        %608 = vmatpush1.msra.mxu0 0.0
        %609 = vmatprep.subr.mxu0 0.0
        %610 = vmatpush1.msra.mxu0 0.0
        %611 = vmatprep.subr.mxu0 0.0
        %612 = vmatpush1.msra.mxu0 0.0
        %613 = vmatprep.subr.mxu0 0.0
        %614 = vmatpush1.msra.mxu0 0.0
        %615 = vmatprep.subr.mxu0 0.0
        %616 = vmatpush1.msra.mxu0 0.0
        %617 = vmatprep.subr.mxu0 0.0
        %618 = vmatpush1.msra.mxu0 0.0
        %619 = vmatprep.subr.mxu0 0.0
        %620 = vmatpush1.msra.mxu0 0.0
        %621 = vmatprep.subr.mxu0 0.0
        %622 = vmatpush1.msra.mxu0 0.0
        %623 = vmatprep.subr.mxu0 0.0
        %624 = vmatpush1.msra.mxu0 0.0
        %625 = vmatprep.subr.mxu0 0.0
        %626 = vmatpush1.msra.mxu0 0.0
        %627 = vmatprep.subr.mxu0 0.0
        %628 = vmatpush1.msra.mxu0 0.0
        %629 = vmatprep.mubr.f32.mxu0 0.0
        %630 = vmatmul.mubr.f32.gmra.mrb[0].mxu0 %v493
        %v631 = vpop.f32.mrb[0].mxu0
        %v632 = vadd.f32 0.0, %v631
        %v633 = vpop.f32.mrb[0].mxu0
        %634 = vdwg.mxu0
        %635 = vmatprep.subr.mxu0 0.0
        %636 = vmatpush1.msra.mxu0 %v436
        %637 = vmatprep.subr.mxu0 0.0
        %638 = vmatpush1.msra.mxu0 %v437
        %639 = vmatprep.subr.mxu0 0.0
        %640 = vmatpush1.msra.mxu0 %v438
        %641 = vmatprep.subr.mxu0 0.0
        %642 = vmatpush1.msra.mxu0 %v439
        %643 = vmatprep.subr.mxu0 0.0
        %644 = vmatpush1.msra.mxu0 0.0
        %645 = vmatprep.subr.mxu0 0.0
        %646 = vmatpush1.msra.mxu0 0.0
        %647 = vmatprep.subr.mxu0 0.0
        %648 = vmatpush1.msra.mxu0 0.0
        %649 = vmatprep.subr.mxu0 0.0
        %650 = vmatpush1.msra.mxu0 0.0
        %651 = vmatprep.subr.mxu0 0.0
        %652 = vmatpush1.msra.mxu0 0.0
        %653 = vmatprep.subr.mxu0 0.0
        %654 = vmatpush1.msra.mxu0 0.0
        %655 = vmatprep.subr.mxu0 0.0
        %656 = vmatpush1.msra.mxu0 0.0
        %657 = vmatprep.subr.mxu0 0.0
        %658 = vmatpush1.msra.mxu0 0.0
        %659 = vmatprep.subr.mxu0 0.0
        %660 = vmatpush1.msra.mxu0 0.0
        %661 = vmatprep.subr.mxu0 0.0
        %662 = vmatpush1.msra.mxu0 0.0
        %663 = vmatprep.subr.mxu0 0.0
        %664 = vmatpush1.msra.mxu0 0.0
        %665 = vmatprep.subr.mxu0 0.0
        %666 = vmatpush1.msra.mxu0 0.0
        %667 = vmatprep.subr.mxu0 0.0
        %668 = vmatpush1.msra.mxu0 0.0
        %669 = vmatprep.subr.mxu0 0.0
        %670 = vmatpush1.msra.mxu0 0.0
        %671 = vmatprep.subr.mxu0 0.0
        %672 = vmatpush1.msra.mxu0 0.0
        %673 = vmatprep.subr.mxu0 0.0
        %674 = vmatpush1.msra.mxu0 0.0
        %675 = vmatprep.subr.mxu0 0.0
        %676 = vmatpush1.msra.mxu0 0.0
        %677 = vmatprep.subr.mxu0 0.0
        %678 = vmatpush1.msra.mxu0 0.0
        %679 = vmatprep.subr.mxu0 0.0
        %680 = vmatpush1.msra.mxu0 0.0
        %681 = vmatprep.subr.mxu0 0.0
        %682 = vmatpush1.msra.mxu0 0.0
        %683 = vmatprep.subr.mxu0 0.0
        %684 = vmatpush1.msra.mxu0 0.0
        %685 = vmatprep.subr.mxu0 0.0
        %686 = vmatpush1.msra.mxu0 0.0
        %687 = vmatprep.subr.mxu0 0.0
        %688 = vmatpush1.msra.mxu0 0.0
        %689 = vmatprep.subr.mxu0 0.0
        %690 = vmatpush1.msra.mxu0 0.0
        %691 = vmatprep.subr.mxu0 0.0
        %692 = vmatpush1.msra.mxu0 0.0
        %693 = vmatprep.subr.mxu0 0.0
        %694 = vmatpush1.msra.mxu0 0.0
        %695 = vmatprep.subr.mxu0 0.0
        %696 = vmatpush1.msra.mxu0 0.0
        %697 = vmatprep.subr.mxu0 0.0
        %698 = vmatpush1.msra.mxu0 0.0
        %699 = vmatprep.mubr.f32.mxu0 0.0
        %700 = vmatmul.mubr.f32.gmra.mrb[0].mxu0 %v493
        %v701 = vpop.f32.mrb[0].mxu0
        %v702 = vadd.f32 0.0, %v701
        %v703 = vpop.f32.mrb[0].mxu0
        %704 = vdwg.mxu0
        %705 = vmatprep.subr.mxu0 0.0
        %706 = vmatpush1.msra.mxu0 %v440
        %707 = vmatprep.subr.mxu0 0.0
        %708 = vmatpush1.msra.mxu0 %v441
        %709 = vmatprep.subr.mxu0 0.0
        %710 = vmatpush1.msra.mxu0 %v442
        %711 = vmatprep.subr.mxu0 0.0
        %712 = vmatpush1.msra.mxu0 %v443
        %713 = vmatprep.subr.mxu0 0.0
        %714 = vmatpush1.msra.mxu0 0.0
        %715 = vmatprep.subr.mxu0 0.0
        %716 = vmatpush1.msra.mxu0 0.0
        %717 = vmatprep.subr.mxu0 0.0
        %718 = vmatpush1.msra.mxu0 0.0
        %719 = vmatprep.subr.mxu0 0.0
        %720 = vmatpush1.msra.mxu0 0.0
        %721 = vmatprep.subr.mxu0 0.0
        %722 = vmatpush1.msra.mxu0 0.0
        %723 = vmatprep.subr.mxu0 0.0
        %724 = vmatpush1.msra.mxu0 0.0
        %725 = vmatprep.subr.mxu0 0.0
        %726 = vmatpush1.msra.mxu0 0.0
        %727 = vmatprep.subr.mxu0 0.0
        %728 = vmatpush1.msra.mxu0 0.0
        %729 = vmatprep.subr.mxu0 0.0
        %730 = vmatpush1.msra.mxu0 0.0
        %731 = vmatprep.subr.mxu0 0.0
        %732 = vmatpush1.msra.mxu0 0.0
        %733 = vmatprep.subr.mxu0 0.0
        %734 = vmatpush1.msra.mxu0 0.0
        %735 = vmatprep.subr.mxu0 0.0
        %736 = vmatpush1.msra.mxu0 0.0
        %737 = vmatprep.subr.mxu0 0.0
        %738 = vmatpush1.msra.mxu0 0.0
        %739 = vmatprep.subr.mxu0 0.0
        %740 = vmatpush1.msra.mxu0 0.0
        %741 = vmatprep.subr.mxu0 0.0
        %742 = vmatpush1.msra.mxu0 0.0
        %743 = vmatprep.subr.mxu0 0.0
        %744 = vmatpush1.msra.mxu0 0.0
        %745 = vmatprep.subr.mxu0 0.0
        %746 = vmatpush1.msra.mxu0 0.0
        %747 = vmatprep.subr.mxu0 0.0
        %748 = vmatpush1.msra.mxu0 0.0
        %749 = vmatprep.subr.mxu0 0.0
        %750 = vmatpush1.msra.mxu0 0.0
        %751 = vmatprep.subr.mxu0 0.0
        %752 = vmatpush1.msra.mxu0 0.0
        %753 = vmatprep.subr.mxu0 0.0
        %754 = vmatpush1.msra.mxu0 0.0
        %755 = vmatprep.subr.mxu0 0.0
        %756 = vmatpush1.msra.mxu0 0.0
        %757 = vmatprep.subr.mxu0 0.0
        %758 = vmatpush1.msra.mxu0 0.0
        %759 = vmatprep.subr.mxu0 0.0
        %760 = vmatpush1.msra.mxu0 0.0
        %761 = vmatprep.subr.mxu0 0.0
        %762 = vmatpush1.msra.mxu0 0.0
        %763 = vmatprep.subr.mxu0 0.0
        %764 = vmatpush1.msra.mxu0 0.0
        %765 = vmatprep.subr.mxu0 0.0
        %766 = vmatpush1.msra.mxu0 0.0
        %767 = vmatprep.subr.mxu0 0.0
        %768 = vmatpush1.msra.mxu0 0.0
        %769 = vmatprep.mubr.f32.mxu0 0.0
        %770 = vmatmul.mubr.f32.gmra.mrb[0].mxu0 %v493
        %v771 = vpop.f32.mrb[0].mxu0
        %v772 = vadd.f32 0.0, %v771
        %v773 = vpop.f32.mrb[0].mxu0
        %774 = vdwg.mxu0
        %775 = vmatprep.subr.mxu0 0.0
        %776 = vmatpush1.msra.mxu0 %v444
        %777 = vmatprep.subr.mxu0 0.0
        %778 = vmatpush1.msra.mxu0 %v445
        %779 = vmatprep.subr.mxu0 0.0
        %780 = vmatpush1.msra.mxu0 %v446
        %781 = vmatprep.subr.mxu0 0.0
        %782 = vmatpush1.msra.mxu0 %v447
        %783 = vmatprep.subr.mxu0 0.0
        %784 = vmatpush1.msra.mxu0 0.0
        %785 = vmatprep.subr.mxu0 0.0
        %786 = vmatpush1.msra.mxu0 0.0
        %787 = vmatprep.subr.mxu0 0.0
        %788 = vmatpush1.msra.mxu0 0.0
        %789 = vmatprep.subr.mxu0 0.0
        %790 = vmatpush1.msra.mxu0 0.0
        %791 = vmatprep.subr.mxu0 0.0
        %792 = vmatpush1.msra.mxu0 0.0
        %793 = vmatprep.subr.mxu0 0.0
        %794 = vmatpush1.msra.mxu0 0.0
        %795 = vmatprep.subr.mxu0 0.0
        %796 = vmatpush1.msra.mxu0 0.0
        %797 = vmatprep.subr.mxu0 0.0
        %798 = vmatpush1.msra.mxu0 0.0
        %799 = vmatprep.subr.mxu0 0.0
        %800 = vmatpush1.msra.mxu0 0.0
        %801 = vmatprep.subr.mxu0 0.0
        %802 = vmatpush1.msra.mxu0 0.0
        %803 = vmatprep.subr.mxu0 0.0
        %804 = vmatpush1.msra.mxu0 0.0
        %805 = vmatprep.subr.mxu0 0.0
        %806 = vmatpush1.msra.mxu0 0.0
        %807 = vmatprep.subr.mxu0 0.0
        %808 = vmatpush1.msra.mxu0 0.0
        %809 = vmatprep.subr.mxu0 0.0
        %810 = vmatpush1.msra.mxu0 0.0
        %811 = vmatprep.subr.mxu0 0.0
        %812 = vmatpush1.msra.mxu0 0.0
        %813 = vmatprep.subr.mxu0 0.0
        %814 = vmatpush1.msra.mxu0 0.0
        %815 = vmatprep.subr.mxu0 0.0
        %816 = vmatpush1.msra.mxu0 0.0
        %817 = vmatprep.subr.mxu0 0.0
        %818 = vmatpush1.msra.mxu0 0.0
        %819 = vmatprep.subr.mxu0 0.0
        %820 = vmatpush1.msra.mxu0 0.0
        %821 = vmatprep.subr.mxu0 0.0
        %822 = vmatpush1.msra.mxu0 0.0
        %823 = vmatprep.subr.mxu0 0.0
        %824 = vmatpush1.msra.mxu0 0.0
        %825 = vmatprep.subr.mxu0 0.0
        %826 = vmatpush1.msra.mxu0 0.0
        %827 = vmatprep.subr.mxu0 0.0
        %828 = vmatpush1.msra.mxu0 0.0
        %829 = vmatprep.subr.mxu0 0.0
        %830 = vmatpush1.msra.mxu0 0.0
        %831 = vmatprep.subr.mxu0 0.0
        %832 = vmatpush1.msra.mxu0 0.0
        %833 = vmatprep.subr.mxu0 0.0
        %834 = vmatpush1.msra.mxu0 0.0
        %835 = vmatprep.subr.mxu0 0.0
        %836 = vmatpush1.msra.mxu0 0.0
        %837 = vmatprep.subr.mxu0 0.0
        %838 = vmatpush1.msra.mxu0 0.0
        %839 = vmatprep.mubr.f32.mxu0 0.0
        %840 = vmatmul.mubr.f32.gmra.mrb[0].mxu0 %v493
        %v841 = vpop.f32.mrb[0].mxu0
        %v842 = vadd.f32 0.0, %v841
        %v843 = vpop.f32.mrb[0].mxu0
        %844 = vdwg.mxu0
        %845 = vmatprep.subr.mxu0 0.0
        %846 = vmatpush1.msra.mxu0 %v448
        %847 = vmatprep.subr.mxu0 0.0
        %848 = vmatpush1.msra.mxu0 %v449
        %849 = vmatprep.subr.mxu0 0.0
        %850 = vmatpush1.msra.mxu0 %v450
        %851 = vmatprep.subr.mxu0 0.0
        %852 = vmatpush1.msra.mxu0 %v451
        %853 = vmatprep.subr.mxu0 0.0
        %854 = vmatpush1.msra.mxu0 0.0
        %855 = vmatprep.subr.mxu0 0.0
        %856 = vmatpush1.msra.mxu0 0.0
        %857 = vmatprep.subr.mxu0 0.0
        %858 = vmatpush1.msra.mxu0 0.0
        %859 = vmatprep.subr.mxu0 0.0
        %860 = vmatpush1.msra.mxu0 0.0
        %861 = vmatprep.subr.mxu0 0.0
        %862 = vmatpush1.msra.mxu0 0.0
        %863 = vmatprep.subr.mxu0 0.0
        %864 = vmatpush1.msra.mxu0 0.0
        %865 = vmatprep.subr.mxu0 0.0
        %866 = vmatpush1.msra.mxu0 0.0
        %867 = vmatprep.subr.mxu0 0.0
        %868 = vmatpush1.msra.mxu0 0.0
        %869 = vmatprep.subr.mxu0 0.0
        %870 = vmatpush1.msra.mxu0 0.0
        %871 = vmatprep.subr.mxu0 0.0
        %872 = vmatpush1.msra.mxu0 0.0
        %873 = vmatprep.subr.mxu0 0.0
        %874 = vmatpush1.msra.mxu0 0.0
        %875 = vmatprep.subr.mxu0 0.0
        %876 = vmatpush1.msra.mxu0 0.0
        %877 = vmatprep.subr.mxu0 0.0
        %878 = vmatpush1.msra.mxu0 0.0
        %879 = vmatprep.subr.mxu0 0.0
        %880 = vmatpush1.msra.mxu0 0.0
        %881 = vmatprep.subr.mxu0 0.0
        %882 = vmatpush1.msra.mxu0 0.0
        %883 = vmatprep.subr.mxu0 0.0
        %884 = vmatpush1.msra.mxu0 0.0
        %885 = vmatprep.subr.mxu0 0.0
        %886 = vmatpush1.msra.mxu0 0.0
        %887 = vmatprep.subr.mxu0 0.0
        %888 = vmatpush1.msra.mxu0 0.0
        %889 = vmatprep.subr.mxu0 0.0
        %890 = vmatpush1.msra.mxu0 0.0
        %891 = vmatprep.subr.mxu0 0.0
        %892 = vmatpush1.msra.mxu0 0.0
        %893 = vmatprep.subr.mxu0 0.0
        %894 = vmatpush1.msra.mxu0 0.0
        %895 = vmatprep.subr.mxu0 0.0
        %896 = vmatpush1.msra.mxu0 0.0
        %897 = vmatprep.subr.mxu0 0.0
        %898 = vmatpush1.msra.mxu0 0.0
        %899 = vmatprep.subr.mxu0 0.0
        %900 = vmatpush1.msra.mxu0 0.0
        %901 = vmatprep.subr.mxu0 0.0
        %902 = vmatpush1.msra.mxu0 0.0
        %903 = vmatprep.subr.mxu0 0.0
        %904 = vmatpush1.msra.mxu0 0.0
        %905 = vmatprep.subr.mxu0 0.0
        %906 = vmatpush1.msra.mxu0 0.0
        %907 = vmatprep.subr.mxu0 0.0
        %908 = vmatpush1.msra.mxu0 0.0
        %909 = vmatprep.mubr.f32.mxu0 0.0
        %910 = vmatmul.mubr.f32.gmra.mrb[0].mxu0 %v493
        %v911 = vpop.f32.mrb[0].mxu0
        %v912 = vadd.f32 0.0, %v911
        %v913 = vpop.f32.mrb[0].mxu0
        %914 = vdwg.mxu0
        %915 = vmatprep.subr.mxu0 0.0
        %916 = vmatpush1.msra.mxu0 %v452
        %917 = vmatprep.subr.mxu0 0.0
        %918 = vmatpush1.msra.mxu0 %v453
        %919 = vmatprep.subr.mxu0 0.0
        %920 = vmatpush1.msra.mxu0 %v454
        %921 = vmatprep.subr.mxu0 0.0
        %922 = vmatpush1.msra.mxu0 %v455
        %923 = vmatprep.subr.mxu0 0.0
        %924 = vmatpush1.msra.mxu0 0.0
        %925 = vmatprep.subr.mxu0 0.0
        %926 = vmatpush1.msra.mxu0 0.0
        %927 = vmatprep.subr.mxu0 0.0
        %928 = vmatpush1.msra.mxu0 0.0
        %929 = vmatprep.subr.mxu0 0.0
        %930 = vmatpush1.msra.mxu0 0.0
        %931 = vmatprep.subr.mxu0 0.0
        %932 = vmatpush1.msra.mxu0 0.0
        %933 = vmatprep.subr.mxu0 0.0
        %934 = vmatpush1.msra.mxu0 0.0
        %935 = vmatprep.subr.mxu0 0.0
        %936 = vmatpush1.msra.mxu0 0.0
        %937 = vmatprep.subr.mxu0 0.0
        %938 = vmatpush1.msra.mxu0 0.0
        %939 = vmatprep.subr.mxu0 0.0
        %940 = vmatpush1.msra.mxu0 0.0
        %941 = vmatprep.subr.mxu0 0.0
        %942 = vmatpush1.msra.mxu0 0.0
        %943 = vmatprep.subr.mxu0 0.0
        %944 = vmatpush1.msra.mxu0 0.0
        %945 = vmatprep.subr.mxu0 0.0
        %946 = vmatpush1.msra.mxu0 0.0
        %947 = vmatprep.subr.mxu0 0.0
        %948 = vmatpush1.msra.mxu0 0.0
        %949 = vmatprep.subr.mxu0 0.0
        %950 = vmatpush1.msra.mxu0 0.0
        %951 = vmatprep.subr.mxu0 0.0
        %952 = vmatpush1.msra.mxu0 0.0
        %953 = vmatprep.subr.mxu0 0.0
        %954 = vmatpush1.msra.mxu0 0.0
        %955 = vmatprep.subr.mxu0 0.0
        %956 = vmatpush1.msra.mxu0 0.0
        %957 = vmatprep.subr.mxu0 0.0
        %958 = vmatpush1.msra.mxu0 0.0
        %959 = vmatprep.subr.mxu0 0.0
        %960 = vmatpush1.msra.mxu0 0.0
        %961 = vmatprep.subr.mxu0 0.0
        %962 = vmatpush1.msra.mxu0 0.0
        %963 = vmatprep.subr.mxu0 0.0
        %964 = vmatpush1.msra.mxu0 0.0
        %965 = vmatprep.subr.mxu0 0.0
        %966 = vmatpush1.msra.mxu0 0.0
        %967 = vmatprep.subr.mxu0 0.0
        %968 = vmatpush1.msra.mxu0 0.0
        %969 = vmatprep.subr.mxu0 0.0
        %970 = vmatpush1.msra.mxu0 0.0
        %971 = vmatprep.subr.mxu0 0.0
        %972 = vmatpush1.msra.mxu0 0.0
        %973 = vmatprep.subr.mxu0 0.0
        %974 = vmatpush1.msra.mxu0 0.0
        %975 = vmatprep.subr.mxu0 0.0
        %976 = vmatpush1.msra.mxu0 0.0
        %977 = vmatprep.subr.mxu0 0.0
        %978 = vmatpush1.msra.mxu0 0.0
        %979 = vmatprep.mubr.f32.mxu0 0.0
        %980 = vmatmul.mubr.f32.gmra.mrb[0].mxu0 %v493
        %v981 = vpop.f32.mrb[0].mxu0
        %v982 = vadd.f32 0.0, %v981
        %v983 = vpop.f32.mrb[0].mxu0
        %984 = vdwg.mxu0
        %985 = vmatprep.subr.mxu0 0.0
        %986 = vmatpush1.msra.mxu0 %v456
        %987 = vmatprep.subr.mxu0 0.0
        %988 = vmatpush1.msra.mxu0 %v457
        %989 = vmatprep.subr.mxu0 0.0
        %990 = vmatpush1.msra.mxu0 %v458
        %991 = vmatprep.subr.mxu0 0.0
        %992 = vmatpush1.msra.mxu0 %v459
        %993 = vmatprep.subr.mxu0 0.0
        %994 = vmatpush1.msra.mxu0 0.0
        %995 = vmatprep.subr.mxu0 0.0
        %996 = vmatpush1.msra.mxu0 0.0
        %997 = vmatprep.subr.mxu0 0.0
        %998 = vmatpush1.msra.mxu0 0.0
        %999 = vmatprep.subr.mxu0 0.0
        %1000 = vmatpush1.msra.mxu0 0.0
        %1001 = vmatprep.subr.mxu0 0.0
        %1002 = vmatpush1.msra.mxu0 0.0
        %1003 = vmatprep.subr.mxu0 0.0
        %1004 = vmatpush1.msra.mxu0 0.0
        %1005 = vmatprep.subr.mxu0 0.0
        %1006 = vmatpush1.msra.mxu0 0.0
        %1007 = vmatprep.subr.mxu0 0.0
        %1008 = vmatpush1.msra.mxu0 0.0
        %1009 = vmatprep.subr.mxu0 0.0
        %1010 = vmatpush1.msra.mxu0 0.0
        %1011 = vmatprep.subr.mxu0 0.0
        %1012 = vmatpush1.msra.mxu0 0.0
        %1013 = vmatprep.subr.mxu0 0.0
        %1014 = vmatpush1.msra.mxu0 0.0
        %1015 = vmatprep.subr.mxu0 0.0
        %1016 = vmatpush1.msra.mxu0 0.0
        %1017 = vmatprep.subr.mxu0 0.0
        %1018 = vmatpush1.msra.mxu0 0.0
        %1019 = vmatprep.subr.mxu0 0.0
        %1020 = vmatpush1.msra.mxu0 0.0
        %1021 = vmatprep.subr.mxu0 0.0
        %1022 = vmatpush1.msra.mxu0 0.0
        %1023 = vmatprep.subr.mxu0 0.0
        %1024 = vmatpush1.msra.mxu0 0.0
        %1025 = vmatprep.subr.mxu0 0.0
        %1026 = vmatpush1.msra.mxu0 0.0
        %1027 = vmatprep.subr.mxu0 0.0
        %1028 = vmatpush1.msra.mxu0 0.0
        %1029 = vmatprep.subr.mxu0 0.0
        %1030 = vmatpush1.msra.mxu0 0.0
        %1031 = vmatprep.subr.mxu0 0.0
        %1032 = vmatpush1.msra.mxu0 0.0
        %1033 = vmatprep.subr.mxu0 0.0
        %1034 = vmatpush1.msra.mxu0 0.0
        %1035 = vmatprep.subr.mxu0 0.0
        %1036 = vmatpush1.msra.mxu0 0.0
        %1037 = vmatprep.subr.mxu0 0.0
        %1038 = vmatpush1.msra.mxu0 0.0
        %1039 = vmatprep.subr.mxu0 0.0
        %1040 = vmatpush1.msra.mxu0 0.0
        %1041 = vmatprep.subr.mxu0 0.0
        %1042 = vmatpush1.msra.mxu0 0.0
        %1043 = vmatprep.subr.mxu0 0.0
        %1044 = vmatpush1.msra.mxu0 0.0
        %1045 = vmatprep.subr.mxu0 0.0
        %1046 = vmatpush1.msra.mxu0 0.0
        %1047 = vmatprep.subr.mxu0 0.0
        %1048 = vmatpush1.msra.mxu0 0.0
        %1049 = vmatprep.mubr.f32.mxu0 0.0
        %1050 = vmatmul.mubr.f32.gmra.mrb[0].mxu0 %v493
        %v1051 = vpop.f32.mrb[0].mxu0
        %v1052 = vadd.f32 0.0, %v1051
        %v1053 = vpop.f32.mrb[0].mxu0
        %1054 = vdwg.mxu0
        %1055 = vmatprep.subr.mxu0 0.0
        %1056 = vmatpush1.msra.mxu0 %v460
        %1057 = vmatprep.subr.mxu0 0.0
        %1058 = vmatpush1.msra.mxu0 %v461
        %1059 = vmatprep.subr.mxu0 0.0
        %1060 = vmatpush1.msra.mxu0 %v462
        %1061 = vmatprep.subr.mxu0 0.0
        %1062 = vmatpush1.msra.mxu0 %v463
        %1063 = vmatprep.subr.mxu0 0.0
        %1064 = vmatpush1.msra.mxu0 0.0
        %1065 = vmatprep.subr.mxu0 0.0
        %1066 = vmatpush1.msra.mxu0 0.0
        %1067 = vmatprep.subr.mxu0 0.0
        %1068 = vmatpush1.msra.mxu0 0.0
        %1069 = vmatprep.subr.mxu0 0.0
        %1070 = vmatpush1.msra.mxu0 0.0
        %1071 = vmatprep.subr.mxu0 0.0
        %1072 = vmatpush1.msra.mxu0 0.0
        %1073 = vmatprep.subr.mxu0 0.0
        %1074 = vmatpush1.msra.mxu0 0.0
        %1075 = vmatprep.subr.mxu0 0.0
        %1076 = vmatpush1.msra.mxu0 0.0
        %1077 = vmatprep.subr.mxu0 0.0
        %1078 = vmatpush1.msra.mxu0 0.0
        %1079 = vmatprep.subr.mxu0 0.0
        %1080 = vmatpush1.msra.mxu0 0.0
        %1081 = vmatprep.subr.mxu0 0.0
        %1082 = vmatpush1.msra.mxu0 0.0
        %1083 = vmatprep.subr.mxu0 0.0
        %1084 = vmatpush1.msra.mxu0 0.0
        %1085 = vmatprep.subr.mxu0 0.0
        %1086 = vmatpush1.msra.mxu0 0.0
        %1087 = vmatprep.subr.mxu0 0.0
        %1088 = vmatpush1.msra.mxu0 0.0
        %1089 = vmatprep.subr.mxu0 0.0
        %1090 = vmatpush1.msra.mxu0 0.0
        %1091 = vmatprep.subr.mxu0 0.0
        %1092 = vmatpush1.msra.mxu0 0.0
        %1093 = vmatprep.subr.mxu0 0.0
        %1094 = vmatpush1.msra.mxu0 0.0
        %1095 = vmatprep.subr.mxu0 0.0
        %1096 = vmatpush1.msra.mxu0 0.0
        %1097 = vmatprep.subr.mxu0 0.0
        %1098 = vmatpush1.msra.mxu0 0.0
        %1099 = vmatprep.subr.mxu0 0.0
        %1100 = vmatpush1.msra.mxu0 0.0
        %1101 = vmatprep.subr.mxu0 0.0
        %1102 = vmatpush1.msra.mxu0 0.0
        %1103 = vmatprep.subr.mxu0 0.0
        %1104 = vmatpush1.msra.mxu0 0.0
        %1105 = vmatprep.subr.mxu0 0.0
        %1106 = vmatpush1.msra.mxu0 0.0
        %1107 = vmatprep.subr.mxu0 0.0
        %1108 = vmatpush1.msra.mxu0 0.0
        %1109 = vmatprep.subr.mxu0 0.0
        %1110 = vmatpush1.msra.mxu0 0.0
        %1111 = vmatprep.subr.mxu0 0.0
        %1112 = vmatpush1.msra.mxu0 0.0
        %1113 = vmatprep.subr.mxu0 0.0
        %1114 = vmatpush1.msra.mxu0 0.0
        %1115 = vmatprep.subr.mxu0 0.0
        %1116 = vmatpush1.msra.mxu0 0.0
        %1117 = vmatprep.subr.mxu0 0.0
        %1118 = vmatpush1.msra.mxu0 0.0
        %1119 = vmatprep.mubr.f32.mxu0 0.0
        %1120 = vmatmul.mubr.f32.gmra.mrb[0].mxu0 %v493
        %v1121 = vpop.f32.mrb[0].mxu0
        %v1122 = vadd.f32 0.0, %v1121
        %v1123 = vpop.f32.mrb[0].mxu0
        %1124 = vdwg.mxu0
        %1125 = vmatprep.subr.mxu0 0.0
        %1126 = vmatpush1.msra.mxu0 %v464
        %1127 = vmatprep.subr.mxu0 0.0
        %1128 = vmatpush1.msra.mxu0 %v465
        %1129 = vmatprep.subr.mxu0 0.0
        %1130 = vmatpush1.msra.mxu0 %v466
        %1131 = vmatprep.subr.mxu0 0.0
        %1132 = vmatpush1.msra.mxu0 %v467
        %1133 = vmatprep.subr.mxu0 0.0
        %1134 = vmatpush1.msra.mxu0 0.0
        %1135 = vmatprep.subr.mxu0 0.0
        %1136 = vmatpush1.msra.mxu0 0.0
        %1137 = vmatprep.subr.mxu0 0.0
        %1138 = vmatpush1.msra.mxu0 0.0
        %1139 = vmatprep.subr.mxu0 0.0
        %1140 = vmatpush1.msra.mxu0 0.0
        %1141 = vmatprep.subr.mxu0 0.0
        %1142 = vmatpush1.msra.mxu0 0.0
        %1143 = vmatprep.subr.mxu0 0.0
        %1144 = vmatpush1.msra.mxu0 0.0
        %1145 = vmatprep.subr.mxu0 0.0
        %1146 = vmatpush1.msra.mxu0 0.0
        %1147 = vmatprep.subr.mxu0 0.0
        %1148 = vmatpush1.msra.mxu0 0.0
        %1149 = vmatprep.subr.mxu0 0.0
        %1150 = vmatpush1.msra.mxu0 0.0
        %1151 = vmatprep.subr.mxu0 0.0
        %1152 = vmatpush1.msra.mxu0 0.0
        %1153 = vmatprep.subr.mxu0 0.0
        %1154 = vmatpush1.msra.mxu0 0.0
        %1155 = vmatprep.subr.mxu0 0.0
        %1156 = vmatpush1.msra.mxu0 0.0
        %1157 = vmatprep.subr.mxu0 0.0
        %1158 = vmatpush1.msra.mxu0 0.0
        %1159 = vmatprep.subr.mxu0 0.0
        %1160 = vmatpush1.msra.mxu0 0.0
        %1161 = vmatprep.subr.mxu0 0.0
        %1162 = vmatpush1.msra.mxu0 0.0
        %1163 = vmatprep.subr.mxu0 0.0
        %1164 = vmatpush1.msra.mxu0 0.0
        %1165 = vmatprep.subr.mxu0 0.0
        %1166 = vmatpush1.msra.mxu0 0.0
        %1167 = vmatprep.subr.mxu0 0.0
        %1168 = vmatpush1.msra.mxu0 0.0
        %1169 = vmatprep.subr.mxu0 0.0
        %1170 = vmatpush1.msra.mxu0 0.0
        %1171 = vmatprep.subr.mxu0 0.0
        %1172 = vmatpush1.msra.mxu0 0.0
        %1173 = vmatprep.subr.mxu0 0.0
        %1174 = vmatpush1.msra.mxu0 0.0
        %1175 = vmatprep.subr.mxu0 0.0
        %1176 = vmatpush1.msra.mxu0 0.0
        %1177 = vmatprep.subr.mxu0 0.0
        %1178 = vmatpush1.msra.mxu0 0.0
        %1179 = vmatprep.subr.mxu0 0.0
        %1180 = vmatpush1.msra.mxu0 0.0
        %1181 = vmatprep.subr.mxu0 0.0
        %1182 = vmatpush1.msra.mxu0 0.0
        %1183 = vmatprep.subr.mxu0 0.0
        %1184 = vmatpush1.msra.mxu0 0.0
        %1185 = vmatprep.subr.mxu0 0.0
        %1186 = vmatpush1.msra.mxu0 0.0
        %1187 = vmatprep.subr.mxu0 0.0
        %1188 = vmatpush1.msra.mxu0 0.0
        %1189 = vmatprep.mubr.f32.mxu0 0.0
        %1190 = vmatmul.mubr.f32.gmra.mrb[0].mxu0 %v493
        %v1191 = vpop.f32.mrb[0].mxu0
        %v1192 = vadd.f32 0.0, %v1191
        %v1193 = vpop.f32.mrb[0].mxu0
        %1194 = vdwg.mxu0
        %1195 = vmatprep.subr.mxu0 0.0
        %1196 = vmatpush1.msra.mxu0 %v468
        %1197 = vmatprep.subr.mxu0 0.0
        %1198 = vmatpush1.msra.mxu0 %v469
        %1199 = vmatprep.subr.mxu0 0.0
        %1200 = vmatpush1.msra.mxu0 %v470
        %1201 = vmatprep.subr.mxu0 0.0
        %1202 = vmatpush1.msra.mxu0 %v471
        %1203 = vmatprep.subr.mxu0 0.0
        %1204 = vmatpush1.msra.mxu0 0.0
        %1205 = vmatprep.subr.mxu0 0.0
        %1206 = vmatpush1.msra.mxu0 0.0
        %1207 = vmatprep.subr.mxu0 0.0
        %1208 = vmatpush1.msra.mxu0 0.0
        %1209 = vmatprep.subr.mxu0 0.0
        %1210 = vmatpush1.msra.mxu0 0.0
        %1211 = vmatprep.subr.mxu0 0.0
        %1212 = vmatpush1.msra.mxu0 0.0
        %1213 = vmatprep.subr.mxu0 0.0
        %1214 = vmatpush1.msra.mxu0 0.0
        %1215 = vmatprep.subr.mxu0 0.0
        %1216 = vmatpush1.msra.mxu0 0.0
        %1217 = vmatprep.subr.mxu0 0.0
        %1218 = vmatpush1.msra.mxu0 0.0
        %1219 = vmatprep.subr.mxu0 0.0
        %1220 = vmatpush1.msra.mxu0 0.0
        %1221 = vmatprep.subr.mxu0 0.0
        %1222 = vmatpush1.msra.mxu0 0.0
        %1223 = vmatprep.subr.mxu0 0.0
        %1224 = vmatpush1.msra.mxu0 0.0
        %1225 = vmatprep.subr.mxu0 0.0
        %1226 = vmatpush1.msra.mxu0 0.0
        %1227 = vmatprep.subr.mxu0 0.0
        %1228 = vmatpush1.msra.mxu0 0.0
        %1229 = vmatprep.subr.mxu0 0.0
        %1230 = vmatpush1.msra.mxu0 0.0
        %1231 = vmatprep.subr.mxu0 0.0
        %1232 = vmatpush1.msra.mxu0 0.0
        %1233 = vmatprep.subr.mxu0 0.0
        %1234 = vmatpush1.msra.mxu0 0.0
        %1235 = vmatprep.subr.mxu0 0.0
        %1236 = vmatpush1.msra.mxu0 0.0
        %1237 = vmatprep.subr.mxu0 0.0
        %1238 = vmatpush1.msra.mxu0 0.0
        %1239 = vmatprep.subr.mxu0 0.0
        %1240 = vmatpush1.msra.mxu0 0.0
        %1241 = vmatprep.subr.mxu0 0.0
        %1242 = vmatpush1.msra.mxu0 0.0
        %1243 = vmatprep.subr.mxu0 0.0
        %1244 = vmatpush1.msra.mxu0 0.0
        %1245 = vmatprep.subr.mxu0 0.0
        %1246 = vmatpush1.msra.mxu0 0.0
        %1247 = vmatprep.subr.mxu0 0.0
        %1248 = vmatpush1.msra.mxu0 0.0
        %1249 = vmatprep.subr.mxu0 0.0
        %1250 = vmatpush1.msra.mxu0 0.0
        %1251 = vmatprep.subr.mxu0 0.0
        %1252 = vmatpush1.msra.mxu0 0.0
        %1253 = vmatprep.subr.mxu0 0.0
        %1254 = vmatpush1.msra.mxu0 0.0
        %1255 = vmatprep.subr.mxu0 0.0
        %1256 = vmatpush1.msra.mxu0 0.0
        %1257 = vmatprep.subr.mxu0 0.0
        %1258 = vmatpush1.msra.mxu0 0.0
        %1259 = vmatprep.mubr.f32.mxu0 0.0
        %1260 = vmatmul.mubr.f32.gmra.mrb[0].mxu0 %v493
        %v1261 = vpop.f32.mrb[0].mxu0
        %v1262 = vadd.f32 0.0, %v1261
        %v1263 = vpop.f32.mrb[0].mxu0
        %1264 = vdwg.mxu0
        %1265 = vmatprep.subr.mxu0 0.0
        %1266 = vmatpush1.msra.mxu0 %v472
        %1267 = vmatprep.subr.mxu0 0.0
        %1268 = vmatpush1.msra.mxu0 %v473
        %1269 = vmatprep.subr.mxu0 0.0
        %1270 = vmatpush1.msra.mxu0 %v474
        %1271 = vmatprep.subr.mxu0 0.0
        %1272 = vmatpush1.msra.mxu0 %v475
        %1273 = vmatprep.subr.mxu0 0.0
        %1274 = vmatpush1.msra.mxu0 0.0
        %1275 = vmatprep.subr.mxu0 0.0
        %1276 = vmatpush1.msra.mxu0 0.0
        %1277 = vmatprep.subr.mxu0 0.0
        %1278 = vmatpush1.msra.mxu0 0.0
        %1279 = vmatprep.subr.mxu0 0.0
        %1280 = vmatpush1.msra.mxu0 0.0
        %1281 = vmatprep.subr.mxu0 0.0
        %1282 = vmatpush1.msra.mxu0 0.0
        %1283 = vmatprep.subr.mxu0 0.0
        %1284 = vmatpush1.msra.mxu0 0.0
        %1285 = vmatprep.subr.mxu0 0.0
        %1286 = vmatpush1.msra.mxu0 0.0
        %1287 = vmatprep.subr.mxu0 0.0
        %1288 = vmatpush1.msra.mxu0 0.0
        %1289 = vmatprep.subr.mxu0 0.0
        %1290 = vmatpush1.msra.mxu0 0.0
        %1291 = vmatprep.subr.mxu0 0.0
        %1292 = vmatpush1.msra.mxu0 0.0
        %1293 = vmatprep.subr.mxu0 0.0
        %1294 = vmatpush1.msra.mxu0 0.0
        %1295 = vmatprep.subr.mxu0 0.0
        %1296 = vmatpush1.msra.mxu0 0.0
        %1297 = vmatprep.subr.mxu0 0.0
        %1298 = vmatpush1.msra.mxu0 0.0
        %1299 = vmatprep.subr.mxu0 0.0
        %1300 = vmatpush1.msra.mxu0 0.0
        %1301 = vmatprep.subr.mxu0 0.0
        %1302 = vmatpush1.msra.mxu0 0.0
        %1303 = vmatprep.subr.mxu0 0.0
        %1304 = vmatpush1.msra.mxu0 0.0
        %1305 = vmatprep.subr.mxu0 0.0
        %1306 = vmatpush1.msra.mxu0 0.0
        %1307 = vmatprep.subr.mxu0 0.0
        %1308 = vmatpush1.msra.mxu0 0.0
        %1309 = vmatprep.subr.mxu0 0.0
        %1310 = vmatpush1.msra.mxu0 0.0
        %1311 = vmatprep.subr.mxu0 0.0
        %1312 = vmatpush1.msra.mxu0 0.0
        %1313 = vmatprep.subr.mxu0 0.0
        %1314 = vmatpush1.msra.mxu0 0.0
        %1315 = vmatprep.subr.mxu0 0.0
        %1316 = vmatpush1.msra.mxu0 0.0
        %1317 = vmatprep.subr.mxu0 0.0
        %1318 = vmatpush1.msra.mxu0 0.0
        %1319 = vmatprep.subr.mxu0 0.0
        %1320 = vmatpush1.msra.mxu0 0.0
        %1321 = vmatprep.subr.mxu0 0.0
        %1322 = vmatpush1.msra.mxu0 0.0
        %1323 = vmatprep.subr.mxu0 0.0
        %1324 = vmatpush1.msra.mxu0 0.0
        %1325 = vmatprep.subr.mxu0 0.0
        %1326 = vmatpush1.msra.mxu0 0.0
        %1327 = vmatprep.subr.mxu0 0.0
        %1328 = vmatpush1.msra.mxu0 0.0
        %1329 = vmatprep.mubr.f32.mxu0 0.0
        %1330 = vmatmul.mubr.f32.gmra.mrb[0].mxu0 %v493
        %v1331 = vpop.f32.mrb[0].mxu0
        %v1332 = vadd.f32 0.0, %v1331
        %v1333 = vpop.f32.mrb[0].mxu0
        %1334 = vdwg.mxu0
        %vm1335 = vcmask 64512
        %v1337 = vsel %vm1335, %v562, 0
        %v1340 = vsel %vm1335, %v842, 0
        %1342 = vmatprep.subr.mxu0 0.0
        %1343 = vmatpush1.xpose.msra.mxu0 %v1340
        %1344 = vmatprep.subr.mxu0 0.0
        %1345 = vmatpush1.xpose.msra.mxu0 0.0
        %1346 = vmatprep.subr.mxu0 0.0
        %1347 = vmatpush1.xpose.msra.mxu0 0.0
        %1348 = vmatprep.subr.mxu0 0.0
        %1349 = vmatpush1.xpose.msra.mxu0 0.0
        %1350 = vmatprep.subr.mxu0 0.0
        %1351 = vmatpush1.xpose.msra.mxu0 0.0
        %1352 = vmatprep.subr.mxu0 0.0
        %1353 = vmatpush1.xpose.msra.mxu0 0.0
        %1354 = vmatprep.subr.mxu0 0.0
        %1355 = vmatpush1.xpose.msra.mxu0 0.0
        %1356 = vmatprep.subr.mxu0 0.0
        %1357 = vmatpush1.xpose.msra.mxu0 0.0
        %1358 = vmatprep.subr.mxu0 0.0
        %1359 = vmatpush1.xpose.msra.mxu0 0.0
        %1360 = vmatprep.subr.mxu0 0.0
        %1361 = vmatpush1.xpose.msra.mxu0 0.0
        %1362 = vmatprep.subr.mxu0 0.0
        %1363 = vmatpush1.xpose.msra.mxu0 0.0
        %1364 = vmatprep.subr.mxu0 0.0
        %1365 = vmatpush1.xpose.msra.mxu0 0.0
        %1366 = vmatprep.subr.mxu0 0.0
        %1367 = vmatpush1.xpose.msra.mxu0 0.0
        %1368 = vmatprep.subr.mxu0 0.0
        %1369 = vmatpush1.xpose.msra.mxu0 0.0
        %1370 = vmatprep.subr.mxu0 0.0
        %1371 = vmatpush1.xpose.msra.mxu0 0.0
        %1372 = vmatprep.subr.mxu0 0.0
        %1373 = vmatpush1.xpose.msra.mxu0 0.0
        %1374 = vmatprep.subr.mxu0 0.0
        %1375 = vmatpush1.xpose.msra.mxu0 0.0
        %1376 = vmatprep.subr.mxu0 0.0
        %1377 = vmatpush1.xpose.msra.mxu0 0.0
        %1378 = vmatprep.subr.mxu0 0.0
        %1379 = vmatpush1.xpose.msra.mxu0 0.0
        %1380 = vmatprep.subr.mxu0 0.0
        %1381 = vmatpush1.xpose.msra.mxu0 0.0
        %1382 = vmatprep.subr.mxu0 0.0
        %1383 = vmatpush1.xpose.msra.mxu0 0.0
        %1384 = vmatprep.subr.mxu0 0.0
        %1385 = vmatpush1.xpose.msra.mxu0 0.0
        %1386 = vmatprep.subr.mxu0 0.0
        %1387 = vmatpush1.xpose.msra.mxu0 0.0
        %1388 = vmatprep.subr.mxu0 0.0
        %1389 = vmatpush1.xpose.msra.mxu0 0.0
        %1390 = vmatprep.subr.mxu0 0.0
        %1391 = vmatpush1.xpose.msra.mxu0 0.0
        %1392 = vmatprep.subr.mxu0 0.0
        %1393 = vmatpush1.xpose.msra.mxu0 0.0
        %1394 = vmatprep.subr.mxu0 0.0
        %1395 = vmatpush1.xpose.msra.mxu0 0.0
        %1396 = vmatprep.subr.mxu0 0.0
        %1397 = vmatpush1.xpose.msra.mxu0 0.0
        %1398 = vmatprep.subr.mxu0 0.0
        %1399 = vmatpush1.xpose.msra.mxu0 0.0
        %1400 = vmatprep.subr.mxu0 0.0
        %1401 = vmatpush1.xpose.msra.mxu0 0.0
        %1402 = vmatprep.subr.mxu0 0.0
        %1403 = vmatpush1.xpose.msra.mxu0 0.0
        %1404 = vmatprep.subr.mxu0 0.0
        %1405 = vmatpush1.xpose.msra.mxu0 0.0
        %1406 = vmatprep.mubr.f32.mxu0 0.0
        %1407 = vmatmul.mubr.f32.gmra.mrb[0].mxu0 %v1337
        %v1408 = vpop.f32.mrb[0].mxu0
        %v1409 = vadd.f32 0.0, %v1408
        %v1410 = vpop.f32.mrb[0].mxu0
        %1411 = vdwg.mxu0
        %v1413 = vsel %vm1335, %v632, 0
        %v1416 = vsel %vm1335, %v912, 0
        %1418 = vmatprep.subr.mxu0 0.0
        %1419 = vmatpush1.xpose.msra.mxu0 %v1416
        %1420 = vmatprep.subr.mxu0 0.0
        %1421 = vmatpush1.xpose.msra.mxu0 0.0
        %1422 = vmatprep.subr.mxu0 0.0
        %1423 = vmatpush1.xpose.msra.mxu0 0.0
        %1424 = vmatprep.subr.mxu0 0.0
        %1425 = vmatpush1.xpose.msra.mxu0 0.0
        %1426 = vmatprep.subr.mxu0 0.0
        %1427 = vmatpush1.xpose.msra.mxu0 0.0
        %1428 = vmatprep.subr.mxu0 0.0
        %1429 = vmatpush1.xpose.msra.mxu0 0.0
        %1430 = vmatprep.subr.mxu0 0.0
        %1431 = vmatpush1.xpose.msra.mxu0 0.0
        %1432 = vmatprep.subr.mxu0 0.0
        %1433 = vmatpush1.xpose.msra.mxu0 0.0
        %1434 = vmatprep.subr.mxu0 0.0
        %1435 = vmatpush1.xpose.msra.mxu0 0.0
        %1436 = vmatprep.subr.mxu0 0.0
        %1437 = vmatpush1.xpose.msra.mxu0 0.0
        %1438 = vmatprep.subr.mxu0 0.0
        %1439 = vmatpush1.xpose.msra.mxu0 0.0
        %1440 = vmatprep.subr.mxu0 0.0
        %1441 = vmatpush1.xpose.msra.mxu0 0.0
        %1442 = vmatprep.subr.mxu0 0.0
        %1443 = vmatpush1.xpose.msra.mxu0 0.0
        %1444 = vmatprep.subr.mxu0 0.0
        %1445 = vmatpush1.xpose.msra.mxu0 0.0
        %1446 = vmatprep.subr.mxu0 0.0
        %1447 = vmatpush1.xpose.msra.mxu0 0.0
        %1448 = vmatprep.subr.mxu0 0.0
        %1449 = vmatpush1.xpose.msra.mxu0 0.0
        %1450 = vmatprep.subr.mxu0 0.0
        %1451 = vmatpush1.xpose.msra.mxu0 0.0
        %1452 = vmatprep.subr.mxu0 0.0
        %1453 = vmatpush1.xpose.msra.mxu0 0.0
        %1454 = vmatprep.subr.mxu0 0.0
        %1455 = vmatpush1.xpose.msra.mxu0 0.0
        %1456 = vmatprep.subr.mxu0 0.0
        %1457 = vmatpush1.xpose.msra.mxu0 0.0
        %1458 = vmatprep.subr.mxu0 0.0
        %1459 = vmatpush1.xpose.msra.mxu0 0.0
        %1460 = vmatprep.subr.mxu0 0.0
        %1461 = vmatpush1.xpose.msra.mxu0 0.0
        %1462 = vmatprep.subr.mxu0 0.0
        %1463 = vmatpush1.xpose.msra.mxu0 0.0
        %1464 = vmatprep.subr.mxu0 0.0
        %1465 = vmatpush1.xpose.msra.mxu0 0.0
        %1466 = vmatprep.subr.mxu0 0.0
        %1467 = vmatpush1.xpose.msra.mxu0 0.0
        %1468 = vmatprep.subr.mxu0 0.0
        %1469 = vmatpush1.xpose.msra.mxu0 0.0
        %1470 = vmatprep.subr.mxu0 0.0
        %1471 = vmatpush1.xpose.msra.mxu0 0.0
        %1472 = vmatprep.subr.mxu0 0.0
        %1473 = vmatpush1.xpose.msra.mxu0 0.0
        %1474 = vmatprep.subr.mxu0 0.0
        %1475 = vmatpush1.xpose.msra.mxu0 0.0
        %1476 = vmatprep.subr.mxu0 0.0
        %1477 = vmatpush1.xpose.msra.mxu0 0.0
        %1478 = vmatprep.subr.mxu0 0.0
        %1479 = vmatpush1.xpose.msra.mxu0 0.0
        %1480 = vmatprep.subr.mxu0 0.0
        %1481 = vmatpush1.xpose.msra.mxu0 0.0
        %1482 = vmatprep.mubr.f32.mxu0 0.0
        %1483 = vmatmul.mubr.f32.gmra.mrb[0].mxu0 %v1413
        %v1484 = vpop.f32.mrb[0].mxu0
        %v1485 = vadd.f32 0.0, %v1484
        %v1486 = vpop.f32.mrb[0].mxu0
        %1487 = vdwg.mxu0
        %v1489 = vsel %vm1335, %v702, 0
        %v1492 = vsel %vm1335, %v982, 0
        %1494 = vmatprep.subr.mxu0 0.0
        %1495 = vmatpush1.xpose.msra.mxu0 %v1492
        %1496 = vmatprep.subr.mxu0 0.0
        %1497 = vmatpush1.xpose.msra.mxu0 0.0
        %1498 = vmatprep.subr.mxu0 0.0
        %1499 = vmatpush1.xpose.msra.mxu0 0.0
        %1500 = vmatprep.subr.mxu0 0.0
        %1501 = vmatpush1.xpose.msra.mxu0 0.0
        %1502 = vmatprep.subr.mxu0 0.0
        %1503 = vmatpush1.xpose.msra.mxu0 0.0
        %1504 = vmatprep.subr.mxu0 0.0
        %1505 = vmatpush1.xpose.msra.mxu0 0.0
        %1506 = vmatprep.subr.mxu0 0.0
        %1507 = vmatpush1.xpose.msra.mxu0 0.0
        %1508 = vmatprep.subr.mxu0 0.0
        %1509 = vmatpush1.xpose.msra.mxu0 0.0
        %1510 = vmatprep.subr.mxu0 0.0
        %1511 = vmatpush1.xpose.msra.mxu0 0.0
        %1512 = vmatprep.subr.mxu0 0.0
        %1513 = vmatpush1.xpose.msra.mxu0 0.0
        %1514 = vmatprep.subr.mxu0 0.0
        %1515 = vmatpush1.xpose.msra.mxu0 0.0
        %1516 = vmatprep.subr.mxu0 0.0
        %1517 = vmatpush1.xpose.msra.mxu0 0.0
        %1518 = vmatprep.subr.mxu0 0.0
        %1519 = vmatpush1.xpose.msra.mxu0 0.0
        %1520 = vmatprep.subr.mxu0 0.0
        %1521 = vmatpush1.xpose.msra.mxu0 0.0
        %1522 = vmatprep.subr.mxu0 0.0
        %1523 = vmatpush1.xpose.msra.mxu0 0.0
        %1524 = vmatprep.subr.mxu0 0.0
        %1525 = vmatpush1.xpose.msra.mxu0 0.0
        %1526 = vmatprep.subr.mxu0 0.0
        %1527 = vmatpush1.xpose.msra.mxu0 0.0
        %1528 = vmatprep.subr.mxu0 0.0
        %1529 = vmatpush1.xpose.msra.mxu0 0.0
        %1530 = vmatprep.subr.mxu0 0.0
        %1531 = vmatpush1.xpose.msra.mxu0 0.0
        %1532 = vmatprep.subr.mxu0 0.0
        %1533 = vmatpush1.xpose.msra.mxu0 0.0
        %1534 = vmatprep.subr.mxu0 0.0
        %1535 = vmatpush1.xpose.msra.mxu0 0.0
        %1536 = vmatprep.subr.mxu0 0.0
        %1537 = vmatpush1.xpose.msra.mxu0 0.0
        %1538 = vmatprep.subr.mxu0 0.0
        %1539 = vmatpush1.xpose.msra.mxu0 0.0
        %1540 = vmatprep.subr.mxu0 0.0
        %1541 = vmatpush1.xpose.msra.mxu0 0.0
        %1542 = vmatprep.subr.mxu0 0.0
        %1543 = vmatpush1.xpose.msra.mxu0 0.0
        %1544 = vmatprep.subr.mxu0 0.0
        %1545 = vmatpush1.xpose.msra.mxu0 0.0
        %1546 = vmatprep.subr.mxu0 0.0
        %1547 = vmatpush1.xpose.msra.mxu0 0.0
        %1548 = vmatprep.subr.mxu0 0.0
        %1549 = vmatpush1.xpose.msra.mxu0 0.0
        %1550 = vmatprep.subr.mxu0 0.0
        %1551 = vmatpush1.xpose.msra.mxu0 0.0
        %1552 = vmatprep.subr.mxu0 0.0
        %1553 = vmatpush1.xpose.msra.mxu0 0.0
        %1554 = vmatprep.subr.mxu0 0.0
        %1555 = vmatpush1.xpose.msra.mxu0 0.0
        %1556 = vmatprep.subr.mxu0 0.0
        %1557 = vmatpush1.xpose.msra.mxu0 0.0
        %1558 = vmatprep.mubr.f32.mxu0 0.0
        %1559 = vmatmul.mubr.f32.gmra.mrb[0].mxu0 %v1489
        %v1560 = vpop.f32.mrb[0].mxu0
        %v1561 = vadd.f32 0.0, %v1560
        %v1562 = vpop.f32.mrb[0].mxu0
        %1563 = vdwg.mxu0
        %v1565 = vsel %vm1335, %v772, 0
        %v1568 = vsel %vm1335, %v1052, 0
        %1570 = vmatprep.subr.mxu0 0.0
        %1571 = vmatpush1.xpose.msra.mxu0 %v1568
        %1572 = vmatprep.subr.mxu0 0.0
        %1573 = vmatpush1.xpose.msra.mxu0 0.0
        %1574 = vmatprep.subr.mxu0 0.0
        %1575 = vmatpush1.xpose.msra.mxu0 0.0
        %1576 = vmatprep.subr.mxu0 0.0
        %1577 = vmatpush1.xpose.msra.mxu0 0.0
        %1578 = vmatprep.subr.mxu0 0.0
        %1579 = vmatpush1.xpose.msra.mxu0 0.0
        %1580 = vmatprep.subr.mxu0 0.0
        %1581 = vmatpush1.xpose.msra.mxu0 0.0
        %1582 = vmatprep.subr.mxu0 0.0
        %1583 = vmatpush1.xpose.msra.mxu0 0.0
        %1584 = vmatprep.subr.mxu0 0.0
        %1585 = vmatpush1.xpose.msra.mxu0 0.0
        %1586 = vmatprep.subr.mxu0 0.0
        %1587 = vmatpush1.xpose.msra.mxu0 0.0
        %1588 = vmatprep.subr.mxu0 0.0
        %1589 = vmatpush1.xpose.msra.mxu0 0.0
        %1590 = vmatprep.subr.mxu0 0.0
        %1591 = vmatpush1.xpose.msra.mxu0 0.0
        %1592 = vmatprep.subr.mxu0 0.0
        %1593 = vmatpush1.xpose.msra.mxu0 0.0
        %1594 = vmatprep.subr.mxu0 0.0
        %1595 = vmatpush1.xpose.msra.mxu0 0.0
        %1596 = vmatprep.subr.mxu0 0.0
        %1597 = vmatpush1.xpose.msra.mxu0 0.0
        %1598 = vmatprep.subr.mxu0 0.0
        %1599 = vmatpush1.xpose.msra.mxu0 0.0
        %1600 = vmatprep.subr.mxu0 0.0
        %1601 = vmatpush1.xpose.msra.mxu0 0.0
        %1602 = vmatprep.subr.mxu0 0.0
        %1603 = vmatpush1.xpose.msra.mxu0 0.0
        %1604 = vmatprep.subr.mxu0 0.0
        %1605 = vmatpush1.xpose.msra.mxu0 0.0
        %1606 = vmatprep.subr.mxu0 0.0
        %1607 = vmatpush1.xpose.msra.mxu0 0.0
        %1608 = vmatprep.subr.mxu0 0.0
        %1609 = vmatpush1.xpose.msra.mxu0 0.0
        %1610 = vmatprep.subr.mxu0 0.0
        %1611 = vmatpush1.xpose.msra.mxu0 0.0
        %1612 = vmatprep.subr.mxu0 0.0
        %1613 = vmatpush1.xpose.msra.mxu0 0.0
        %1614 = vmatprep.subr.mxu0 0.0
        %1615 = vmatpush1.xpose.msra.mxu0 0.0
        %1616 = vmatprep.subr.mxu0 0.0
        %1617 = vmatpush1.xpose.msra.mxu0 0.0
        %1618 = vmatprep.subr.mxu0 0.0
        %1619 = vmatpush1.xpose.msra.mxu0 0.0
        %1620 = vmatprep.subr.mxu0 0.0
        %1621 = vmatpush1.xpose.msra.mxu0 0.0
        %1622 = vmatprep.subr.mxu0 0.0
        %1623 = vmatpush1.xpose.msra.mxu0 0.0
        %1624 = vmatprep.subr.mxu0 0.0
        %1625 = vmatpush1.xpose.msra.mxu0 0.0
        %1626 = vmatprep.subr.mxu0 0.0
        %1627 = vmatpush1.xpose.msra.mxu0 0.0
        %1628 = vmatprep.subr.mxu0 0.0
        %1629 = vmatpush1.xpose.msra.mxu0 0.0
        %1630 = vmatprep.subr.mxu0 0.0
        %1631 = vmatpush1.xpose.msra.mxu0 0.0
        %1632 = vmatprep.subr.mxu0 0.0
        %1633 = vmatpush1.xpose.msra.mxu0 0.0
        %1634 = vmatprep.mubr.f32.mxu0 0.0
        %1635 = vmatmul.mubr.f32.gmra.mrb[0].mxu0 %v1565
        %v1636 = vpop.f32.mrb[0].mxu0
        %v1637 = vadd.f32 0.0, %v1636
        %v1638 = vpop.f32.mrb[0].mxu0
        %1639 = vdwg.mxu0
        %v1640 = vsel %vm402, 1, 0
        %vm1641 = vcmp.eq.s32.totalorder %v1640, 1
        %v1642 = vsel %vm1641, %v1409, -1e+30
        %v1643 = vsel %vm1641, %v1485, -1e+30
        %v1644 = vsel %vm1641, %v1561, -1e+30
        %v1645 = vsel %vm1641, %v1637, -1e+30
        %v1646 = vsel %vm1335, %v1642, -inf
        %1647 = vmax.xlane.f32.xlu0 %v1646
        %v1648 = vpop.xlane.xlu0 %1647
        %v1649 = vsel %vm1335, %v1643, -inf
        %1650 = vmax.xlane.f32.xlu0 %v1649
        %v1651 = vpop.xlane.xlu0 %1650
        %v1652 = vsel %vm1335, %v1644, -inf
        %1653 = vmax.xlane.f32.xlu0 %v1652
        %v1654 = vpop.xlane.xlu0 %1653
        %v1655 = vsel %vm1335, %v1645, -inf
        %1656 = vmax.xlane.f32.xlu0 %v1655
        %v1657 = vpop.xlane.xlu0 %1656
        %v1658 = vsub.f32 %v1642, %v1648
        %v1659 = vsub.f32 %v1643, %v1651
        %v1660 = vsub.f32 %v1644, %v1654
        %v1661 = vsub.f32 %v1645, %v1657
        %v1662 = vmul.f32 %v1658, 1.442695
        %v1663 = vpow.pop %v1662
        %v1664 = vmul.f32 %v1659, 1.442695
        %v1665 = vpow.pop %v1664
        %v1666 = vmul.f32 %v1660, 1.442695
        %v1667 = vpow.pop %v1666
        %v1668 = vmul.f32 %v1661, 1.442695
        %v1669 = vpow.pop %v1668
        %v1670 = vsel %vm1335, %v1663, 0.0
        %1671 = vadd.xlane.f32.xlu0 %v1670
        %v1672 = vpop.xlane.xlu0 %1671
        %v1673 = vsel %vm1335, %v1665, 0.0
        %1674 = vadd.xlane.f32.xlu0 %v1673
        %v1675 = vpop.xlane.xlu0 %1674
        %v1676 = vsel %vm1335, %v1667, 0.0
        %1677 = vadd.xlane.f32.xlu0 %v1676
        %v1678 = vpop.xlane.xlu0 %1677
        %v1679 = vsel %vm1335, %v1669, 0.0
        %1680 = vadd.xlane.f32.xlu0 %v1679
        %v1681 = vpop.xlane.xlu0 %1680
        %v1682 = vrcp.pop %v1672
        %v1683 = vrcp.pop %v1675
        %v1684 = vrcp.pop %v1678
        %v1685 = vrcp.pop %v1681
        %v1686 = vmul.f32 %v1663, %v1682
        %v1687 = vmul.f32 %v1665, %v1683
        %v1688 = vmul.f32 %v1667, %v1684
        %v1689 = vmul.f32 %v1669, %v1685
        %v1691 = vsel %vm1335, %v1686, 0
        %1693 = vmatprep.subr.mxu0 0.0
        %1694 = vmatpush1.msra.mxu0 %v1122
        %1695 = vmatprep.subr.mxu0 0.0
        %1696 = vmatpush1.msra.mxu0 0.0
        %1697 = vmatprep.subr.mxu0 0.0
        %1698 = vmatpush1.msra.mxu0 0.0
        %1699 = vmatprep.subr.mxu0 0.0
        %1700 = vmatpush1.msra.mxu0 0.0
        %1701 = vmatprep.subr.mxu0 0.0
        %1702 = vmatpush1.msra.mxu0 0.0
        %1703 = vmatprep.subr.mxu0 0.0
        %1704 = vmatpush1.msra.mxu0 0.0
        %1705 = vmatprep.subr.mxu0 0.0
        %1706 = vmatpush1.msra.mxu0 0.0
        %1707 = vmatprep.subr.mxu0 0.0
        %1708 = vmatpush1.msra.mxu0 0.0
        %1709 = vmatprep.subr.mxu0 0.0
        %1710 = vmatpush1.msra.mxu0 0.0
        %1711 = vmatprep.subr.mxu0 0.0
        %1712 = vmatpush1.msra.mxu0 0.0
        %1713 = vmatprep.subr.mxu0 0.0
        %1714 = vmatpush1.msra.mxu0 0.0
        %1715 = vmatprep.subr.mxu0 0.0
        %1716 = vmatpush1.msra.mxu0 0.0
        %1717 = vmatprep.subr.mxu0 0.0
        %1718 = vmatpush1.msra.mxu0 0.0
        %1719 = vmatprep.subr.mxu0 0.0
        %1720 = vmatpush1.msra.mxu0 0.0
        %1721 = vmatprep.subr.mxu0 0.0
        %1722 = vmatpush1.msra.mxu0 0.0
        %1723 = vmatprep.subr.mxu0 0.0
        %1724 = vmatpush1.msra.mxu0 0.0
        %1725 = vmatprep.subr.mxu0 0.0
        %1726 = vmatpush1.msra.mxu0 0.0
        %1727 = vmatprep.subr.mxu0 0.0
        %1728 = vmatpush1.msra.mxu0 0.0
        %1729 = vmatprep.subr.mxu0 0.0
        %1730 = vmatpush1.msra.mxu0 0.0
        %1731 = vmatprep.subr.mxu0 0.0
        %1732 = vmatpush1.msra.mxu0 0.0
        %1733 = vmatprep.subr.mxu0 0.0
        %1734 = vmatpush1.msra.mxu0 0.0
        %1735 = vmatprep.subr.mxu0 0.0
        %1736 = vmatpush1.msra.mxu0 0.0
        %1737 = vmatprep.subr.mxu0 0.0
        %1738 = vmatpush1.msra.mxu0 0.0
        %1739 = vmatprep.subr.mxu0 0.0
        %1740 = vmatpush1.msra.mxu0 0.0
        %1741 = vmatprep.subr.mxu0 0.0
        %1742 = vmatpush1.msra.mxu0 0.0
        %1743 = vmatprep.subr.mxu0 0.0
        %1744 = vmatpush1.msra.mxu0 0.0
        %1745 = vmatprep.subr.mxu0 0.0
        %1746 = vmatpush1.msra.mxu0 0.0
        %1747 = vmatprep.subr.mxu0 0.0
        %1748 = vmatpush1.msra.mxu0 0.0
        %1749 = vmatprep.subr.mxu0 0.0
        %1750 = vmatpush1.msra.mxu0 0.0
        %1751 = vmatprep.subr.mxu0 0.0
        %1752 = vmatpush1.msra.mxu0 0.0
        %1753 = vmatprep.subr.mxu0 0.0
        %1754 = vmatpush1.msra.mxu0 0.0
        %1755 = vmatprep.subr.mxu0 0.0
        %1756 = vmatpush1.msra.mxu0 0.0
        %1757 = vmatprep.mubr.f32.mxu0 0.0
        %1758 = vmatmul.mubr.f32.gmra.mrb[0].mxu0 %v1691
        %v1759 = vpop.f32.mrb[0].mxu0
        %v1760 = vadd.f32 0.0, %v1759
        %v1761 = vpop.f32.mrb[0].mxu0
        %1762 = vdwg.mxu0
        %v1764 = vsel %vm1335, %v1687, 0
        %1766 = vmatprep.subr.mxu0 0.0
        %1767 = vmatpush1.msra.mxu0 %v1192
        %1768 = vmatprep.subr.mxu0 0.0
        %1769 = vmatpush1.msra.mxu0 0.0
        %1770 = vmatprep.subr.mxu0 0.0
        %1771 = vmatpush1.msra.mxu0 0.0
        %1772 = vmatprep.subr.mxu0 0.0
        %1773 = vmatpush1.msra.mxu0 0.0
        %1774 = vmatprep.subr.mxu0 0.0
        %1775 = vmatpush1.msra.mxu0 0.0
        %1776 = vmatprep.subr.mxu0 0.0
        %1777 = vmatpush1.msra.mxu0 0.0
        %1778 = vmatprep.subr.mxu0 0.0
        %1779 = vmatpush1.msra.mxu0 0.0
        %1780 = vmatprep.subr.mxu0 0.0
        %1781 = vmatpush1.msra.mxu0 0.0
        %1782 = vmatprep.subr.mxu0 0.0
        %1783 = vmatpush1.msra.mxu0 0.0
        %1784 = vmatprep.subr.mxu0 0.0
        %1785 = vmatpush1.msra.mxu0 0.0
        %1786 = vmatprep.subr.mxu0 0.0
        %1787 = vmatpush1.msra.mxu0 0.0
        %1788 = vmatprep.subr.mxu0 0.0
        %1789 = vmatpush1.msra.mxu0 0.0
        %1790 = vmatprep.subr.mxu0 0.0
        %1791 = vmatpush1.msra.mxu0 0.0
        %1792 = vmatprep.subr.mxu0 0.0
        %1793 = vmatpush1.msra.mxu0 0.0
        %1794 = vmatprep.subr.mxu0 0.0
        %1795 = vmatpush1.msra.mxu0 0.0
        %1796 = vmatprep.subr.mxu0 0.0
        %1797 = vmatpush1.msra.mxu0 0.0
        %1798 = vmatprep.subr.mxu0 0.0
        %1799 = vmatpush1.msra.mxu0 0.0
        %1800 = vmatprep.subr.mxu0 0.0
        %1801 = vmatpush1.msra.mxu0 0.0
        %1802 = vmatprep.subr.mxu0 0.0
        %1803 = vmatpush1.msra.mxu0 0.0
        %1804 = vmatprep.subr.mxu0 0.0
        %1805 = vmatpush1.msra.mxu0 0.0
        %1806 = vmatprep.subr.mxu0 0.0
        %1807 = vmatpush1.msra.mxu0 0.0
        %1808 = vmatprep.subr.mxu0 0.0
        %1809 = vmatpush1.msra.mxu0 0.0
        %1810 = vmatprep.subr.mxu0 0.0
        %1811 = vmatpush1.msra.mxu0 0.0
        %1812 = vmatprep.subr.mxu0 0.0
        %1813 = vmatpush1.msra.mxu0 0.0
        %1814 = vmatprep.subr.mxu0 0.0
        %1815 = vmatpush1.msra.mxu0 0.0
        %1816 = vmatprep.subr.mxu0 0.0
        %1817 = vmatpush1.msra.mxu0 0.0
        %1818 = vmatprep.subr.mxu0 0.0
        %1819 = vmatpush1.msra.mxu0 0.0
        %1820 = vmatprep.subr.mxu0 0.0
        %1821 = vmatpush1.msra.mxu0 0.0
        %1822 = vmatprep.subr.mxu0 0.0
        %1823 = vmatpush1.msra.mxu0 0.0
        %1824 = vmatprep.subr.mxu0 0.0
        %1825 = vmatpush1.msra.mxu0 0.0
        %1826 = vmatprep.subr.mxu0 0.0
        %1827 = vmatpush1.msra.mxu0 0.0
        %1828 = vmatprep.subr.mxu0 0.0
        %1829 = vmatpush1.msra.mxu0 0.0
        %1830 = vmatprep.mubr.f32.mxu0 0.0
        %1831 = vmatmul.mubr.f32.gmra.mrb[0].mxu0 %v1764
        %v1832 = vpop.f32.mrb[0].mxu0
        %v1833 = vadd.f32 0.0, %v1832
        %v1834 = vpop.f32.mrb[0].mxu0
        %1835 = vdwg.mxu0
        %v1837 = vsel %vm1335, %v1688, 0
        %1839 = vmatprep.subr.mxu0 0.0
        %1840 = vmatpush1.msra.mxu0 %v1262
        %1841 = vmatprep.subr.mxu0 0.0
        %1842 = vmatpush1.msra.mxu0 0.0
        %1843 = vmatprep.subr.mxu0 0.0
        %1844 = vmatpush1.msra.mxu0 0.0
        %1845 = vmatprep.subr.mxu0 0.0
        %1846 = vmatpush1.msra.mxu0 0.0
        %1847 = vmatprep.subr.mxu0 0.0
        %1848 = vmatpush1.msra.mxu0 0.0
        %1849 = vmatprep.subr.mxu0 0.0
        %1850 = vmatpush1.msra.mxu0 0.0
        %1851 = vmatprep.subr.mxu0 0.0
        %1852 = vmatpush1.msra.mxu0 0.0
        %1853 = vmatprep.subr.mxu0 0.0
        %1854 = vmatpush1.msra.mxu0 0.0
        %1855 = vmatprep.subr.mxu0 0.0
        %1856 = vmatpush1.msra.mxu0 0.0
        %1857 = vmatprep.subr.mxu0 0.0
        %1858 = vmatpush1.msra.mxu0 0.0
        %1859 = vmatprep.subr.mxu0 0.0
        %1860 = vmatpush1.msra.mxu0 0.0
        %1861 = vmatprep.subr.mxu0 0.0
        %1862 = vmatpush1.msra.mxu0 0.0
        %1863 = vmatprep.subr.mxu0 0.0
        %1864 = vmatpush1.msra.mxu0 0.0
        %1865 = vmatprep.subr.mxu0 0.0
        %1866 = vmatpush1.msra.mxu0 0.0
        %1867 = vmatprep.subr.mxu0 0.0
        %1868 = vmatpush1.msra.mxu0 0.0
        %1869 = vmatprep.subr.mxu0 0.0
        %1870 = vmatpush1.msra.mxu0 0.0
        %1871 = vmatprep.subr.mxu0 0.0
        %1872 = vmatpush1.msra.mxu0 0.0
        %1873 = vmatprep.subr.mxu0 0.0
        %1874 = vmatpush1.msra.mxu0 0.0
        %1875 = vmatprep.subr.mxu0 0.0
        %1876 = vmatpush1.msra.mxu0 0.0
        %1877 = vmatprep.subr.mxu0 0.0
        %1878 = vmatpush1.msra.mxu0 0.0
        %1879 = vmatprep.subr.mxu0 0.0
        %1880 = vmatpush1.msra.mxu0 0.0
        %1881 = vmatprep.subr.mxu0 0.0
        %1882 = vmatpush1.msra.mxu0 0.0
        %1883 = vmatprep.subr.mxu0 0.0
        %1884 = vmatpush1.msra.mxu0 0.0
        %1885 = vmatprep.subr.mxu0 0.0
        %1886 = vmatpush1.msra.mxu0 0.0
        %1887 = vmatprep.subr.mxu0 0.0
        %1888 = vmatpush1.msra.mxu0 0.0
        %1889 = vmatprep.subr.mxu0 0.0
        %1890 = vmatpush1.msra.mxu0 0.0
        %1891 = vmatprep.subr.mxu0 0.0
        %1892 = vmatpush1.msra.mxu0 0.0
        %1893 = vmatprep.subr.mxu0 0.0
        %1894 = vmatpush1.msra.mxu0 0.0
        %1895 = vmatprep.subr.mxu0 0.0
        %1896 = vmatpush1.msra.mxu0 0.0
        %1897 = vmatprep.subr.mxu0 0.0
        %1898 = vmatpush1.msra.mxu0 0.0
        %1899 = vmatprep.subr.mxu0 0.0
        %1900 = vmatpush1.msra.mxu0 0.0
        %1901 = vmatprep.subr.mxu0 0.0
        %1902 = vmatpush1.msra.mxu0 0.0
        %1903 = vmatprep.mubr.f32.mxu0 0.0
        %1904 = vmatmul.mubr.f32.gmra.mrb[0].mxu0 %v1837
        %v1905 = vpop.f32.mrb[0].mxu0
        %v1906 = vadd.f32 0.0, %v1905
        %v1907 = vpop.f32.mrb[0].mxu0
        %1908 = vdwg.mxu0
        %v1910 = vsel %vm1335, %v1689, 0
        %1912 = vmatprep.subr.mxu0 0.0
        %1913 = vmatpush1.msra.mxu0 %v1332
        %1914 = vmatprep.subr.mxu0 0.0
        %1915 = vmatpush1.msra.mxu0 0.0
        %1916 = vmatprep.subr.mxu0 0.0
        %1917 = vmatpush1.msra.mxu0 0.0
        %1918 = vmatprep.subr.mxu0 0.0
        %1919 = vmatpush1.msra.mxu0 0.0
        %1920 = vmatprep.subr.mxu0 0.0
        %1921 = vmatpush1.msra.mxu0 0.0
        %1922 = vmatprep.subr.mxu0 0.0
        %1923 = vmatpush1.msra.mxu0 0.0
        %1924 = vmatprep.subr.mxu0 0.0
        %1925 = vmatpush1.msra.mxu0 0.0
        %1926 = vmatprep.subr.mxu0 0.0
        %1927 = vmatpush1.msra.mxu0 0.0
        %1928 = vmatprep.subr.mxu0 0.0
        %1929 = vmatpush1.msra.mxu0 0.0
        %1930 = vmatprep.subr.mxu0 0.0
        %1931 = vmatpush1.msra.mxu0 0.0
        %1932 = vmatprep.subr.mxu0 0.0
        %1933 = vmatpush1.msra.mxu0 0.0
        %1934 = vmatprep.subr.mxu0 0.0
        %1935 = vmatpush1.msra.mxu0 0.0
        %1936 = vmatprep.subr.mxu0 0.0
        %1937 = vmatpush1.msra.mxu0 0.0
        %1938 = vmatprep.subr.mxu0 0.0
        %1939 = vmatpush1.msra.mxu0 0.0
        %1940 = vmatprep.subr.mxu0 0.0
        %1941 = vmatpush1.msra.mxu0 0.0
        %1942 = vmatprep.subr.mxu0 0.0
        %1943 = vmatpush1.msra.mxu0 0.0
        %1944 = vmatprep.subr.mxu0 0.0
        %1945 = vmatpush1.msra.mxu0 0.0
        %1946 = vmatprep.subr.mxu0 0.0
        %1947 = vmatpush1.msra.mxu0 0.0
        %1948 = vmatprep.subr.mxu0 0.0
        %1949 = vmatpush1.msra.mxu0 0.0
        %1950 = vmatprep.subr.mxu0 0.0
        %1951 = vmatpush1.msra.mxu0 0.0
        %1952 = vmatprep.subr.mxu0 0.0
        %1953 = vmatpush1.msra.mxu0 0.0
        %1954 = vmatprep.subr.mxu0 0.0
        %1955 = vmatpush1.msra.mxu0 0.0
        %1956 = vmatprep.subr.mxu0 0.0
        %1957 = vmatpush1.msra.mxu0 0.0
        %1958 = vmatprep.subr.mxu0 0.0
        %1959 = vmatpush1.msra.mxu0 0.0
        %1960 = vmatprep.subr.mxu0 0.0
        %1961 = vmatpush1.msra.mxu0 0.0
        %1962 = vmatprep.subr.mxu0 0.0
        %1963 = vmatpush1.msra.mxu0 0.0
        %1964 = vmatprep.subr.mxu0 0.0
        %1965 = vmatpush1.msra.mxu0 0.0
        %1966 = vmatprep.subr.mxu0 0.0
        %1967 = vmatpush1.msra.mxu0 0.0
        %1968 = vmatprep.subr.mxu0 0.0
        %1969 = vmatpush1.msra.mxu0 0.0
        %1970 = vmatprep.subr.mxu0 0.0
        %1971 = vmatpush1.msra.mxu0 0.0
        %1972 = vmatprep.subr.mxu0 0.0
        %1973 = vmatpush1.msra.mxu0 0.0
        %1974 = vmatprep.subr.mxu0 0.0
        %1975 = vmatpush1.msra.mxu0 0.0
        %1976 = vmatprep.mubr.f32.mxu0 0.0
        %1977 = vmatmul.mubr.f32.gmra.mrb[0].mxu0 %v1910
        %v1978 = vpop.f32.mrb[0].mxu0
        %v1979 = vadd.f32 0.0, %v1978
        %v1980 = vpop.f32.mrb[0].mxu0
        %1981 = vdwg.mxu0
        %v1983 = vsel %vm1335, %v1760, 0
        %v1986 = vsel %vm1335, %v476, 0
        %v1989 = vsel %vm1335, %v477, 0
        %v1992 = vsel %vm1335, %v478, 0
        %v1995 = vsel %vm1335, %v479, 0
        %1997 = vmatprep.subr.mxu0 0.0
        %1998 = vmatpush1.xpose.msra.mxu0 %v1986
        %1999 = vmatprep.subr.mxu0 0.0
        %2000 = vmatpush1.xpose.msra.mxu0 %v1989
        %2001 = vmatprep.subr.mxu0 0.0
        %2002 = vmatpush1.xpose.msra.mxu0 %v1992
        %2003 = vmatprep.subr.mxu0 0.0
        %2004 = vmatpush1.xpose.msra.mxu0 %v1995
        %2005 = vmatprep.subr.mxu0 0.0
        %2006 = vmatpush1.xpose.msra.mxu0 0.0
        %2007 = vmatprep.subr.mxu0 0.0
        %2008 = vmatpush1.xpose.msra.mxu0 0.0
        %2009 = vmatprep.subr.mxu0 0.0
        %2010 = vmatpush1.xpose.msra.mxu0 0.0
        %2011 = vmatprep.subr.mxu0 0.0
        %2012 = vmatpush1.xpose.msra.mxu0 0.0
        %2013 = vmatprep.subr.mxu0 0.0
        %2014 = vmatpush1.xpose.msra.mxu0 0.0
        %2015 = vmatprep.subr.mxu0 0.0
        %2016 = vmatpush1.xpose.msra.mxu0 0.0
        %2017 = vmatprep.subr.mxu0 0.0
        %2018 = vmatpush1.xpose.msra.mxu0 0.0
        %2019 = vmatprep.subr.mxu0 0.0
        %2020 = vmatpush1.xpose.msra.mxu0 0.0
        %2021 = vmatprep.subr.mxu0 0.0
        %2022 = vmatpush1.xpose.msra.mxu0 0.0
        %2023 = vmatprep.subr.mxu0 0.0
        %2024 = vmatpush1.xpose.msra.mxu0 0.0
        %2025 = vmatprep.subr.mxu0 0.0
        %2026 = vmatpush1.xpose.msra.mxu0 0.0
        %2027 = vmatprep.subr.mxu0 0.0
        %2028 = vmatpush1.xpose.msra.mxu0 0.0
        %2029 = vmatprep.subr.mxu0 0.0
        %2030 = vmatpush1.xpose.msra.mxu0 0.0
        %2031 = vmatprep.subr.mxu0 0.0
        %2032 = vmatpush1.xpose.msra.mxu0 0.0
        %2033 = vmatprep.subr.mxu0 0.0
        %2034 = vmatpush1.xpose.msra.mxu0 0.0
        %2035 = vmatprep.subr.mxu0 0.0
        %2036 = vmatpush1.xpose.msra.mxu0 0.0
        %2037 = vmatprep.subr.mxu0 0.0
        %2038 = vmatpush1.xpose.msra.mxu0 0.0
        %2039 = vmatprep.subr.mxu0 0.0
        %2040 = vmatpush1.xpose.msra.mxu0 0.0
        %2041 = vmatprep.subr.mxu0 0.0
        %2042 = vmatpush1.xpose.msra.mxu0 0.0
        %2043 = vmatprep.subr.mxu0 0.0
        %2044 = vmatpush1.xpose.msra.mxu0 0.0
        %2045 = vmatprep.subr.mxu0 0.0
        %2046 = vmatpush1.xpose.msra.mxu0 0.0
        %2047 = vmatprep.subr.mxu0 0.0
        %2048 = vmatpush1.xpose.msra.mxu0 0.0
        %2049 = vmatprep.subr.mxu0 0.0
        %2050 = vmatpush1.xpose.msra.mxu0 0.0
        %2051 = vmatprep.subr.mxu0 0.0
        %2052 = vmatpush1.xpose.msra.mxu0 0.0
        %2053 = vmatprep.subr.mxu0 0.0
        %2054 = vmatpush1.xpose.msra.mxu0 0.0
        %2055 = vmatprep.subr.mxu0 0.0
        %2056 = vmatpush1.xpose.msra.mxu0 0.0
        %2057 = vmatprep.subr.mxu0 0.0
        %2058 = vmatpush1.xpose.msra.mxu0 0.0
        %2059 = vmatprep.subr.mxu0 0.0
        %2060 = vmatpush1.xpose.msra.mxu0 0.0
        %2061 = vmatprep.mubr.f32.mxu0 0.0
        %2062 = vmatmul.mubr.f32.gmra.mrb[0].mxu0 %v1983
        %v2063 = vpop.f32.mrb[0].mxu0
        %v2064 = vadd.f32 0.0, %v2063
        %v2065 = vpop.f32.mrb[0].mxu0
        %2066 = vdwg.mxu0
        %v2068 = vsel %vm1335, %v1833, 0
        %v2071 = vsel %vm1335, %v480, 0
        %v2074 = vsel %vm1335, %v481, 0
        %v2077 = vsel %vm1335, %v482, 0
        %v2080 = vsel %vm1335, %v483, 0
        %2082 = vmatprep.subr.mxu0 0.0
        %2083 = vmatpush1.xpose.msra.mxu0 %v2071
        %2084 = vmatprep.subr.mxu0 0.0
        %2085 = vmatpush1.xpose.msra.mxu0 %v2074
        %2086 = vmatprep.subr.mxu0 0.0
        %2087 = vmatpush1.xpose.msra.mxu0 %v2077
        %2088 = vmatprep.subr.mxu0 0.0
        %2089 = vmatpush1.xpose.msra.mxu0 %v2080
        %2090 = vmatprep.subr.mxu0 0.0
        %2091 = vmatpush1.xpose.msra.mxu0 0.0
        %2092 = vmatprep.subr.mxu0 0.0
        %2093 = vmatpush1.xpose.msra.mxu0 0.0
        %2094 = vmatprep.subr.mxu0 0.0
        %2095 = vmatpush1.xpose.msra.mxu0 0.0
        %2096 = vmatprep.subr.mxu0 0.0
        %2097 = vmatpush1.xpose.msra.mxu0 0.0
        %2098 = vmatprep.subr.mxu0 0.0
        %2099 = vmatpush1.xpose.msra.mxu0 0.0
        %2100 = vmatprep.subr.mxu0 0.0
        %2101 = vmatpush1.xpose.msra.mxu0 0.0
        %2102 = vmatprep.subr.mxu0 0.0
        %2103 = vmatpush1.xpose.msra.mxu0 0.0
        %2104 = vmatprep.subr.mxu0 0.0
        %2105 = vmatpush1.xpose.msra.mxu0 0.0
        %2106 = vmatprep.subr.mxu0 0.0
        %2107 = vmatpush1.xpose.msra.mxu0 0.0
        %2108 = vmatprep.subr.mxu0 0.0
        %2109 = vmatpush1.xpose.msra.mxu0 0.0
        %2110 = vmatprep.subr.mxu0 0.0
        %2111 = vmatpush1.xpose.msra.mxu0 0.0
        %2112 = vmatprep.subr.mxu0 0.0
        %2113 = vmatpush1.xpose.msra.mxu0 0.0
        %2114 = vmatprep.subr.mxu0 0.0
        %2115 = vmatpush1.xpose.msra.mxu0 0.0
        %2116 = vmatprep.subr.mxu0 0.0
        %2117 = vmatpush1.xpose.msra.mxu0 0.0
        %2118 = vmatprep.subr.mxu0 0.0
        %2119 = vmatpush1.xpose.msra.mxu0 0.0
        %2120 = vmatprep.subr.mxu0 0.0
        %2121 = vmatpush1.xpose.msra.mxu0 0.0
        %2122 = vmatprep.subr.mxu0 0.0
        %2123 = vmatpush1.xpose.msra.mxu0 0.0
        %2124 = vmatprep.subr.mxu0 0.0
        %2125 = vmatpush1.xpose.msra.mxu0 0.0
        %2126 = vmatprep.subr.mxu0 0.0
        %2127 = vmatpush1.xpose.msra.mxu0 0.0
        %2128 = vmatprep.subr.mxu0 0.0
        %2129 = vmatpush1.xpose.msra.mxu0 0.0
        %2130 = vmatprep.subr.mxu0 0.0
        %2131 = vmatpush1.xpose.msra.mxu0 0.0
        %2132 = vmatprep.subr.mxu0 0.0
        %2133 = vmatpush1.xpose.msra.mxu0 0.0
        %2134 = vmatprep.subr.mxu0 0.0
        %2135 = vmatpush1.xpose.msra.mxu0 0.0
        %2136 = vmatprep.subr.mxu0 0.0
        %2137 = vmatpush1.xpose.msra.mxu0 0.0
        %2138 = vmatprep.subr.mxu0 0.0
        %2139 = vmatpush1.xpose.msra.mxu0 0.0
        %2140 = vmatprep.subr.mxu0 0.0
        %2141 = vmatpush1.xpose.msra.mxu0 0.0
        %2142 = vmatprep.subr.mxu0 0.0
        %2143 = vmatpush1.xpose.msra.mxu0 0.0
        %2144 = vmatprep.subr.mxu0 0.0
        %2145 = vmatpush1.xpose.msra.mxu0 0.0
        %2146 = vmatprep.mubr.f32.mxu0 0.0
        %2147 = vmatmul.mubr.f32.gmra.mrb[0].mxu0 %v2068
        %v2148 = vpop.f32.mrb[0].mxu0
        %v2149 = vadd.f32 0.0, %v2148
        %v2150 = vpop.f32.mrb[0].mxu0
        %2151 = vdwg.mxu0
        %v2153 = vsel %vm1335, %v1906, 0
        %v2156 = vsel %vm1335, %v484, 0
        %v2159 = vsel %vm1335, %v485, 0
        %v2162 = vsel %vm1335, %v486, 0
        %v2165 = vsel %vm1335, %v487, 0
        %2167 = vmatprep.subr.mxu0 0.0
        %2168 = vmatpush1.xpose.msra.mxu0 %v2156
        %2169 = vmatprep.subr.mxu0 0.0
        %2170 = vmatpush1.xpose.msra.mxu0 %v2159
        %2171 = vmatprep.subr.mxu0 0.0
        %2172 = vmatpush1.xpose.msra.mxu0 %v2162
        %2173 = vmatprep.subr.mxu0 0.0
        %2174 = vmatpush1.xpose.msra.mxu0 %v2165
        %2175 = vmatprep.subr.mxu0 0.0
        %2176 = vmatpush1.xpose.msra.mxu0 0.0
        %2177 = vmatprep.subr.mxu0 0.0
        %2178 = vmatpush1.xpose.msra.mxu0 0.0
        %2179 = vmatprep.subr.mxu0 0.0
        %2180 = vmatpush1.xpose.msra.mxu0 0.0
        %2181 = vmatprep.subr.mxu0 0.0
        %2182 = vmatpush1.xpose.msra.mxu0 0.0
        %2183 = vmatprep.subr.mxu0 0.0
        %2184 = vmatpush1.xpose.msra.mxu0 0.0
        %2185 = vmatprep.subr.mxu0 0.0
        %2186 = vmatpush1.xpose.msra.mxu0 0.0
        %2187 = vmatprep.subr.mxu0 0.0
        %2188 = vmatpush1.xpose.msra.mxu0 0.0
        %2189 = vmatprep.subr.mxu0 0.0
        %2190 = vmatpush1.xpose.msra.mxu0 0.0
        %2191 = vmatprep.subr.mxu0 0.0
        %2192 = vmatpush1.xpose.msra.mxu0 0.0
        %2193 = vmatprep.subr.mxu0 0.0
        %2194 = vmatpush1.xpose.msra.mxu0 0.0
        %2195 = vmatprep.subr.mxu0 0.0
        %2196 = vmatpush1.xpose.msra.mxu0 0.0
        %2197 = vmatprep.subr.mxu0 0.0
        %2198 = vmatpush1.xpose.msra.mxu0 0.0
        %2199 = vmatprep.subr.mxu0 0.0
        %2200 = vmatpush1.xpose.msra.mxu0 0.0
        %2201 = vmatprep.subr.mxu0 0.0
        %2202 = vmatpush1.xpose.msra.mxu0 0.0
        %2203 = vmatprep.subr.mxu0 0.0
        %2204 = vmatpush1.xpose.msra.mxu0 0.0
        %2205 = vmatprep.subr.mxu0 0.0
        %2206 = vmatpush1.xpose.msra.mxu0 0.0
        %2207 = vmatprep.subr.mxu0 0.0
        %2208 = vmatpush1.xpose.msra.mxu0 0.0
        %2209 = vmatprep.subr.mxu0 0.0
        %2210 = vmatpush1.xpose.msra.mxu0 0.0
        %2211 = vmatprep.subr.mxu0 0.0
        %2212 = vmatpush1.xpose.msra.mxu0 0.0
        %2213 = vmatprep.subr.mxu0 0.0
        %2214 = vmatpush1.xpose.msra.mxu0 0.0
        %2215 = vmatprep.subr.mxu0 0.0
        %2216 = vmatpush1.xpose.msra.mxu0 0.0
        %2217 = vmatprep.subr.mxu0 0.0
        %2218 = vmatpush1.xpose.msra.mxu0 0.0
        %2219 = vmatprep.subr.mxu0 0.0
        %2220 = vmatpush1.xpose.msra.mxu0 0.0
        %2221 = vmatprep.subr.mxu0 0.0
        %2222 = vmatpush1.xpose.msra.mxu0 0.0
        %2223 = vmatprep.subr.mxu0 0.0
        %2224 = vmatpush1.xpose.msra.mxu0 0.0
        %2225 = vmatprep.subr.mxu0 0.0
        %2226 = vmatpush1.xpose.msra.mxu0 0.0
        %2227 = vmatprep.subr.mxu0 0.0
        %2228 = vmatpush1.xpose.msra.mxu0 0.0
        %2229 = vmatprep.subr.mxu0 0.0
        %2230 = vmatpush1.xpose.msra.mxu0 0.0
        %2231 = vmatprep.mubr.f32.mxu0 0.0
        %2232 = vmatmul.mubr.f32.gmra.mrb[0].mxu0 %v2153
        %v2233 = vpop.f32.mrb[0].mxu0
        %v2234 = vadd.f32 0.0, %v2233
        %v2235 = vpop.f32.mrb[0].mxu0
        %2236 = vdwg.mxu0
        %v2238 = vsel %vm1335, %v1979, 0
        %v2241 = vsel %vm1335, %v488, 0
        %v2244 = vsel %vm1335, %v489, 0
        %v2247 = vsel %vm1335, %v490, 0
        %v2250 = vsel %vm1335, %v491, 0
        %2252 = vmatprep.subr.mxu0 0.0
        %2253 = vmatpush1.xpose.msra.mxu0 %v2241
        %2254 = vmatprep.subr.mxu0 0.0
        %2255 = vmatpush1.xpose.msra.mxu0 %v2244
        %2256 = vmatprep.subr.mxu0 0.0
        %2257 = vmatpush1.xpose.msra.mxu0 %v2247
        %2258 = vmatprep.subr.mxu0 0.0
        %2259 = vmatpush1.xpose.msra.mxu0 %v2250
        %2260 = vmatprep.subr.mxu0 0.0
        %2261 = vmatpush1.xpose.msra.mxu0 0.0
        %2262 = vmatprep.subr.mxu0 0.0
        %2263 = vmatpush1.xpose.msra.mxu0 0.0
        %2264 = vmatprep.subr.mxu0 0.0
        %2265 = vmatpush1.xpose.msra.mxu0 0.0
        %2266 = vmatprep.subr.mxu0 0.0
        %2267 = vmatpush1.xpose.msra.mxu0 0.0
        %2268 = vmatprep.subr.mxu0 0.0
        %2269 = vmatpush1.xpose.msra.mxu0 0.0
        %2270 = vmatprep.subr.mxu0 0.0
        %2271 = vmatpush1.xpose.msra.mxu0 0.0
        %2272 = vmatprep.subr.mxu0 0.0
        %2273 = vmatpush1.xpose.msra.mxu0 0.0
        %2274 = vmatprep.subr.mxu0 0.0
        %2275 = vmatpush1.xpose.msra.mxu0 0.0
        %2276 = vmatprep.subr.mxu0 0.0
        %2277 = vmatpush1.xpose.msra.mxu0 0.0
        %2278 = vmatprep.subr.mxu0 0.0
        %2279 = vmatpush1.xpose.msra.mxu0 0.0
        %2280 = vmatprep.subr.mxu0 0.0
        %2281 = vmatpush1.xpose.msra.mxu0 0.0
        %2282 = vmatprep.subr.mxu0 0.0
        %2283 = vmatpush1.xpose.msra.mxu0 0.0
        %2284 = vmatprep.subr.mxu0 0.0
        %2285 = vmatpush1.xpose.msra.mxu0 0.0
        %2286 = vmatprep.subr.mxu0 0.0
        %2287 = vmatpush1.xpose.msra.mxu0 0.0
        %2288 = vmatprep.subr.mxu0 0.0
        %2289 = vmatpush1.xpose.msra.mxu0 0.0
        %2290 = vmatprep.subr.mxu0 0.0
        %2291 = vmatpush1.xpose.msra.mxu0 0.0
        %2292 = vmatprep.subr.mxu0 0.0
        %2293 = vmatpush1.xpose.msra.mxu0 0.0
        %2294 = vmatprep.subr.mxu0 0.0
        %2295 = vmatpush1.xpose.msra.mxu0 0.0
        %2296 = vmatprep.subr.mxu0 0.0
        %2297 = vmatpush1.xpose.msra.mxu0 0.0
        %2298 = vmatprep.subr.mxu0 0.0
        %2299 = vmatpush1.xpose.msra.mxu0 0.0
        %2300 = vmatprep.subr.mxu0 0.0
        %2301 = vmatpush1.xpose.msra.mxu0 0.0
        %2302 = vmatprep.subr.mxu0 0.0
        %2303 = vmatpush1.xpose.msra.mxu0 0.0
        %2304 = vmatprep.subr.mxu0 0.0
        %2305 = vmatpush1.xpose.msra.mxu0 0.0
        %2306 = vmatprep.subr.mxu0 0.0
        %2307 = vmatpush1.xpose.msra.mxu0 0.0
        %2308 = vmatprep.subr.mxu0 0.0
        %2309 = vmatpush1.xpose.msra.mxu0 0.0
        %2310 = vmatprep.subr.mxu0 0.0
        %2311 = vmatpush1.xpose.msra.mxu0 0.0
        %2312 = vmatprep.subr.mxu0 0.0
        %2313 = vmatpush1.xpose.msra.mxu0 0.0
        %2314 = vmatprep.subr.mxu0 0.0
        %2315 = vmatpush1.xpose.msra.mxu0 0.0
        %2316 = vmatprep.mubr.f32.mxu0 0.0
        %2317 = vmatmul.mubr.f32.gmra.mrb[0].mxu0 %v2238
        %v2318 = vpop.f32.mrb[0].mxu0
        %v2319 = vadd.f32 0.0, %v2318
        %v2320 = vpop.f32.mrb[0].mxu0
        %2321 = vdwg.mxu0
        %v2322 = vsel %vm403, %v2064, 0.0
        %v2323 = vsel %vm403, %v2149, 0.0
        %v2324 = vadd.f32 %v2322, %v2323
        %v2325 = vsel %vm403, %v2234, 0.0
        %v2326 = vadd.f32 %v2324, %v2325
        %v2327 = vsel %vm403, %v2319, 0.0
        %v2328 = vadd.f32 %v2326, %v2327
        %v2329 = vadd.f32 %v397, %v2328
        %v2330 = vlaneseq
        %v2331 = vshrl.u32 %v2330, 7
        %v2332 = vsub.s32 4, %v2331
        %v2333 = vrot.slane %v298, %v2332
        %v2334 = vadd.f32 %v2329, %v2333
        %v2335 = vsel %vm403, %v2334, 0.0
        %2336 = vadd.xlane.f32.xlu0 %v2335
        %v2337 = vpop.xlane.xlu0 %2336
        %v2338 = vmul.f32 %v2337, %v407
        %v2339 = vsub.f32 %v2334, %v2338
        %v2340 = vmul.f32 %v2339, %v2339
        %v2341 = vsel %vm403, %v2340, 0.0
        %2342 = vadd.xlane.f32.xlu0 %v2341
        %v2343 = vpop.xlane.xlu0 %2342
        %v2344 = vmul.f32 %v2343, %v407
        %v2345 = vadd.f32 %v2344, 1e-05
        %v2346 = vrsqrt.pop %v2345
        %v2347 = vmul.f32 %v2339, %v2346
        %v2348 = vlaneseq
        %v2349 = vshrl.u32 %v2348, 7
        %v2350 = vsub.s32 2, %v2349
        %v2351 = vrot.slane %v298, %v2350
        %v2352 = vmul.f32 %v2347, %v2351
        %v2353 = vlaneseq
        %v2354 = vshrl.u32 %v2353, 7
        %v2355 = vsub.s32 3, %v2354
        %v2356 = vrot.slane %v298, %v2355
        %v2357 = vadd.f32 %v2352, %v2356
        %v2358 = vld [vmem:[%s3] sm:$0xff]
        %v2359 = vld [vmem:[%s3 + $0x8] sm:$0xff]
        %v2360 = vld [vmem:[%s3 + $0x10] sm:$0xff]
        %v2361 = vld [vmem:[%s3 + $0x18] sm:$0xff]
        %v2362 = vlaneseq
        %v2363 = vshrl.u32 %v2362, 7
        %v2364 = vsub.s32 0, %v2363
        %v2365 = vrot.slane %v300, %v2364
        %v2367 = vsel %vm403, %v2357, 0
        %2369 = vmatprep.subr.mxu0 0.0
        %2370 = vmatpush1.msra.mxu0 %v2358
        %2371 = vmatprep.subr.mxu0 0.0
        %2372 = vmatpush1.msra.mxu0 %v2359
        %2373 = vmatprep.subr.mxu0 0.0
        %2374 = vmatpush1.msra.mxu0 %v2360
        %2375 = vmatprep.subr.mxu0 0.0
        %2376 = vmatpush1.msra.mxu0 %v2361
        %2377 = vmatprep.subr.mxu0 0.0
        %2378 = vmatpush1.msra.mxu0 0.0
        %2379 = vmatprep.subr.mxu0 0.0
        %2380 = vmatpush1.msra.mxu0 0.0
        %2381 = vmatprep.subr.mxu0 0.0
        %2382 = vmatpush1.msra.mxu0 0.0
        %2383 = vmatprep.subr.mxu0 0.0
        %2384 = vmatpush1.msra.mxu0 0.0
        %2385 = vmatprep.subr.mxu0 0.0
        %2386 = vmatpush1.msra.mxu0 0.0
        %2387 = vmatprep.subr.mxu0 0.0
        %2388 = vmatpush1.msra.mxu0 0.0
        %2389 = vmatprep.subr.mxu0 0.0
        %2390 = vmatpush1.msra.mxu0 0.0
        %2391 = vmatprep.subr.mxu0 0.0
        %2392 = vmatpush1.msra.mxu0 0.0
        %2393 = vmatprep.subr.mxu0 0.0
        %2394 = vmatpush1.msra.mxu0 0.0
        %2395 = vmatprep.subr.mxu0 0.0
        %2396 = vmatpush1.msra.mxu0 0.0
        %2397 = vmatprep.subr.mxu0 0.0
        %2398 = vmatpush1.msra.mxu0 0.0
        %2399 = vmatprep.subr.mxu0 0.0
        %2400 = vmatpush1.msra.mxu0 0.0
        %2401 = vmatprep.subr.mxu0 0.0
        %2402 = vmatpush1.msra.mxu0 0.0
        %2403 = vmatprep.subr.mxu0 0.0
        %2404 = vmatpush1.msra.mxu0 0.0
        %2405 = vmatprep.subr.mxu0 0.0
        %2406 = vmatpush1.msra.mxu0 0.0
        %2407 = vmatprep.subr.mxu0 0.0
        %2408 = vmatpush1.msra.mxu0 0.0
        %2409 = vmatprep.subr.mxu0 0.0
        %2410 = vmatpush1.msra.mxu0 0.0
        %2411 = vmatprep.subr.mxu0 0.0
        %2412 = vmatpush1.msra.mxu0 0.0
        %2413 = vmatprep.subr.mxu0 0.0
        %2414 = vmatpush1.msra.mxu0 0.0
        %2415 = vmatprep.subr.mxu0 0.0
        %2416 = vmatpush1.msra.mxu0 0.0
        %2417 = vmatprep.subr.mxu0 0.0
        %2418 = vmatpush1.msra.mxu0 0.0
        %2419 = vmatprep.subr.mxu0 0.0
        %2420 = vmatpush1.msra.mxu0 0.0
        %2421 = vmatprep.subr.mxu0 0.0
        %2422 = vmatpush1.msra.mxu0 0.0
        %2423 = vmatprep.subr.mxu0 0.0
        %2424 = vmatpush1.msra.mxu0 0.0
        %2425 = vmatprep.subr.mxu0 0.0
        %2426 = vmatpush1.msra.mxu0 0.0
        %2427 = vmatprep.subr.mxu0 0.0
        %2428 = vmatpush1.msra.mxu0 0.0
        %2429 = vmatprep.subr.mxu0 0.0
        %2430 = vmatpush1.msra.mxu0 0.0
        %2431 = vmatprep.subr.mxu0 0.0
        %2432 = vmatpush1.msra.mxu0 0.0
        %2433 = vmatprep.mubr.f32.mxu0 0.0
        %2434 = vmatmul.mubr.f32.gmra.mrb[0].mxu0 %v2367
        %v2435 = vpop.f32.mrb[0].mxu0
        %v2436 = vadd.f32 %v2365, %v2435
        %v2437 = vpop.f32.mrb[0].mxu0
        %2438 = vdwg.mxu0
        %v2439 = vmax.f32 %v2436, 0.0
        %v2440 = vld [vmem:[%s4] sm:$0xff]
        %v2441 = vld [vmem:[%s4 + $0x8] sm:$0xff]
        %v2442 = vld [vmem:[%s4 + $0x10] sm:$0xff]
        %v2443 = vld [vmem:[%s4 + $0x18] sm:$0xff]
        %v2444 = vld [vmem:[%s4 + $0x20] sm:$0xff]
        %v2445 = vld [vmem:[%s4 + $0x28] sm:$0xff]
        %v2446 = vld [vmem:[%s4 + $0x30] sm:$0xff]
        %v2447 = vld [vmem:[%s4 + $0x38] sm:$0xff]
        %v2448 = vld [vmem:[%s4 + $0x40] sm:$0xff]
        %v2449 = vld [vmem:[%s4 + $0x48] sm:$0xff]
        %v2450 = vld [vmem:[%s4 + $0x50] sm:$0xff]
        %v2451 = vld [vmem:[%s4 + $0x58] sm:$0xff]
        %v2452 = vld [vmem:[%s4 + $0x60] sm:$0xff]
        %v2453 = vld [vmem:[%s4 + $0x68] sm:$0xff]
        %v2454 = vld [vmem:[%s4 + $0x70] sm:$0xff]
        %v2455 = vld [vmem:[%s4 + $0x78] sm:$0xff]
        %2456 = vmatprep.subr.mxu0 0.0
        %2457 = vmatpush1.msra.mxu0 %v2440
        %2458 = vmatprep.subr.mxu0 0.0
        %2459 = vmatpush1.msra.mxu0 %v2441
        %2460 = vmatprep.subr.mxu0 0.0
        %2461 = vmatpush1.msra.mxu0 %v2442
        %2462 = vmatprep.subr.mxu0 0.0
        %2463 = vmatpush1.msra.mxu0 %v2443
        %2464 = vmatprep.subr.mxu0 0.0
        %2465 = vmatpush1.msra.mxu0 %v2444
        %2466 = vmatprep.subr.mxu0 0.0
        %2467 = vmatpush1.msra.mxu0 %v2445
        %2468 = vmatprep.subr.mxu0 0.0
        %2469 = vmatpush1.msra.mxu0 %v2446
        %2470 = vmatprep.subr.mxu0 0.0
        %2471 = vmatpush1.msra.mxu0 %v2447
        %2472 = vmatprep.subr.mxu0 0.0
        %2473 = vmatpush1.msra.mxu0 %v2448
        %2474 = vmatprep.subr.mxu0 0.0
        %2475 = vmatpush1.msra.mxu0 %v2449
        %2476 = vmatprep.subr.mxu0 0.0
        %2477 = vmatpush1.msra.mxu0 %v2450
        %2478 = vmatprep.subr.mxu0 0.0
        %2479 = vmatpush1.msra.mxu0 %v2451
        %2480 = vmatprep.subr.mxu0 0.0
        %2481 = vmatpush1.msra.mxu0 %v2452
        %2482 = vmatprep.subr.mxu0 0.0
        %2483 = vmatpush1.msra.mxu0 %v2453
        %2484 = vmatprep.subr.mxu0 0.0
        %2485 = vmatpush1.msra.mxu0 %v2454
        %2486 = vmatprep.subr.mxu0 0.0
        %2487 = vmatpush1.msra.mxu0 %v2455
        %2488 = vmatprep.subr.mxu0 0.0
        %2489 = vmatpush1.msra.mxu0 0.0
        %2490 = vmatprep.subr.mxu0 0.0
        %2491 = vmatpush1.msra.mxu0 0.0
        %2492 = vmatprep.subr.mxu0 0.0
        %2493 = vmatpush1.msra.mxu0 0.0
        %2494 = vmatprep.subr.mxu0 0.0
        %2495 = vmatpush1.msra.mxu0 0.0
        %2496 = vmatprep.subr.mxu0 0.0
        %2497 = vmatpush1.msra.mxu0 0.0
        %2498 = vmatprep.subr.mxu0 0.0
        %2499 = vmatpush1.msra.mxu0 0.0
        %2500 = vmatprep.subr.mxu0 0.0
        %2501 = vmatpush1.msra.mxu0 0.0
        %2502 = vmatprep.subr.mxu0 0.0
        %2503 = vmatpush1.msra.mxu0 0.0
        %2504 = vmatprep.subr.mxu0 0.0
        %2505 = vmatpush1.msra.mxu0 0.0
        %2506 = vmatprep.subr.mxu0 0.0
        %2507 = vmatpush1.msra.mxu0 0.0
        %2508 = vmatprep.subr.mxu0 0.0
        %2509 = vmatpush1.msra.mxu0 0.0
        %2510 = vmatprep.subr.mxu0 0.0
        %2511 = vmatpush1.msra.mxu0 0.0
        %2512 = vmatprep.subr.mxu0 0.0
        %2513 = vmatpush1.msra.mxu0 0.0
        %2514 = vmatprep.subr.mxu0 0.0
        %2515 = vmatpush1.msra.mxu0 0.0
        %2516 = vmatprep.subr.mxu0 0.0
        %2517 = vmatpush1.msra.mxu0 0.0
        %2518 = vmatprep.subr.mxu0 0.0
        %2519 = vmatpush1.msra.mxu0 0.0
        %2520 = vmatprep.mubr.f32.mxu0 0.0
        %2521 = vmatmul.mubr.f32.gmra.mrb[0].mxu0 %v2439
        %v2522 = vpop.f32.mrb[0].mxu0
        %v2523 = vadd.f32 0.0, %v2522
        %v2524 = vpop.f32.mrb[0].mxu0
        %2525 = vdwg.mxu0
        %v2526 = vadd.f32 %v2334, %v2523
        %v2527 = vlaneseq
        %v2528 = vshrl.u32 %v2527, 7
        %v2529 = vsub.s32 5, %v2528
        %v2530 = vrot.slane %v298, %v2529
        %v2531 = vadd.f32 %v2526, %v2530
        %v2532 = vsel %vm403, %v2531, 0.0
        %2533 = vadd.xlane.f32.xlu0 %v2532
        %v2534 = vpop.xlane.xlu0 %2533
        %v2535 = vmul.f32 %v2534, %v407
        %v2536 = vsub.f32 %v2531, %v2535
        %v2537 = vmul.f32 %v2536, %v2536
        %v2538 = vsel %vm403, %v2537, 0.0
        %2539 = vadd.xlane.f32.xlu0 %v2538
        %v2540 = vpop.xlane.xlu0 %2539
        %v2541 = vmul.f32 %v2540, %v407
        %v2542 = vadd.f32 %v2541, 1e-05
        %v2543 = vrsqrt.pop %v2542
        %v2544 = vmul.f32 %v2536, %v2543
        %v2545 = vlaneseq
        %v2546 = vshrl.u32 %v2545, 7
        %v2547 = vsub.s32 6, %v2546
        %v2548 = vrot.slane %v298, %v2547
        %v2549 = vmul.f32 %v2544, %v2548
        %v2550 = vlaneseq
        %v2551 = vshrl.u32 %v2550, 7
        %v2552 = vsub.s32 7, %v2551
        %v2553 = vrot.slane %v298, %v2552
        %v2554 = vadd.f32 %v2549, %v2553
        %s2555 = scalar_lea.vmem %s2, 512
        %v2556 = vld [vmem:[%s2555] sm:$0xff]
        %v2557 = vld [vmem:[%s2555 + $0x8] sm:$0xff]
        %v2558 = vld [vmem:[%s2555 + $0x10] sm:$0xff]
        %v2559 = vld [vmem:[%s2555 + $0x18] sm:$0xff]
        %v2560 = vld [vmem:[%s2555 + $0x20] sm:$0xff]
        %v2561 = vld [vmem:[%s2555 + $0x28] sm:$0xff]
        %v2562 = vld [vmem:[%s2555 + $0x30] sm:$0xff]
        %v2563 = vld [vmem:[%s2555 + $0x38] sm:$0xff]
        %v2564 = vld [vmem:[%s2555 + $0x40] sm:$0xff]
        %v2565 = vld [vmem:[%s2555 + $0x48] sm:$0xff]
        %v2566 = vld [vmem:[%s2555 + $0x50] sm:$0xff]
        %v2567 = vld [vmem:[%s2555 + $0x58] sm:$0xff]
        %v2568 = vld [vmem:[%s2555 + $0x60] sm:$0xff]
        %v2569 = vld [vmem:[%s2555 + $0x68] sm:$0xff]
        %v2570 = vld [vmem:[%s2555 + $0x70] sm:$0xff]
        %v2571 = vld [vmem:[%s2555 + $0x78] sm:$0xff]
        %v2572 = vld [vmem:[%s2555 + $0x80] sm:$0xff]
        %v2573 = vld [vmem:[%s2555 + $0x88] sm:$0xff]
        %v2574 = vld [vmem:[%s2555 + $0x90] sm:$0xff]
        %v2575 = vld [vmem:[%s2555 + $0x98] sm:$0xff]
        %v2576 = vld [vmem:[%s2555 + $0xa0] sm:$0xff]
        %v2577 = vld [vmem:[%s2555 + $0xa8] sm:$0xff]
        %v2578 = vld [vmem:[%s2555 + $0xb0] sm:$0xff]
        %v2579 = vld [vmem:[%s2555 + $0xb8] sm:$0xff]
        %v2580 = vld [vmem:[%s2555 + $0xc0] sm:$0xff]
        %v2581 = vld [vmem:[%s2555 + $0xc8] sm:$0xff]
        %v2582 = vld [vmem:[%s2555 + $0xd0] sm:$0xff]
        %v2583 = vld [vmem:[%s2555 + $0xd8] sm:$0xff]
        %v2584 = vld [vmem:[%s2555 + $0xe0] sm:$0xff]
        %v2585 = vld [vmem:[%s2555 + $0xe8] sm:$0xff]
        %v2586 = vld [vmem:[%s2555 + $0xf0] sm:$0xff]
        %v2587 = vld [vmem:[%s2555 + $0xf8] sm:$0xff]
        %v2588 = vld [vmem:[%s2555 + $0x100] sm:$0xff]
        %v2589 = vld [vmem:[%s2555 + $0x108] sm:$0xff]
        %v2590 = vld [vmem:[%s2555 + $0x110] sm:$0xff]
        %v2591 = vld [vmem:[%s2555 + $0x118] sm:$0xff]
        %v2592 = vld [vmem:[%s2555 + $0x120] sm:$0xff]
        %v2593 = vld [vmem:[%s2555 + $0x128] sm:$0xff]
        %v2594 = vld [vmem:[%s2555 + $0x130] sm:$0xff]
        %v2595 = vld [vmem:[%s2555 + $0x138] sm:$0xff]
        %v2596 = vld [vmem:[%s2555 + $0x140] sm:$0xff]
        %v2597 = vld [vmem:[%s2555 + $0x148] sm:$0xff]
        %v2598 = vld [vmem:[%s2555 + $0x150] sm:$0xff]
        %v2599 = vld [vmem:[%s2555 + $0x158] sm:$0xff]
        %v2600 = vld [vmem:[%s2555 + $0x160] sm:$0xff]
        %v2601 = vld [vmem:[%s2555 + $0x168] sm:$0xff]
        %v2602 = vld [vmem:[%s2555 + $0x170] sm:$0xff]
        %v2603 = vld [vmem:[%s2555 + $0x178] sm:$0xff]
        %v2604 = vld [vmem:[%s2555 + $0x180] sm:$0xff]
        %v2605 = vld [vmem:[%s2555 + $0x188] sm:$0xff]
        %v2606 = vld [vmem:[%s2555 + $0x190] sm:$0xff]
        %v2607 = vld [vmem:[%s2555 + $0x198] sm:$0xff]
        %v2608 = vld [vmem:[%s2555 + $0x1a0] sm:$0xff]
        %v2609 = vld [vmem:[%s2555 + $0x1a8] sm:$0xff]
        %v2610 = vld [vmem:[%s2555 + $0x1b0] sm:$0xff]
        %v2611 = vld [vmem:[%s2555 + $0x1b8] sm:$0xff]
        %v2612 = vld [vmem:[%s2555 + $0x1c0] sm:$0xff]
        %v2613 = vld [vmem:[%s2555 + $0x1c8] sm:$0xff]
        %v2614 = vld [vmem:[%s2555 + $0x1d0] sm:$0xff]
        %v2615 = vld [vmem:[%s2555 + $0x1d8] sm:$0xff]
        %v2616 = vld [vmem:[%s2555 + $0x1e0] sm:$0xff]
        %v2617 = vld [vmem:[%s2555 + $0x1e8] sm:$0xff]
        %v2618 = vld [vmem:[%s2555 + $0x1f0] sm:$0xff]
        %v2619 = vld [vmem:[%s2555 + $0x1f8] sm:$0xff]
        %v2621 = vsel %vm403, %v2554, 0
        %2623 = vmatprep.subr.mxu0 0.0
        %2624 = vmatpush1.msra.mxu0 %v2556
        %2625 = vmatprep.subr.mxu0 0.0
        %2626 = vmatpush1.msra.mxu0 %v2557
        %2627 = vmatprep.subr.mxu0 0.0
        %2628 = vmatpush1.msra.mxu0 %v2558
        %2629 = vmatprep.subr.mxu0 0.0
        %2630 = vmatpush1.msra.mxu0 %v2559
        %2631 = vmatprep.subr.mxu0 0.0
        %2632 = vmatpush1.msra.mxu0 0.0
        %2633 = vmatprep.subr.mxu0 0.0
        %2634 = vmatpush1.msra.mxu0 0.0
        %2635 = vmatprep.subr.mxu0 0.0
        %2636 = vmatpush1.msra.mxu0 0.0
        %2637 = vmatprep.subr.mxu0 0.0
        %2638 = vmatpush1.msra.mxu0 0.0
        %2639 = vmatprep.subr.mxu0 0.0
        %2640 = vmatpush1.msra.mxu0 0.0
        %2641 = vmatprep.subr.mxu0 0.0
        %2642 = vmatpush1.msra.mxu0 0.0
        %2643 = vmatprep.subr.mxu0 0.0
        %2644 = vmatpush1.msra.mxu0 0.0
        %2645 = vmatprep.subr.mxu0 0.0
        %2646 = vmatpush1.msra.mxu0 0.0
        %2647 = vmatprep.subr.mxu0 0.0
        %2648 = vmatpush1.msra.mxu0 0.0
        %2649 = vmatprep.subr.mxu0 0.0
        %2650 = vmatpush1.msra.mxu0 0.0
        %2651 = vmatprep.subr.mxu0 0.0
        %2652 = vmatpush1.msra.mxu0 0.0
        %2653 = vmatprep.subr.mxu0 0.0
        %2654 = vmatpush1.msra.mxu0 0.0
        %2655 = vmatprep.subr.mxu0 0.0
        %2656 = vmatpush1.msra.mxu0 0.0
        %2657 = vmatprep.subr.mxu0 0.0
        %2658 = vmatpush1.msra.mxu0 0.0
        %2659 = vmatprep.subr.mxu0 0.0
        %2660 = vmatpush1.msra.mxu0 0.0
        %2661 = vmatprep.subr.mxu0 0.0
        %2662 = vmatpush1.msra.mxu0 0.0
        %2663 = vmatprep.subr.mxu0 0.0
        %2664 = vmatpush1.msra.mxu0 0.0
        %2665 = vmatprep.subr.mxu0 0.0
        %2666 = vmatpush1.msra.mxu0 0.0
        %2667 = vmatprep.subr.mxu0 0.0
        %2668 = vmatpush1.msra.mxu0 0.0
        %2669 = vmatprep.subr.mxu0 0.0
        %2670 = vmatpush1.msra.mxu0 0.0
        %2671 = vmatprep.subr.mxu0 0.0
        %2672 = vmatpush1.msra.mxu0 0.0
        %2673 = vmatprep.subr.mxu0 0.0
        %2674 = vmatpush1.msra.mxu0 0.0
        %2675 = vmatprep.subr.mxu0 0.0
        %2676 = vmatpush1.msra.mxu0 0.0
        %2677 = vmatprep.subr.mxu0 0.0
        %2678 = vmatpush1.msra.mxu0 0.0
        %2679 = vmatprep.subr.mxu0 0.0
        %2680 = vmatpush1.msra.mxu0 0.0
        %2681 = vmatprep.subr.mxu0 0.0
        %2682 = vmatpush1.msra.mxu0 0.0
        %2683 = vmatprep.subr.mxu0 0.0
        %2684 = vmatpush1.msra.mxu0 0.0
        %2685 = vmatprep.subr.mxu0 0.0
        %2686 = vmatpush1.msra.mxu0 0.0
        %2687 = vmatprep.mubr.f32.mxu0 0.0
        %2688 = vmatmul.mubr.f32.gmra.mrb[0].mxu0 %v2621
        %v2689 = vpop.f32.mrb[0].mxu0
        %v2690 = vadd.f32 0.0, %v2689
        %v2691 = vpop.f32.mrb[0].mxu0
        %2692 = vdwg.mxu0
        %2693 = vmatprep.subr.mxu0 0.0
        %2694 = vmatpush1.msra.mxu0 %v2560
        %2695 = vmatprep.subr.mxu0 0.0
        %2696 = vmatpush1.msra.mxu0 %v2561
        %2697 = vmatprep.subr.mxu0 0.0
        %2698 = vmatpush1.msra.mxu0 %v2562
        %2699 = vmatprep.subr.mxu0 0.0
        %2700 = vmatpush1.msra.mxu0 %v2563
        %2701 = vmatprep.subr.mxu0 0.0
        %2702 = vmatpush1.msra.mxu0 0.0
        %2703 = vmatprep.subr.mxu0 0.0
        %2704 = vmatpush1.msra.mxu0 0.0
        %2705 = vmatprep.subr.mxu0 0.0
        %2706 = vmatpush1.msra.mxu0 0.0
        %2707 = vmatprep.subr.mxu0 0.0
        %2708 = vmatpush1.msra.mxu0 0.0
        %2709 = vmatprep.subr.mxu0 0.0
        %2710 = vmatpush1.msra.mxu0 0.0
        %2711 = vmatprep.subr.mxu0 0.0
        %2712 = vmatpush1.msra.mxu0 0.0
        %2713 = vmatprep.subr.mxu0 0.0
        %2714 = vmatpush1.msra.mxu0 0.0
        %2715 = vmatprep.subr.mxu0 0.0
        %2716 = vmatpush1.msra.mxu0 0.0
        %2717 = vmatprep.subr.mxu0 0.0
        %2718 = vmatpush1.msra.mxu0 0.0
        %2719 = vmatprep.subr.mxu0 0.0
        %2720 = vmatpush1.msra.mxu0 0.0
        %2721 = vmatprep.subr.mxu0 0.0
        %2722 = vmatpush1.msra.mxu0 0.0
        %2723 = vmatprep.subr.mxu0 0.0
        %2724 = vmatpush1.msra.mxu0 0.0
        %2725 = vmatprep.subr.mxu0 0.0
        %2726 = vmatpush1.msra.mxu0 0.0
        %2727 = vmatprep.subr.mxu0 0.0
        %2728 = vmatpush1.msra.mxu0 0.0
        %2729 = vmatprep.subr.mxu0 0.0
        %2730 = vmatpush1.msra.mxu0 0.0
        %2731 = vmatprep.subr.mxu0 0.0
        %2732 = vmatpush1.msra.mxu0 0.0
        %2733 = vmatprep.subr.mxu0 0.0
        %2734 = vmatpush1.msra.mxu0 0.0
        %2735 = vmatprep.subr.mxu0 0.0
        %2736 = vmatpush1.msra.mxu0 0.0
        %2737 = vmatprep.subr.mxu0 0.0
        %2738 = vmatpush1.msra.mxu0 0.0
        %2739 = vmatprep.subr.mxu0 0.0
        %2740 = vmatpush1.msra.mxu0 0.0
        %2741 = vmatprep.subr.mxu0 0.0
        %2742 = vmatpush1.msra.mxu0 0.0
        %2743 = vmatprep.subr.mxu0 0.0
        %2744 = vmatpush1.msra.mxu0 0.0
        %2745 = vmatprep.subr.mxu0 0.0
        %2746 = vmatpush1.msra.mxu0 0.0
        %2747 = vmatprep.subr.mxu0 0.0
        %2748 = vmatpush1.msra.mxu0 0.0
        %2749 = vmatprep.subr.mxu0 0.0
        %2750 = vmatpush1.msra.mxu0 0.0
        %2751 = vmatprep.subr.mxu0 0.0
        %2752 = vmatpush1.msra.mxu0 0.0
        %2753 = vmatprep.subr.mxu0 0.0
        %2754 = vmatpush1.msra.mxu0 0.0
        %2755 = vmatprep.subr.mxu0 0.0
        %2756 = vmatpush1.msra.mxu0 0.0
        %2757 = vmatprep.mubr.f32.mxu0 0.0
        %2758 = vmatmul.mubr.f32.gmra.mrb[0].mxu0 %v2621
        %v2759 = vpop.f32.mrb[0].mxu0
        %v2760 = vadd.f32 0.0, %v2759
        %v2761 = vpop.f32.mrb[0].mxu0
        %2762 = vdwg.mxu0
        %2763 = vmatprep.subr.mxu0 0.0
        %2764 = vmatpush1.msra.mxu0 %v2564
        %2765 = vmatprep.subr.mxu0 0.0
        %2766 = vmatpush1.msra.mxu0 %v2565
        %2767 = vmatprep.subr.mxu0 0.0
        %2768 = vmatpush1.msra.mxu0 %v2566
        %2769 = vmatprep.subr.mxu0 0.0
        %2770 = vmatpush1.msra.mxu0 %v2567
        %2771 = vmatprep.subr.mxu0 0.0
        %2772 = vmatpush1.msra.mxu0 0.0
        %2773 = vmatprep.subr.mxu0 0.0
        %2774 = vmatpush1.msra.mxu0 0.0
        %2775 = vmatprep.subr.mxu0 0.0
        %2776 = vmatpush1.msra.mxu0 0.0
        %2777 = vmatprep.subr.mxu0 0.0
        %2778 = vmatpush1.msra.mxu0 0.0
        %2779 = vmatprep.subr.mxu0 0.0
        %2780 = vmatpush1.msra.mxu0 0.0
        %2781 = vmatprep.subr.mxu0 0.0
        %2782 = vmatpush1.msra.mxu0 0.0
        %2783 = vmatprep.subr.mxu0 0.0
        %2784 = vmatpush1.msra.mxu0 0.0
        %2785 = vmatprep.subr.mxu0 0.0
        %2786 = vmatpush1.msra.mxu0 0.0
        %2787 = vmatprep.subr.mxu0 0.0
        %2788 = vmatpush1.msra.mxu0 0.0
        %2789 = vmatprep.subr.mxu0 0.0
        %2790 = vmatpush1.msra.mxu0 0.0
        %2791 = vmatprep.subr.mxu0 0.0
        %2792 = vmatpush1.msra.mxu0 0.0
        %2793 = vmatprep.subr.mxu0 0.0
        %2794 = vmatpush1.msra.mxu0 0.0
        %2795 = vmatprep.subr.mxu0 0.0
        %2796 = vmatpush1.msra.mxu0 0.0
        %2797 = vmatprep.subr.mxu0 0.0
        %2798 = vmatpush1.msra.mxu0 0.0
        %2799 = vmatprep.subr.mxu0 0.0
        %2800 = vmatpush1.msra.mxu0 0.0
        %2801 = vmatprep.subr.mxu0 0.0
        %2802 = vmatpush1.msra.mxu0 0.0
        %2803 = vmatprep.subr.mxu0 0.0
        %2804 = vmatpush1.msra.mxu0 0.0
        %2805 = vmatprep.subr.mxu0 0.0
        %2806 = vmatpush1.msra.mxu0 0.0
        %2807 = vmatprep.subr.mxu0 0.0
        %2808 = vmatpush1.msra.mxu0 0.0
        %2809 = vmatprep.subr.mxu0 0.0
        %2810 = vmatpush1.msra.mxu0 0.0
        %2811 = vmatprep.subr.mxu0 0.0
        %2812 = vmatpush1.msra.mxu0 0.0
        %2813 = vmatprep.subr.mxu0 0.0
        %2814 = vmatpush1.msra.mxu0 0.0
        %2815 = vmatprep.subr.mxu0 0.0
        %2816 = vmatpush1.msra.mxu0 0.0
        %2817 = vmatprep.subr.mxu0 0.0
        %2818 = vmatpush1.msra.mxu0 0.0
        %2819 = vmatprep.subr.mxu0 0.0
        %2820 = vmatpush1.msra.mxu0 0.0
        %2821 = vmatprep.subr.mxu0 0.0
        %2822 = vmatpush1.msra.mxu0 0.0
        %2823 = vmatprep.subr.mxu0 0.0
        %2824 = vmatpush1.msra.mxu0 0.0
        %2825 = vmatprep.subr.mxu0 0.0
        %2826 = vmatpush1.msra.mxu0 0.0
        %2827 = vmatprep.mubr.f32.mxu0 0.0
        %2828 = vmatmul.mubr.f32.gmra.mrb[0].mxu0 %v2621
        %v2829 = vpop.f32.mrb[0].mxu0
        %v2830 = vadd.f32 0.0, %v2829
        %v2831 = vpop.f32.mrb[0].mxu0
        %2832 = vdwg.mxu0
        %2833 = vmatprep.subr.mxu0 0.0
        %2834 = vmatpush1.msra.mxu0 %v2568
        %2835 = vmatprep.subr.mxu0 0.0
        %2836 = vmatpush1.msra.mxu0 %v2569
        %2837 = vmatprep.subr.mxu0 0.0
        %2838 = vmatpush1.msra.mxu0 %v2570
        %2839 = vmatprep.subr.mxu0 0.0
        %2840 = vmatpush1.msra.mxu0 %v2571
        %2841 = vmatprep.subr.mxu0 0.0
        %2842 = vmatpush1.msra.mxu0 0.0
        %2843 = vmatprep.subr.mxu0 0.0
        %2844 = vmatpush1.msra.mxu0 0.0
        %2845 = vmatprep.subr.mxu0 0.0
        %2846 = vmatpush1.msra.mxu0 0.0
        %2847 = vmatprep.subr.mxu0 0.0
        %2848 = vmatpush1.msra.mxu0 0.0
        %2849 = vmatprep.subr.mxu0 0.0
        %2850 = vmatpush1.msra.mxu0 0.0
        %2851 = vmatprep.subr.mxu0 0.0
        %2852 = vmatpush1.msra.mxu0 0.0
        %2853 = vmatprep.subr.mxu0 0.0
        %2854 = vmatpush1.msra.mxu0 0.0
        %2855 = vmatprep.subr.mxu0 0.0
        %2856 = vmatpush1.msra.mxu0 0.0
        %2857 = vmatprep.subr.mxu0 0.0
        %2858 = vmatpush1.msra.mxu0 0.0
        %2859 = vmatprep.subr.mxu0 0.0
        %2860 = vmatpush1.msra.mxu0 0.0
        %2861 = vmatprep.subr.mxu0 0.0
        %2862 = vmatpush1.msra.mxu0 0.0
        %2863 = vmatprep.subr.mxu0 0.0
        %2864 = vmatpush1.msra.mxu0 0.0
        %2865 = vmatprep.subr.mxu0 0.0
        %2866 = vmatpush1.msra.mxu0 0.0
        %2867 = vmatprep.subr.mxu0 0.0
        %2868 = vmatpush1.msra.mxu0 0.0
        %2869 = vmatprep.subr.mxu0 0.0
        %2870 = vmatpush1.msra.mxu0 0.0
        %2871 = vmatprep.subr.mxu0 0.0
        %2872 = vmatpush1.msra.mxu0 0.0
        %2873 = vmatprep.subr.mxu0 0.0
        %2874 = vmatpush1.msra.mxu0 0.0
        %2875 = vmatprep.subr.mxu0 0.0
        %2876 = vmatpush1.msra.mxu0 0.0
        %2877 = vmatprep.subr.mxu0 0.0
        %2878 = vmatpush1.msra.mxu0 0.0
        %2879 = vmatprep.subr.mxu0 0.0
        %2880 = vmatpush1.msra.mxu0 0.0
        %2881 = vmatprep.subr.mxu0 0.0
        %2882 = vmatpush1.msra.mxu0 0.0
        %2883 = vmatprep.subr.mxu0 0.0
        %2884 = vmatpush1.msra.mxu0 0.0
        %2885 = vmatprep.subr.mxu0 0.0
        %2886 = vmatpush1.msra.mxu0 0.0
        %2887 = vmatprep.subr.mxu0 0.0
        %2888 = vmatpush1.msra.mxu0 0.0
        %2889 = vmatprep.subr.mxu0 0.0
        %2890 = vmatpush1.msra.mxu0 0.0
        %2891 = vmatprep.subr.mxu0 0.0
        %2892 = vmatpush1.msra.mxu0 0.0
        %2893 = vmatprep.subr.mxu0 0.0
        %2894 = vmatpush1.msra.mxu0 0.0
        %2895 = vmatprep.subr.mxu0 0.0
        %2896 = vmatpush1.msra.mxu0 0.0
        %2897 = vmatprep.mubr.f32.mxu0 0.0
        %2898 = vmatmul.mubr.f32.gmra.mrb[0].mxu0 %v2621
        %v2899 = vpop.f32.mrb[0].mxu0
        %v2900 = vadd.f32 0.0, %v2899
        %v2901 = vpop.f32.mrb[0].mxu0
        %2902 = vdwg.mxu0
        %2903 = vmatprep.subr.mxu0 0.0
        %2904 = vmatpush1.msra.mxu0 %v2572
        %2905 = vmatprep.subr.mxu0 0.0
        %2906 = vmatpush1.msra.mxu0 %v2573
        %2907 = vmatprep.subr.mxu0 0.0
        %2908 = vmatpush1.msra.mxu0 %v2574
        %2909 = vmatprep.subr.mxu0 0.0
        %2910 = vmatpush1.msra.mxu0 %v2575
        %2911 = vmatprep.subr.mxu0 0.0
        %2912 = vmatpush1.msra.mxu0 0.0
        %2913 = vmatprep.subr.mxu0 0.0
        %2914 = vmatpush1.msra.mxu0 0.0
        %2915 = vmatprep.subr.mxu0 0.0
        %2916 = vmatpush1.msra.mxu0 0.0
        %2917 = vmatprep.subr.mxu0 0.0
        %2918 = vmatpush1.msra.mxu0 0.0
        %2919 = vmatprep.subr.mxu0 0.0
        %2920 = vmatpush1.msra.mxu0 0.0
        %2921 = vmatprep.subr.mxu0 0.0
        %2922 = vmatpush1.msra.mxu0 0.0
        %2923 = vmatprep.subr.mxu0 0.0
        %2924 = vmatpush1.msra.mxu0 0.0
        %2925 = vmatprep.subr.mxu0 0.0
        %2926 = vmatpush1.msra.mxu0 0.0
        %2927 = vmatprep.subr.mxu0 0.0
        %2928 = vmatpush1.msra.mxu0 0.0
        %2929 = vmatprep.subr.mxu0 0.0
        %2930 = vmatpush1.msra.mxu0 0.0
        %2931 = vmatprep.subr.mxu0 0.0
        %2932 = vmatpush1.msra.mxu0 0.0
        %2933 = vmatprep.subr.mxu0 0.0
        %2934 = vmatpush1.msra.mxu0 0.0
        %2935 = vmatprep.subr.mxu0 0.0
        %2936 = vmatpush1.msra.mxu0 0.0
        %2937 = vmatprep.subr.mxu0 0.0
        %2938 = vmatpush1.msra.mxu0 0.0
        %2939 = vmatprep.subr.mxu0 0.0
        %2940 = vmatpush1.msra.mxu0 0.0
        %2941 = vmatprep.subr.mxu0 0.0
        %2942 = vmatpush1.msra.mxu0 0.0
        %2943 = vmatprep.subr.mxu0 0.0
        %2944 = vmatpush1.msra.mxu0 0.0
        %2945 = vmatprep.subr.mxu0 0.0
        %2946 = vmatpush1.msra.mxu0 0.0
        %2947 = vmatprep.subr.mxu0 0.0
        %2948 = vmatpush1.msra.mxu0 0.0
        %2949 = vmatprep.subr.mxu0 0.0
        %2950 = vmatpush1.msra.mxu0 0.0
        %2951 = vmatprep.subr.mxu0 0.0
        %2952 = vmatpush1.msra.mxu0 0.0
        %2953 = vmatprep.subr.mxu0 0.0
        %2954 = vmatpush1.msra.mxu0 0.0
        %2955 = vmatprep.subr.mxu0 0.0
        %2956 = vmatpush1.msra.mxu0 0.0
        %2957 = vmatprep.subr.mxu0 0.0
        %2958 = vmatpush1.msra.mxu0 0.0
        %2959 = vmatprep.subr.mxu0 0.0
        %2960 = vmatpush1.msra.mxu0 0.0
        %2961 = vmatprep.subr.mxu0 0.0
        %2962 = vmatpush1.msra.mxu0 0.0
        %2963 = vmatprep.subr.mxu0 0.0
        %2964 = vmatpush1.msra.mxu0 0.0
        %2965 = vmatprep.subr.mxu0 0.0
        %2966 = vmatpush1.msra.mxu0 0.0
        %2967 = vmatprep.mubr.f32.mxu0 0.0
        %2968 = vmatmul.mubr.f32.gmra.mrb[0].mxu0 %v2621
        %v2969 = vpop.f32.mrb[0].mxu0
        %v2970 = vadd.f32 0.0, %v2969
        %v2971 = vpop.f32.mrb[0].mxu0
        %2972 = vdwg.mxu0
        %2973 = vmatprep.subr.mxu0 0.0
        %2974 = vmatpush1.msra.mxu0 %v2576
        %2975 = vmatprep.subr.mxu0 0.0
        %2976 = vmatpush1.msra.mxu0 %v2577
        %2977 = vmatprep.subr.mxu0 0.0
        %2978 = vmatpush1.msra.mxu0 %v2578
        %2979 = vmatprep.subr.mxu0 0.0
        %2980 = vmatpush1.msra.mxu0 %v2579
        %2981 = vmatprep.subr.mxu0 0.0
        %2982 = vmatpush1.msra.mxu0 0.0
        %2983 = vmatprep.subr.mxu0 0.0
        %2984 = vmatpush1.msra.mxu0 0.0
        %2985 = vmatprep.subr.mxu0 0.0
        %2986 = vmatpush1.msra.mxu0 0.0
        %2987 = vmatprep.subr.mxu0 0.0
        %2988 = vmatpush1.msra.mxu0 0.0
        %2989 = vmatprep.subr.mxu0 0.0
        %2990 = vmatpush1.msra.mxu0 0.0
        %2991 = vmatprep.subr.mxu0 0.0
        %2992 = vmatpush1.msra.mxu0 0.0
        %2993 = vmatprep.subr.mxu0 0.0
        %2994 = vmatpush1.msra.mxu0 0.0
        %2995 = vmatprep.subr.mxu0 0.0
        %2996 = vmatpush1.msra.mxu0 0.0
        %2997 = vmatprep.subr.mxu0 0.0
        %2998 = vmatpush1.msra.mxu0 0.0
        %2999 = vmatprep.subr.mxu0 0.0
        %3000 = vmatpush1.msra.mxu0 0.0
        %3001 = vmatprep.subr.mxu0 0.0
        %3002 = vmatpush1.msra.mxu0 0.0
        %3003 = vmatprep.subr.mxu0 0.0
        %3004 = vmatpush1.msra.mxu0 0.0
        %3005 = vmatprep.subr.mxu0 0.0
        %3006 = vmatpush1.msra.mxu0 0.0
        %3007 = vmatprep.subr.mxu0 0.0
        %3008 = vmatpush1.msra.mxu0 0.0
        %3009 = vmatprep.subr.mxu0 0.0
        %3010 = vmatpush1.msra.mxu0 0.0
        %3011 = vmatprep.subr.mxu0 0.0
        %3012 = vmatpush1.msra.mxu0 0.0
        %3013 = vmatprep.subr.mxu0 0.0
        %3014 = vmatpush1.msra.mxu0 0.0
        %3015 = vmatprep.subr.mxu0 0.0
        %3016 = vmatpush1.msra.mxu0 0.0
        %3017 = vmatprep.subr.mxu0 0.0
        %3018 = vmatpush1.msra.mxu0 0.0
        %3019 = vmatprep.subr.mxu0 0.0
        %3020 = vmatpush1.msra.mxu0 0.0
        %3021 = vmatprep.subr.mxu0 0.0
        %3022 = vmatpush1.msra.mxu0 0.0
        %3023 = vmatprep.subr.mxu0 0.0
        %3024 = vmatpush1.msra.mxu0 0.0
        %3025 = vmatprep.subr.mxu0 0.0
        %3026 = vmatpush1.msra.mxu0 0.0
        %3027 = vmatprep.subr.mxu0 0.0
        %3028 = vmatpush1.msra.mxu0 0.0
        %3029 = vmatprep.subr.mxu0 0.0
        %3030 = vmatpush1.msra.mxu0 0.0
        %3031 = vmatprep.subr.mxu0 0.0
        %3032 = vmatpush1.msra.mxu0 0.0
        %3033 = vmatprep.subr.mxu0 0.0
        %3034 = vmatpush1.msra.mxu0 0.0
        %3035 = vmatprep.subr.mxu0 0.0
        %3036 = vmatpush1.msra.mxu0 0.0
        %3037 = vmatprep.mubr.f32.mxu0 0.0
        %3038 = vmatmul.mubr.f32.gmra.mrb[0].mxu0 %v2621
        %v3039 = vpop.f32.mrb[0].mxu0
        %v3040 = vadd.f32 0.0, %v3039
        %v3041 = vpop.f32.mrb[0].mxu0
        %3042 = vdwg.mxu0
        %3043 = vmatprep.subr.mxu0 0.0
        %3044 = vmatpush1.msra.mxu0 %v2580
        %3045 = vmatprep.subr.mxu0 0.0
        %3046 = vmatpush1.msra.mxu0 %v2581
        %3047 = vmatprep.subr.mxu0 0.0
        %3048 = vmatpush1.msra.mxu0 %v2582
        %3049 = vmatprep.subr.mxu0 0.0
        %3050 = vmatpush1.msra.mxu0 %v2583
        %3051 = vmatprep.subr.mxu0 0.0
        %3052 = vmatpush1.msra.mxu0 0.0
        %3053 = vmatprep.subr.mxu0 0.0
        %3054 = vmatpush1.msra.mxu0 0.0
        %3055 = vmatprep.subr.mxu0 0.0
        %3056 = vmatpush1.msra.mxu0 0.0
        %3057 = vmatprep.subr.mxu0 0.0
        %3058 = vmatpush1.msra.mxu0 0.0
        %3059 = vmatprep.subr.mxu0 0.0
        %3060 = vmatpush1.msra.mxu0 0.0
        %3061 = vmatprep.subr.mxu0 0.0
        %3062 = vmatpush1.msra.mxu0 0.0
        %3063 = vmatprep.subr.mxu0 0.0
        %3064 = vmatpush1.msra.mxu0 0.0
        %3065 = vmatprep.subr.mxu0 0.0
        %3066 = vmatpush1.msra.mxu0 0.0
        %3067 = vmatprep.subr.mxu0 0.0
        %3068 = vmatpush1.msra.mxu0 0.0
        %3069 = vmatprep.subr.mxu0 0.0
        %3070 = vmatpush1.msra.mxu0 0.0
        %3071 = vmatprep.subr.mxu0 0.0
        %3072 = vmatpush1.msra.mxu0 0.0
        %3073 = vmatprep.subr.mxu0 0.0
        %3074 = vmatpush1.msra.mxu0 0.0
        %3075 = vmatprep.subr.mxu0 0.0
        %3076 = vmatpush1.msra.mxu0 0.0
        %3077 = vmatprep.subr.mxu0 0.0
        %3078 = vmatpush1.msra.mxu0 0.0
        %3079 = vmatprep.subr.mxu0 0.0
        %3080 = vmatpush1.msra.mxu0 0.0
        %3081 = vmatprep.subr.mxu0 0.0
        %3082 = vmatpush1.msra.mxu0 0.0
        %3083 = vmatprep.subr.mxu0 0.0
        %3084 = vmatpush1.msra.mxu0 0.0
        %3085 = vmatprep.subr.mxu0 0.0
        %3086 = vmatpush1.msra.mxu0 0.0
        %3087 = vmatprep.subr.mxu0 0.0
        %3088 = vmatpush1.msra.mxu0 0.0
        %3089 = vmatprep.subr.mxu0 0.0
        %3090 = vmatpush1.msra.mxu0 0.0
        %3091 = vmatprep.subr.mxu0 0.0
        %3092 = vmatpush1.msra.mxu0 0.0
        %3093 = vmatprep.subr.mxu0 0.0
        %3094 = vmatpush1.msra.mxu0 0.0
        %3095 = vmatprep.subr.mxu0 0.0
        %3096 = vmatpush1.msra.mxu0 0.0
        %3097 = vmatprep.subr.mxu0 0.0
        %3098 = vmatpush1.msra.mxu0 0.0
        %3099 = vmatprep.subr.mxu0 0.0
        %3100 = vmatpush1.msra.mxu0 0.0
        %3101 = vmatprep.subr.mxu0 0.0
        %3102 = vmatpush1.msra.mxu0 0.0
        %3103 = vmatprep.subr.mxu0 0.0
        %3104 = vmatpush1.msra.mxu0 0.0
        %3105 = vmatprep.subr.mxu0 0.0
        %3106 = vmatpush1.msra.mxu0 0.0
        %3107 = vmatprep.mubr.f32.mxu0 0.0
        %3108 = vmatmul.mubr.f32.gmra.mrb[0].mxu0 %v2621
        %v3109 = vpop.f32.mrb[0].mxu0
        %v3110 = vadd.f32 0.0, %v3109
        %v3111 = vpop.f32.mrb[0].mxu0
        %3112 = vdwg.mxu0
        %3113 = vmatprep.subr.mxu0 0.0
        %3114 = vmatpush1.msra.mxu0 %v2584
        %3115 = vmatprep.subr.mxu0 0.0
        %3116 = vmatpush1.msra.mxu0 %v2585
        %3117 = vmatprep.subr.mxu0 0.0
        %3118 = vmatpush1.msra.mxu0 %v2586
        %3119 = vmatprep.subr.mxu0 0.0
        %3120 = vmatpush1.msra.mxu0 %v2587
        %3121 = vmatprep.subr.mxu0 0.0
        %3122 = vmatpush1.msra.mxu0 0.0
        %3123 = vmatprep.subr.mxu0 0.0
        %3124 = vmatpush1.msra.mxu0 0.0
        %3125 = vmatprep.subr.mxu0 0.0
        %3126 = vmatpush1.msra.mxu0 0.0
        %3127 = vmatprep.subr.mxu0 0.0
        %3128 = vmatpush1.msra.mxu0 0.0
        %3129 = vmatprep.subr.mxu0 0.0
        %3130 = vmatpush1.msra.mxu0 0.0
        %3131 = vmatprep.subr.mxu0 0.0
        %3132 = vmatpush1.msra.mxu0 0.0
        %3133 = vmatprep.subr.mxu0 0.0
        %3134 = vmatpush1.msra.mxu0 0.0
        %3135 = vmatprep.subr.mxu0 0.0
        %3136 = vmatpush1.msra.mxu0 0.0
        %3137 = vmatprep.subr.mxu0 0.0
        %3138 = vmatpush1.msra.mxu0 0.0
        %3139 = vmatprep.subr.mxu0 0.0
        %3140 = vmatpush1.msra.mxu0 0.0
        %3141 = vmatprep.subr.mxu0 0.0
        %3142 = vmatpush1.msra.mxu0 0.0
        %3143 = vmatprep.subr.mxu0 0.0
        %3144 = vmatpush1.msra.mxu0 0.0
        %3145 = vmatprep.subr.mxu0 0.0
        %3146 = vmatpush1.msra.mxu0 0.0
        %3147 = vmatprep.subr.mxu0 0.0
        %3148 = vmatpush1.msra.mxu0 0.0
        %3149 = vmatprep.subr.mxu0 0.0
        %3150 = vmatpush1.msra.mxu0 0.0
        %3151 = vmatprep.subr.mxu0 0.0
        %3152 = vmatpush1.msra.mxu0 0.0
        %3153 = vmatprep.subr.mxu0 0.0
        %3154 = vmatpush1.msra.mxu0 0.0
        %3155 = vmatprep.subr.mxu0 0.0
        %3156 = vmatpush1.msra.mxu0 0.0
        %3157 = vmatprep.subr.mxu0 0.0
        %3158 = vmatpush1.msra.mxu0 0.0
        %3159 = vmatprep.subr.mxu0 0.0
        %3160 = vmatpush1.msra.mxu0 0.0
        %3161 = vmatprep.subr.mxu0 0.0
        %3162 = vmatpush1.msra.mxu0 0.0
        %3163 = vmatprep.subr.mxu0 0.0
        %3164 = vmatpush1.msra.mxu0 0.0
        %3165 = vmatprep.subr.mxu0 0.0
        %3166 = vmatpush1.msra.mxu0 0.0
        %3167 = vmatprep.subr.mxu0 0.0
        %3168 = vmatpush1.msra.mxu0 0.0
        %3169 = vmatprep.subr.mxu0 0.0
        %3170 = vmatpush1.msra.mxu0 0.0
        %3171 = vmatprep.subr.mxu0 0.0
        %3172 = vmatpush1.msra.mxu0 0.0
        %3173 = vmatprep.subr.mxu0 0.0
        %3174 = vmatpush1.msra.mxu0 0.0
        %3175 = vmatprep.subr.mxu0 0.0
        %3176 = vmatpush1.msra.mxu0 0.0
        %3177 = vmatprep.mubr.f32.mxu0 0.0
        %3178 = vmatmul.mubr.f32.gmra.mrb[0].mxu0 %v2621
        %v3179 = vpop.f32.mrb[0].mxu0
        %v3180 = vadd.f32 0.0, %v3179
        %v3181 = vpop.f32.mrb[0].mxu0
        %3182 = vdwg.mxu0
        %3183 = vmatprep.subr.mxu0 0.0
        %3184 = vmatpush1.msra.mxu0 %v2588
        %3185 = vmatprep.subr.mxu0 0.0
        %3186 = vmatpush1.msra.mxu0 %v2589
        %3187 = vmatprep.subr.mxu0 0.0
        %3188 = vmatpush1.msra.mxu0 %v2590
        %3189 = vmatprep.subr.mxu0 0.0
        %3190 = vmatpush1.msra.mxu0 %v2591
        %3191 = vmatprep.subr.mxu0 0.0
        %3192 = vmatpush1.msra.mxu0 0.0
        %3193 = vmatprep.subr.mxu0 0.0
        %3194 = vmatpush1.msra.mxu0 0.0
        %3195 = vmatprep.subr.mxu0 0.0
        %3196 = vmatpush1.msra.mxu0 0.0
        %3197 = vmatprep.subr.mxu0 0.0
        %3198 = vmatpush1.msra.mxu0 0.0
        %3199 = vmatprep.subr.mxu0 0.0
        %3200 = vmatpush1.msra.mxu0 0.0
        %3201 = vmatprep.subr.mxu0 0.0
        %3202 = vmatpush1.msra.mxu0 0.0
        %3203 = vmatprep.subr.mxu0 0.0
        %3204 = vmatpush1.msra.mxu0 0.0
        %3205 = vmatprep.subr.mxu0 0.0
        %3206 = vmatpush1.msra.mxu0 0.0
        %3207 = vmatprep.subr.mxu0 0.0
        %3208 = vmatpush1.msra.mxu0 0.0
        %3209 = vmatprep.subr.mxu0 0.0
        %3210 = vmatpush1.msra.mxu0 0.0
        %3211 = vmatprep.subr.mxu0 0.0
        %3212 = vmatpush1.msra.mxu0 0.0
        %3213 = vmatprep.subr.mxu0 0.0
        %3214 = vmatpush1.msra.mxu0 0.0
        %3215 = vmatprep.subr.mxu0 0.0
        %3216 = vmatpush1.msra.mxu0 0.0
        %3217 = vmatprep.subr.mxu0 0.0
        %3218 = vmatpush1.msra.mxu0 0.0
        %3219 = vmatprep.subr.mxu0 0.0
        %3220 = vmatpush1.msra.mxu0 0.0
        %3221 = vmatprep.subr.mxu0 0.0
        %3222 = vmatpush1.msra.mxu0 0.0
        %3223 = vmatprep.subr.mxu0 0.0
        %3224 = vmatpush1.msra.mxu0 0.0
        %3225 = vmatprep.subr.mxu0 0.0
        %3226 = vmatpush1.msra.mxu0 0.0
        %3227 = vmatprep.subr.mxu0 0.0
        %3228 = vmatpush1.msra.mxu0 0.0
        %3229 = vmatprep.subr.mxu0 0.0
        %3230 = vmatpush1.msra.mxu0 0.0
        %3231 = vmatprep.subr.mxu0 0.0
        %3232 = vmatpush1.msra.mxu0 0.0
        %3233 = vmatprep.subr.mxu0 0.0
        %3234 = vmatpush1.msra.mxu0 0.0
        %3235 = vmatprep.subr.mxu0 0.0
        %3236 = vmatpush1.msra.mxu0 0.0
        %3237 = vmatprep.subr.mxu0 0.0
        %3238 = vmatpush1.msra.mxu0 0.0
        %3239 = vmatprep.subr.mxu0 0.0
        %3240 = vmatpush1.msra.mxu0 0.0
        %3241 = vmatprep.subr.mxu0 0.0
        %3242 = vmatpush1.msra.mxu0 0.0
        %3243 = vmatprep.subr.mxu0 0.0
        %3244 = vmatpush1.msra.mxu0 0.0
        %3245 = vmatprep.subr.mxu0 0.0
        %3246 = vmatpush1.msra.mxu0 0.0
        %3247 = vmatprep.mubr.f32.mxu0 0.0
        %3248 = vmatmul.mubr.f32.gmra.mrb[0].mxu0 %v2621
        %v3249 = vpop.f32.mrb[0].mxu0
        %v3250 = vadd.f32 0.0, %v3249
        %v3251 = vpop.f32.mrb[0].mxu0
        %3252 = vdwg.mxu0
        %3253 = vmatprep.subr.mxu0 0.0
        %3254 = vmatpush1.msra.mxu0 %v2592
        %3255 = vmatprep.subr.mxu0 0.0
        %3256 = vmatpush1.msra.mxu0 %v2593
        %3257 = vmatprep.subr.mxu0 0.0
        %3258 = vmatpush1.msra.mxu0 %v2594
        %3259 = vmatprep.subr.mxu0 0.0
        %3260 = vmatpush1.msra.mxu0 %v2595
        %3261 = vmatprep.subr.mxu0 0.0
        %3262 = vmatpush1.msra.mxu0 0.0
        %3263 = vmatprep.subr.mxu0 0.0
        %3264 = vmatpush1.msra.mxu0 0.0
        %3265 = vmatprep.subr.mxu0 0.0
        %3266 = vmatpush1.msra.mxu0 0.0
        %3267 = vmatprep.subr.mxu0 0.0
        %3268 = vmatpush1.msra.mxu0 0.0
        %3269 = vmatprep.subr.mxu0 0.0
        %3270 = vmatpush1.msra.mxu0 0.0
        %3271 = vmatprep.subr.mxu0 0.0
        %3272 = vmatpush1.msra.mxu0 0.0
        %3273 = vmatprep.subr.mxu0 0.0
        %3274 = vmatpush1.msra.mxu0 0.0
        %3275 = vmatprep.subr.mxu0 0.0
        %3276 = vmatpush1.msra.mxu0 0.0
        %3277 = vmatprep.subr.mxu0 0.0
        %3278 = vmatpush1.msra.mxu0 0.0
        %3279 = vmatprep.subr.mxu0 0.0
        %3280 = vmatpush1.msra.mxu0 0.0
        %3281 = vmatprep.subr.mxu0 0.0
        %3282 = vmatpush1.msra.mxu0 0.0
        %3283 = vmatprep.subr.mxu0 0.0
        %3284 = vmatpush1.msra.mxu0 0.0
        %3285 = vmatprep.subr.mxu0 0.0
        %3286 = vmatpush1.msra.mxu0 0.0
        %3287 = vmatprep.subr.mxu0 0.0
        %3288 = vmatpush1.msra.mxu0 0.0
        %3289 = vmatprep.subr.mxu0 0.0
        %3290 = vmatpush1.msra.mxu0 0.0
        %3291 = vmatprep.subr.mxu0 0.0
        %3292 = vmatpush1.msra.mxu0 0.0
        %3293 = vmatprep.subr.mxu0 0.0
        %3294 = vmatpush1.msra.mxu0 0.0
        %3295 = vmatprep.subr.mxu0 0.0
        %3296 = vmatpush1.msra.mxu0 0.0
        %3297 = vmatprep.subr.mxu0 0.0
        %3298 = vmatpush1.msra.mxu0 0.0
        %3299 = vmatprep.subr.mxu0 0.0
        %3300 = vmatpush1.msra.mxu0 0.0
        %3301 = vmatprep.subr.mxu0 0.0
        %3302 = vmatpush1.msra.mxu0 0.0
        %3303 = vmatprep.subr.mxu0 0.0
        %3304 = vmatpush1.msra.mxu0 0.0
        %3305 = vmatprep.subr.mxu0 0.0
        %3306 = vmatpush1.msra.mxu0 0.0
        %3307 = vmatprep.subr.mxu0 0.0
        %3308 = vmatpush1.msra.mxu0 0.0
        %3309 = vmatprep.subr.mxu0 0.0
        %3310 = vmatpush1.msra.mxu0 0.0
        %3311 = vmatprep.subr.mxu0 0.0
        %3312 = vmatpush1.msra.mxu0 0.0
        %3313 = vmatprep.subr.mxu0 0.0
        %3314 = vmatpush1.msra.mxu0 0.0
        %3315 = vmatprep.subr.mxu0 0.0
        %3316 = vmatpush1.msra.mxu0 0.0
        %3317 = vmatprep.mubr.f32.mxu0 0.0
        %3318 = vmatmul.mubr.f32.gmra.mrb[0].mxu0 %v2621
        %v3319 = vpop.f32.mrb[0].mxu0
        %v3320 = vadd.f32 0.0, %v3319
        %v3321 = vpop.f32.mrb[0].mxu0
        %3322 = vdwg.mxu0
        %3323 = vmatprep.subr.mxu0 0.0
        %3324 = vmatpush1.msra.mxu0 %v2596
        %3325 = vmatprep.subr.mxu0 0.0
        %3326 = vmatpush1.msra.mxu0 %v2597
        %3327 = vmatprep.subr.mxu0 0.0
        %3328 = vmatpush1.msra.mxu0 %v2598
        %3329 = vmatprep.subr.mxu0 0.0
        %3330 = vmatpush1.msra.mxu0 %v2599
        %3331 = vmatprep.subr.mxu0 0.0
        %3332 = vmatpush1.msra.mxu0 0.0
        %3333 = vmatprep.subr.mxu0 0.0
        %3334 = vmatpush1.msra.mxu0 0.0
        %3335 = vmatprep.subr.mxu0 0.0
        %3336 = vmatpush1.msra.mxu0 0.0
        %3337 = vmatprep.subr.mxu0 0.0
        %3338 = vmatpush1.msra.mxu0 0.0
        %3339 = vmatprep.subr.mxu0 0.0
        %3340 = vmatpush1.msra.mxu0 0.0
        %3341 = vmatprep.subr.mxu0 0.0
        %3342 = vmatpush1.msra.mxu0 0.0
        %3343 = vmatprep.subr.mxu0 0.0
        %3344 = vmatpush1.msra.mxu0 0.0
        %3345 = vmatprep.subr.mxu0 0.0
        %3346 = vmatpush1.msra.mxu0 0.0
        %3347 = vmatprep.subr.mxu0 0.0
        %3348 = vmatpush1.msra.mxu0 0.0
        %3349 = vmatprep.subr.mxu0 0.0
        %3350 = vmatpush1.msra.mxu0 0.0
        %3351 = vmatprep.subr.mxu0 0.0
        %3352 = vmatpush1.msra.mxu0 0.0
        %3353 = vmatprep.subr.mxu0 0.0
        %3354 = vmatpush1.msra.mxu0 0.0
        %3355 = vmatprep.subr.mxu0 0.0
        %3356 = vmatpush1.msra.mxu0 0.0
        %3357 = vmatprep.subr.mxu0 0.0
        %3358 = vmatpush1.msra.mxu0 0.0
        %3359 = vmatprep.subr.mxu0 0.0
        %3360 = vmatpush1.msra.mxu0 0.0
        %3361 = vmatprep.subr.mxu0 0.0
        %3362 = vmatpush1.msra.mxu0 0.0
        %3363 = vmatprep.subr.mxu0 0.0
        %3364 = vmatpush1.msra.mxu0 0.0
        %3365 = vmatprep.subr.mxu0 0.0
        %3366 = vmatpush1.msra.mxu0 0.0
        %3367 = vmatprep.subr.mxu0 0.0
        %3368 = vmatpush1.msra.mxu0 0.0
        %3369 = vmatprep.subr.mxu0 0.0
        %3370 = vmatpush1.msra.mxu0 0.0
        %3371 = vmatprep.subr.mxu0 0.0
        %3372 = vmatpush1.msra.mxu0 0.0
        %3373 = vmatprep.subr.mxu0 0.0
        %3374 = vmatpush1.msra.mxu0 0.0
        %3375 = vmatprep.subr.mxu0 0.0
        %3376 = vmatpush1.msra.mxu0 0.0
        %3377 = vmatprep.subr.mxu0 0.0
        %3378 = vmatpush1.msra.mxu0 0.0
        %3379 = vmatprep.subr.mxu0 0.0
        %3380 = vmatpush1.msra.mxu0 0.0
        %3381 = vmatprep.subr.mxu0 0.0
        %3382 = vmatpush1.msra.mxu0 0.0
        %3383 = vmatprep.subr.mxu0 0.0
        %3384 = vmatpush1.msra.mxu0 0.0
        %3385 = vmatprep.subr.mxu0 0.0
        %3386 = vmatpush1.msra.mxu0 0.0
        %3387 = vmatprep.mubr.f32.mxu0 0.0
        %3388 = vmatmul.mubr.f32.gmra.mrb[0].mxu0 %v2621
        %v3389 = vpop.f32.mrb[0].mxu0
        %v3390 = vadd.f32 0.0, %v3389
        %v3391 = vpop.f32.mrb[0].mxu0
        %3392 = vdwg.mxu0
        %3393 = vmatprep.subr.mxu0 0.0
        %3394 = vmatpush1.msra.mxu0 %v2600
        %3395 = vmatprep.subr.mxu0 0.0
        %3396 = vmatpush1.msra.mxu0 %v2601
        %3397 = vmatprep.subr.mxu0 0.0
        %3398 = vmatpush1.msra.mxu0 %v2602
        %3399 = vmatprep.subr.mxu0 0.0
        %3400 = vmatpush1.msra.mxu0 %v2603
        %3401 = vmatprep.subr.mxu0 0.0
        %3402 = vmatpush1.msra.mxu0 0.0
        %3403 = vmatprep.subr.mxu0 0.0
        %3404 = vmatpush1.msra.mxu0 0.0
        %3405 = vmatprep.subr.mxu0 0.0
        %3406 = vmatpush1.msra.mxu0 0.0
        %3407 = vmatprep.subr.mxu0 0.0
        %3408 = vmatpush1.msra.mxu0 0.0
        %3409 = vmatprep.subr.mxu0 0.0
        %3410 = vmatpush1.msra.mxu0 0.0
        %3411 = vmatprep.subr.mxu0 0.0
        %3412 = vmatpush1.msra.mxu0 0.0
        %3413 = vmatprep.subr.mxu0 0.0
        %3414 = vmatpush1.msra.mxu0 0.0
        %3415 = vmatprep.subr.mxu0 0.0
        %3416 = vmatpush1.msra.mxu0 0.0
        %3417 = vmatprep.subr.mxu0 0.0
        %3418 = vmatpush1.msra.mxu0 0.0
        %3419 = vmatprep.subr.mxu0 0.0
        %3420 = vmatpush1.msra.mxu0 0.0
        %3421 = vmatprep.subr.mxu0 0.0
        %3422 = vmatpush1.msra.mxu0 0.0
        %3423 = vmatprep.subr.mxu0 0.0
        %3424 = vmatpush1.msra.mxu0 0.0
        %3425 = vmatprep.subr.mxu0 0.0
        %3426 = vmatpush1.msra.mxu0 0.0
        %3427 = vmatprep.subr.mxu0 0.0
        %3428 = vmatpush1.msra.mxu0 0.0
        %3429 = vmatprep.subr.mxu0 0.0
        %3430 = vmatpush1.msra.mxu0 0.0
        %3431 = vmatprep.subr.mxu0 0.0
        %3432 = vmatpush1.msra.mxu0 0.0
        %3433 = vmatprep.subr.mxu0 0.0
        %3434 = vmatpush1.msra.mxu0 0.0
        %3435 = vmatprep.subr.mxu0 0.0
        %3436 = vmatpush1.msra.mxu0 0.0
        %3437 = vmatprep.subr.mxu0 0.0
        %3438 = vmatpush1.msra.mxu0 0.0
        %3439 = vmatprep.subr.mxu0 0.0
        %3440 = vmatpush1.msra.mxu0 0.0
        %3441 = vmatprep.subr.mxu0 0.0
        %3442 = vmatpush1.msra.mxu0 0.0
        %3443 = vmatprep.subr.mxu0 0.0
        %3444 = vmatpush1.msra.mxu0 0.0
        %3445 = vmatprep.subr.mxu0 0.0
        %3446 = vmatpush1.msra.mxu0 0.0
        %3447 = vmatprep.subr.mxu0 0.0
        %3448 = vmatpush1.msra.mxu0 0.0
        %3449 = vmatprep.subr.mxu0 0.0
        %3450 = vmatpush1.msra.mxu0 0.0
        %3451 = vmatprep.subr.mxu0 0.0
        %3452 = vmatpush1.msra.mxu0 0.0
        %3453 = vmatprep.subr.mxu0 0.0
        %3454 = vmatpush1.msra.mxu0 0.0
        %3455 = vmatprep.subr.mxu0 0.0
        %3456 = vmatpush1.msra.mxu0 0.0
        %3457 = vmatprep.mubr.f32.mxu0 0.0
        %3458 = vmatmul.mubr.f32.gmra.mrb[0].mxu0 %v2621
        %v3459 = vpop.f32.mrb[0].mxu0
        %v3460 = vadd.f32 0.0, %v3459
        %v3461 = vpop.f32.mrb[0].mxu0
        %3462 = vdwg.mxu0
        %v3464 = vsel %vm1335, %v2690, 0
        %v3467 = vsel %vm1335, %v2970, 0
        %3469 = vmatprep.subr.mxu0 0.0
        %3470 = vmatpush1.xpose.msra.mxu0 %v3467
        %3471 = vmatprep.subr.mxu0 0.0
        %3472 = vmatpush1.xpose.msra.mxu0 0.0
        %3473 = vmatprep.subr.mxu0 0.0
        %3474 = vmatpush1.xpose.msra.mxu0 0.0
        %3475 = vmatprep.subr.mxu0 0.0
        %3476 = vmatpush1.xpose.msra.mxu0 0.0
        %3477 = vmatprep.subr.mxu0 0.0
        %3478 = vmatpush1.xpose.msra.mxu0 0.0
        %3479 = vmatprep.subr.mxu0 0.0
        %3480 = vmatpush1.xpose.msra.mxu0 0.0
        %3481 = vmatprep.subr.mxu0 0.0
        %3482 = vmatpush1.xpose.msra.mxu0 0.0
        %3483 = vmatprep.subr.mxu0 0.0
        %3484 = vmatpush1.xpose.msra.mxu0 0.0
        %3485 = vmatprep.subr.mxu0 0.0
        %3486 = vmatpush1.xpose.msra.mxu0 0.0
        %3487 = vmatprep.subr.mxu0 0.0
        %3488 = vmatpush1.xpose.msra.mxu0 0.0
        %3489 = vmatprep.subr.mxu0 0.0
        %3490 = vmatpush1.xpose.msra.mxu0 0.0
        %3491 = vmatprep.subr.mxu0 0.0
        %3492 = vmatpush1.xpose.msra.mxu0 0.0
        %3493 = vmatprep.subr.mxu0 0.0
        %3494 = vmatpush1.xpose.msra.mxu0 0.0
        %3495 = vmatprep.subr.mxu0 0.0
        %3496 = vmatpush1.xpose.msra.mxu0 0.0
        %3497 = vmatprep.subr.mxu0 0.0
        %3498 = vmatpush1.xpose.msra.mxu0 0.0
        %3499 = vmatprep.subr.mxu0 0.0
        %3500 = vmatpush1.xpose.msra.mxu0 0.0
        %3501 = vmatprep.subr.mxu0 0.0
        %3502 = vmatpush1.xpose.msra.mxu0 0.0
        %3503 = vmatprep.subr.mxu0 0.0
        %3504 = vmatpush1.xpose.msra.mxu0 0.0
        %3505 = vmatprep.subr.mxu0 0.0
        %3506 = vmatpush1.xpose.msra.mxu0 0.0
        %3507 = vmatprep.subr.mxu0 0.0
        %3508 = vmatpush1.xpose.msra.mxu0 0.0
        %3509 = vmatprep.subr.mxu0 0.0
        %3510 = vmatpush1.xpose.msra.mxu0 0.0
        %3511 = vmatprep.subr.mxu0 0.0
        %3512 = vmatpush1.xpose.msra.mxu0 0.0
        %3513 = vmatprep.subr.mxu0 0.0
        %3514 = vmatpush1.xpose.msra.mxu0 0.0
        %3515 = vmatprep.subr.mxu0 0.0
        %3516 = vmatpush1.xpose.msra.mxu0 0.0
        %3517 = vmatprep.subr.mxu0 0.0
        %3518 = vmatpush1.xpose.msra.mxu0 0.0
        %3519 = vmatprep.subr.mxu0 0.0
        %3520 = vmatpush1.xpose.msra.mxu0 0.0
        %3521 = vmatprep.subr.mxu0 0.0
        %3522 = vmatpush1.xpose.msra.mxu0 0.0
        %3523 = vmatprep.subr.mxu0 0.0
        %3524 = vmatpush1.xpose.msra.mxu0 0.0
        %3525 = vmatprep.subr.mxu0 0.0
        %3526 = vmatpush1.xpose.msra.mxu0 0.0
        %3527 = vmatprep.subr.mxu0 0.0
        %3528 = vmatpush1.xpose.msra.mxu0 0.0
        %3529 = vmatprep.subr.mxu0 0.0
        %3530 = vmatpush1.xpose.msra.mxu0 0.0
        %3531 = vmatprep.subr.mxu0 0.0
        %3532 = vmatpush1.xpose.msra.mxu0 0.0
        %3533 = vmatprep.mubr.f32.mxu0 0.0
        %3534 = vmatmul.mubr.f32.gmra.mrb[0].mxu0 %v3464
        %v3535 = vpop.f32.mrb[0].mxu0
        %v3536 = vadd.f32 0.0, %v3535
        %v3537 = vpop.f32.mrb[0].mxu0
        %3538 = vdwg.mxu0
        %v3540 = vsel %vm1335, %v2760, 0
        %v3543 = vsel %vm1335, %v3040, 0
        %3545 = vmatprep.subr.mxu0 0.0
        %3546 = vmatpush1.xpose.msra.mxu0 %v3543
        %3547 = vmatprep.subr.mxu0 0.0
        %3548 = vmatpush1.xpose.msra.mxu0 0.0
        %3549 = vmatprep.subr.mxu0 0.0
        %3550 = vmatpush1.xpose.msra.mxu0 0.0
        %3551 = vmatprep.subr.mxu0 0.0
        %3552 = vmatpush1.xpose.msra.mxu0 0.0
        %3553 = vmatprep.subr.mxu0 0.0
        %3554 = vmatpush1.xpose.msra.mxu0 0.0
        %3555 = vmatprep.subr.mxu0 0.0
        %3556 = vmatpush1.xpose.msra.mxu0 0.0
        %3557 = vmatprep.subr.mxu0 0.0
        %3558 = vmatpush1.xpose.msra.mxu0 0.0
        %3559 = vmatprep.subr.mxu0 0.0
        %3560 = vmatpush1.xpose.msra.mxu0 0.0
        %3561 = vmatprep.subr.mxu0 0.0
        %3562 = vmatpush1.xpose.msra.mxu0 0.0
        %3563 = vmatprep.subr.mxu0 0.0
        %3564 = vmatpush1.xpose.msra.mxu0 0.0
        %3565 = vmatprep.subr.mxu0 0.0
        %3566 = vmatpush1.xpose.msra.mxu0 0.0
        %3567 = vmatprep.subr.mxu0 0.0
        %3568 = vmatpush1.xpose.msra.mxu0 0.0
        %3569 = vmatprep.subr.mxu0 0.0
        %3570 = vmatpush1.xpose.msra.mxu0 0.0
        %3571 = vmatprep.subr.mxu0 0.0
        %3572 = vmatpush1.xpose.msra.mxu0 0.0
        %3573 = vmatprep.subr.mxu0 0.0
        %3574 = vmatpush1.xpose.msra.mxu0 0.0
        %3575 = vmatprep.subr.mxu0 0.0
        %3576 = vmatpush1.xpose.msra.mxu0 0.0
        %3577 = vmatprep.subr.mxu0 0.0
        %3578 = vmatpush1.xpose.msra.mxu0 0.0
        %3579 = vmatprep.subr.mxu0 0.0
        %3580 = vmatpush1.xpose.msra.mxu0 0.0
        %3581 = vmatprep.subr.mxu0 0.0
        %3582 = vmatpush1.xpose.msra.mxu0 0.0
        %3583 = vmatprep.subr.mxu0 0.0
        %3584 = vmatpush1.xpose.msra.mxu0 0.0
        %3585 = vmatprep.subr.mxu0 0.0
        %3586 = vmatpush1.xpose.msra.mxu0 0.0
        %3587 = vmatprep.subr.mxu0 0.0
        %3588 = vmatpush1.xpose.msra.mxu0 0.0
        %3589 = vmatprep.subr.mxu0 0.0
        %3590 = vmatpush1.xpose.msra.mxu0 0.0
        %3591 = vmatprep.subr.mxu0 0.0
        %3592 = vmatpush1.xpose.msra.mxu0 0.0
        %3593 = vmatprep.subr.mxu0 0.0
        %3594 = vmatpush1.xpose.msra.mxu0 0.0
        %3595 = vmatprep.subr.mxu0 0.0
        %3596 = vmatpush1.xpose.msra.mxu0 0.0
        %3597 = vmatprep.subr.mxu0 0.0
        %3598 = vmatpush1.xpose.msra.mxu0 0.0
        %3599 = vmatprep.subr.mxu0 0.0
        %3600 = vmatpush1.xpose.msra.mxu0 0.0
        %3601 = vmatprep.subr.mxu0 0.0
        %3602 = vmatpush1.xpose.msra.mxu0 0.0
        %3603 = vmatprep.subr.mxu0 0.0
        %3604 = vmatpush1.xpose.msra.mxu0 0.0
        %3605 = vmatprep.subr.mxu0 0.0
        %3606 = vmatpush1.xpose.msra.mxu0 0.0
        %3607 = vmatprep.subr.mxu0 0.0
        %3608 = vmatpush1.xpose.msra.mxu0 0.0
        %3609 = vmatprep.mubr.f32.mxu0 0.0
        %3610 = vmatmul.mubr.f32.gmra.mrb[0].mxu0 %v3540
        %v3611 = vpop.f32.mrb[0].mxu0
        %v3612 = vadd.f32 0.0, %v3611
        %v3613 = vpop.f32.mrb[0].mxu0
        %3614 = vdwg.mxu0
        %v3616 = vsel %vm1335, %v2830, 0
        %v3619 = vsel %vm1335, %v3110, 0
        %3621 = vmatprep.subr.mxu0 0.0
        %3622 = vmatpush1.xpose.msra.mxu0 %v3619
        %3623 = vmatprep.subr.mxu0 0.0
        %3624 = vmatpush1.xpose.msra.mxu0 0.0
        %3625 = vmatprep.subr.mxu0 0.0
        %3626 = vmatpush1.xpose.msra.mxu0 0.0
        %3627 = vmatprep.subr.mxu0 0.0
        %3628 = vmatpush1.xpose.msra.mxu0 0.0
        %3629 = vmatprep.subr.mxu0 0.0
        %3630 = vmatpush1.xpose.msra.mxu0 0.0
        %3631 = vmatprep.subr.mxu0 0.0
        %3632 = vmatpush1.xpose.msra.mxu0 0.0
        %3633 = vmatprep.subr.mxu0 0.0
        %3634 = vmatpush1.xpose.msra.mxu0 0.0
        %3635 = vmatprep.subr.mxu0 0.0
        %3636 = vmatpush1.xpose.msra.mxu0 0.0
        %3637 = vmatprep.subr.mxu0 0.0
        %3638 = vmatpush1.xpose.msra.mxu0 0.0
        %3639 = vmatprep.subr.mxu0 0.0
        %3640 = vmatpush1.xpose.msra.mxu0 0.0
        %3641 = vmatprep.subr.mxu0 0.0
        %3642 = vmatpush1.xpose.msra.mxu0 0.0
        %3643 = vmatprep.subr.mxu0 0.0
        %3644 = vmatpush1.xpose.msra.mxu0 0.0
        %3645 = vmatprep.subr.mxu0 0.0
        %3646 = vmatpush1.xpose.msra.mxu0 0.0
        %3647 = vmatprep.subr.mxu0 0.0
        %3648 = vmatpush1.xpose.msra.mxu0 0.0
        %3649 = vmatprep.subr.mxu0 0.0
        %3650 = vmatpush1.xpose.msra.mxu0 0.0
        %3651 = vmatprep.subr.mxu0 0.0
        %3652 = vmatpush1.xpose.msra.mxu0 0.0
        %3653 = vmatprep.subr.mxu0 0.0
        %3654 = vmatpush1.xpose.msra.mxu0 0.0
        %3655 = vmatprep.subr.mxu0 0.0
        %3656 = vmatpush1.xpose.msra.mxu0 0.0
        %3657 = vmatprep.subr.mxu0 0.0
        %3658 = vmatpush1.xpose.msra.mxu0 0.0
        %3659 = vmatprep.subr.mxu0 0.0
        %3660 = vmatpush1.xpose.msra.mxu0 0.0
        %3661 = vmatprep.subr.mxu0 0.0
        %3662 = vmatpush1.xpose.msra.mxu0 0.0
        %3663 = vmatprep.subr.mxu0 0.0
        %3664 = vmatpush1.xpose.msra.mxu0 0.0
        %3665 = vmatprep.subr.mxu0 0.0
        %3666 = vmatpush1.xpose.msra.mxu0 0.0
        %3667 = vmatprep.subr.mxu0 0.0
        %3668 = vmatpush1.xpose.msra.mxu0 0.0
        %3669 = vmatprep.subr.mxu0 0.0
        %3670 = vmatpush1.xpose.msra.mxu0 0.0
        %3671 = vmatprep.subr.mxu0 0.0
        %3672 = vmatpush1.xpose.msra.mxu0 0.0
        %3673 = vmatprep.subr.mxu0 0.0
        %3674 = vmatpush1.xpose.msra.mxu0 0.0
        %3675 = vmatprep.subr.mxu0 0.0
        %3676 = vmatpush1.xpose.msra.mxu0 0.0
        %3677 = vmatprep.subr.mxu0 0.0
        %3678 = vmatpush1.xpose.msra.mxu0 0.0
        %3679 = vmatprep.subr.mxu0 0.0
        %3680 = vmatpush1.xpose.msra.mxu0 0.0
        %3681 = vmatprep.subr.mxu0 0.0
        %3682 = vmatpush1.xpose.msra.mxu0 0.0
        %3683 = vmatprep.subr.mxu0 0.0
        %3684 = vmatpush1.xpose.msra.mxu0 0.0
        %3685 = vmatprep.mubr.f32.mxu0 0.0
        %3686 = vmatmul.mubr.f32.gmra.mrb[0].mxu0 %v3616
        %v3687 = vpop.f32.mrb[0].mxu0
        %v3688 = vadd.f32 0.0, %v3687
        %v3689 = vpop.f32.mrb[0].mxu0
        %3690 = vdwg.mxu0
        %v3692 = vsel %vm1335, %v2900, 0
        %v3695 = vsel %vm1335, %v3180, 0
        %3697 = vmatprep.subr.mxu0 0.0
        %3698 = vmatpush1.xpose.msra.mxu0 %v3695
        %3699 = vmatprep.subr.mxu0 0.0
        %3700 = vmatpush1.xpose.msra.mxu0 0.0
        %3701 = vmatprep.subr.mxu0 0.0
        %3702 = vmatpush1.xpose.msra.mxu0 0.0
        %3703 = vmatprep.subr.mxu0 0.0
        %3704 = vmatpush1.xpose.msra.mxu0 0.0
        %3705 = vmatprep.subr.mxu0 0.0
        %3706 = vmatpush1.xpose.msra.mxu0 0.0
        %3707 = vmatprep.subr.mxu0 0.0
        %3708 = vmatpush1.xpose.msra.mxu0 0.0
        %3709 = vmatprep.subr.mxu0 0.0
        %3710 = vmatpush1.xpose.msra.mxu0 0.0
        %3711 = vmatprep.subr.mxu0 0.0
        %3712 = vmatpush1.xpose.msra.mxu0 0.0
        %3713 = vmatprep.subr.mxu0 0.0
        %3714 = vmatpush1.xpose.msra.mxu0 0.0
        %3715 = vmatprep.subr.mxu0 0.0
        %3716 = vmatpush1.xpose.msra.mxu0 0.0
        %3717 = vmatprep.subr.mxu0 0.0
        %3718 = vmatpush1.xpose.msra.mxu0 0.0
        %3719 = vmatprep.subr.mxu0 0.0
        %3720 = vmatpush1.xpose.msra.mxu0 0.0
        %3721 = vmatprep.subr.mxu0 0.0
        %3722 = vmatpush1.xpose.msra.mxu0 0.0
        %3723 = vmatprep.subr.mxu0 0.0
        %3724 = vmatpush1.xpose.msra.mxu0 0.0
        %3725 = vmatprep.subr.mxu0 0.0
        %3726 = vmatpush1.xpose.msra.mxu0 0.0
        %3727 = vmatprep.subr.mxu0 0.0
        %3728 = vmatpush1.xpose.msra.mxu0 0.0
        %3729 = vmatprep.subr.mxu0 0.0
        %3730 = vmatpush1.xpose.msra.mxu0 0.0
        %3731 = vmatprep.subr.mxu0 0.0
        %3732 = vmatpush1.xpose.msra.mxu0 0.0
        %3733 = vmatprep.subr.mxu0 0.0
        %3734 = vmatpush1.xpose.msra.mxu0 0.0
        %3735 = vmatprep.subr.mxu0 0.0
        %3736 = vmatpush1.xpose.msra.mxu0 0.0
        %3737 = vmatprep.subr.mxu0 0.0
        %3738 = vmatpush1.xpose.msra.mxu0 0.0
        %3739 = vmatprep.subr.mxu0 0.0
        %3740 = vmatpush1.xpose.msra.mxu0 0.0
        %3741 = vmatprep.subr.mxu0 0.0
        %3742 = vmatpush1.xpose.msra.mxu0 0.0
        %3743 = vmatprep.subr.mxu0 0.0
        %3744 = vmatpush1.xpose.msra.mxu0 0.0
        %3745 = vmatprep.subr.mxu0 0.0
        %3746 = vmatpush1.xpose.msra.mxu0 0.0
        %3747 = vmatprep.subr.mxu0 0.0
        %3748 = vmatpush1.xpose.msra.mxu0 0.0
        %3749 = vmatprep.subr.mxu0 0.0
        %3750 = vmatpush1.xpose.msra.mxu0 0.0
        %3751 = vmatprep.subr.mxu0 0.0
        %3752 = vmatpush1.xpose.msra.mxu0 0.0
        %3753 = vmatprep.subr.mxu0 0.0
        %3754 = vmatpush1.xpose.msra.mxu0 0.0
        %3755 = vmatprep.subr.mxu0 0.0
        %3756 = vmatpush1.xpose.msra.mxu0 0.0
        %3757 = vmatprep.subr.mxu0 0.0
        %3758 = vmatpush1.xpose.msra.mxu0 0.0
        %3759 = vmatprep.subr.mxu0 0.0
        %3760 = vmatpush1.xpose.msra.mxu0 0.0
        %3761 = vmatprep.mubr.f32.mxu0 0.0
        %3762 = vmatmul.mubr.f32.gmra.mrb[0].mxu0 %v3692
        %v3763 = vpop.f32.mrb[0].mxu0
        %v3764 = vadd.f32 0.0, %v3763
        %v3765 = vpop.f32.mrb[0].mxu0
        %3766 = vdwg.mxu0
        %v3767 = vsel %vm1641, %v3536, -1e+30
        %v3768 = vsel %vm1641, %v3612, -1e+30
        %v3769 = vsel %vm1641, %v3688, -1e+30
        %v3770 = vsel %vm1641, %v3764, -1e+30
        %v3771 = vsel %vm1335, %v3767, -inf
        %3772 = vmax.xlane.f32.xlu0 %v3771
        %v3773 = vpop.xlane.xlu0 %3772
        %v3774 = vsel %vm1335, %v3768, -inf
        %3775 = vmax.xlane.f32.xlu0 %v3774
        %v3776 = vpop.xlane.xlu0 %3775
        %v3777 = vsel %vm1335, %v3769, -inf
        %3778 = vmax.xlane.f32.xlu0 %v3777
        %v3779 = vpop.xlane.xlu0 %3778
        %v3780 = vsel %vm1335, %v3770, -inf
        %3781 = vmax.xlane.f32.xlu0 %v3780
        %v3782 = vpop.xlane.xlu0 %3781
        %v3783 = vsub.f32 %v3767, %v3773
        %v3784 = vsub.f32 %v3768, %v3776
        %v3785 = vsub.f32 %v3769, %v3779
        %v3786 = vsub.f32 %v3770, %v3782
        %v3787 = vmul.f32 %v3783, 1.442695
        %v3788 = vpow.pop %v3787
        %v3789 = vmul.f32 %v3784, 1.442695
        %v3790 = vpow.pop %v3789
        %v3791 = vmul.f32 %v3785, 1.442695
        %v3792 = vpow.pop %v3791
        %v3793 = vmul.f32 %v3786, 1.442695
        %v3794 = vpow.pop %v3793
        %v3795 = vsel %vm1335, %v3788, 0.0
        %3796 = vadd.xlane.f32.xlu0 %v3795
        %v3797 = vpop.xlane.xlu0 %3796
        %v3798 = vsel %vm1335, %v3790, 0.0
        %3799 = vadd.xlane.f32.xlu0 %v3798
        %v3800 = vpop.xlane.xlu0 %3799
        %v3801 = vsel %vm1335, %v3792, 0.0
        %3802 = vadd.xlane.f32.xlu0 %v3801
        %v3803 = vpop.xlane.xlu0 %3802
        %v3804 = vsel %vm1335, %v3794, 0.0
        %3805 = vadd.xlane.f32.xlu0 %v3804
        %v3806 = vpop.xlane.xlu0 %3805
        %v3807 = vrcp.pop %v3797
        %v3808 = vrcp.pop %v3800
        %v3809 = vrcp.pop %v3803
        %v3810 = vrcp.pop %v3806
        %v3811 = vmul.f32 %v3788, %v3807
        %v3812 = vmul.f32 %v3790, %v3808
        %v3813 = vmul.f32 %v3792, %v3809
        %v3814 = vmul.f32 %v3794, %v3810
        %v3816 = vsel %vm1335, %v3811, 0
        %3818 = vmatprep.subr.mxu0 0.0
        %3819 = vmatpush1.msra.mxu0 %v3250
        %3820 = vmatprep.subr.mxu0 0.0
        %3821 = vmatpush1.msra.mxu0 0.0
        %3822 = vmatprep.subr.mxu0 0.0
        %3823 = vmatpush1.msra.mxu0 0.0
        %3824 = vmatprep.subr.mxu0 0.0
        %3825 = vmatpush1.msra.mxu0 0.0
        %3826 = vmatprep.subr.mxu0 0.0
        %3827 = vmatpush1.msra.mxu0 0.0
        %3828 = vmatprep.subr.mxu0 0.0
        %3829 = vmatpush1.msra.mxu0 0.0
        %3830 = vmatprep.subr.mxu0 0.0
        %3831 = vmatpush1.msra.mxu0 0.0
        %3832 = vmatprep.subr.mxu0 0.0
        %3833 = vmatpush1.msra.mxu0 0.0
        %3834 = vmatprep.subr.mxu0 0.0
        %3835 = vmatpush1.msra.mxu0 0.0
        %3836 = vmatprep.subr.mxu0 0.0
        %3837 = vmatpush1.msra.mxu0 0.0
        %3838 = vmatprep.subr.mxu0 0.0
        %3839 = vmatpush1.msra.mxu0 0.0
        %3840 = vmatprep.subr.mxu0 0.0
        %3841 = vmatpush1.msra.mxu0 0.0
        %3842 = vmatprep.subr.mxu0 0.0
        %3843 = vmatpush1.msra.mxu0 0.0
        %3844 = vmatprep.subr.mxu0 0.0
        %3845 = vmatpush1.msra.mxu0 0.0
        %3846 = vmatprep.subr.mxu0 0.0
        %3847 = vmatpush1.msra.mxu0 0.0
        %3848 = vmatprep.subr.mxu0 0.0
        %3849 = vmatpush1.msra.mxu0 0.0
        %3850 = vmatprep.subr.mxu0 0.0
        %3851 = vmatpush1.msra.mxu0 0.0
        %3852 = vmatprep.subr.mxu0 0.0
        %3853 = vmatpush1.msra.mxu0 0.0
        %3854 = vmatprep.subr.mxu0 0.0
        %3855 = vmatpush1.msra.mxu0 0.0
        %3856 = vmatprep.subr.mxu0 0.0
        %3857 = vmatpush1.msra.mxu0 0.0
        %3858 = vmatprep.subr.mxu0 0.0
        %3859 = vmatpush1.msra.mxu0 0.0
        %3860 = vmatprep.subr.mxu0 0.0
        %3861 = vmatpush1.msra.mxu0 0.0
        %3862 = vmatprep.subr.mxu0 0.0
        %3863 = vmatpush1.msra.mxu0 0.0
        %3864 = vmatprep.subr.mxu0 0.0
        %3865 = vmatpush1.msra.mxu0 0.0
        %3866 = vmatprep.subr.mxu0 0.0
        %3867 = vmatpush1.msra.mxu0 0.0
        %3868 = vmatprep.subr.mxu0 0.0
        %3869 = vmatpush1.msra.mxu0 0.0
        %3870 = vmatprep.subr.mxu0 0.0
        %3871 = vmatpush1.msra.mxu0 0.0
        %3872 = vmatprep.subr.mxu0 0.0
        %3873 = vmatpush1.msra.mxu0 0.0
        %3874 = vmatprep.subr.mxu0 0.0
        %3875 = vmatpush1.msra.mxu0 0.0
        %3876 = vmatprep.subr.mxu0 0.0
        %3877 = vmatpush1.msra.mxu0 0.0
        %3878 = vmatprep.subr.mxu0 0.0
        %3879 = vmatpush1.msra.mxu0 0.0
        %3880 = vmatprep.subr.mxu0 0.0
        %3881 = vmatpush1.msra.mxu0 0.0
        %3882 = vmatprep.mubr.f32.mxu0 0.0
        %3883 = vmatmul.mubr.f32.gmra.mrb[0].mxu0 %v3816
        %v3884 = vpop.f32.mrb[0].mxu0
        %v3885 = vadd.f32 0.0, %v3884
        %v3886 = vpop.f32.mrb[0].mxu0
        %3887 = vdwg.mxu0
        %v3889 = vsel %vm1335, %v3812, 0
        %3891 = vmatprep.subr.mxu0 0.0
        %3892 = vmatpush1.msra.mxu0 %v3320
        %3893 = vmatprep.subr.mxu0 0.0
        %3894 = vmatpush1.msra.mxu0 0.0
        %3895 = vmatprep.subr.mxu0 0.0
        %3896 = vmatpush1.msra.mxu0 0.0
        %3897 = vmatprep.subr.mxu0 0.0
        %3898 = vmatpush1.msra.mxu0 0.0
        %3899 = vmatprep.subr.mxu0 0.0
        %3900 = vmatpush1.msra.mxu0 0.0
        %3901 = vmatprep.subr.mxu0 0.0
        %3902 = vmatpush1.msra.mxu0 0.0
        %3903 = vmatprep.subr.mxu0 0.0
        %3904 = vmatpush1.msra.mxu0 0.0
        %3905 = vmatprep.subr.mxu0 0.0
        %3906 = vmatpush1.msra.mxu0 0.0
        %3907 = vmatprep.subr.mxu0 0.0
        %3908 = vmatpush1.msra.mxu0 0.0
        %3909 = vmatprep.subr.mxu0 0.0
        %3910 = vmatpush1.msra.mxu0 0.0
        %3911 = vmatprep.subr.mxu0 0.0
        %3912 = vmatpush1.msra.mxu0 0.0
        %3913 = vmatprep.subr.mxu0 0.0
        %3914 = vmatpush1.msra.mxu0 0.0
        %3915 = vmatprep.subr.mxu0 0.0
        %3916 = vmatpush1.msra.mxu0 0.0
        %3917 = vmatprep.subr.mxu0 0.0
        %3918 = vmatpush1.msra.mxu0 0.0
        %3919 = vmatprep.subr.mxu0 0.0
        %3920 = vmatpush1.msra.mxu0 0.0
        %3921 = vmatprep.subr.mxu0 0.0
        %3922 = vmatpush1.msra.mxu0 0.0
        %3923 = vmatprep.subr.mxu0 0.0
        %3924 = vmatpush1.msra.mxu0 0.0
        %3925 = vmatprep.subr.mxu0 0.0
        %3926 = vmatpush1.msra.mxu0 0.0
        %3927 = vmatprep.subr.mxu0 0.0
        %3928 = vmatpush1.msra.mxu0 0.0
        %3929 = vmatprep.subr.mxu0 0.0
        %3930 = vmatpush1.msra.mxu0 0.0
        %3931 = vmatprep.subr.mxu0 0.0
        %3932 = vmatpush1.msra.mxu0 0.0
        %3933 = vmatprep.subr.mxu0 0.0
        %3934 = vmatpush1.msra.mxu0 0.0
        %3935 = vmatprep.subr.mxu0 0.0
        %3936 = vmatpush1.msra.mxu0 0.0
        %3937 = vmatprep.subr.mxu0 0.0
        %3938 = vmatpush1.msra.mxu0 0.0
        %3939 = vmatprep.subr.mxu0 0.0
        %3940 = vmatpush1.msra.mxu0 0.0
        %3941 = vmatprep.subr.mxu0 0.0
        %3942 = vmatpush1.msra.mxu0 0.0
        %3943 = vmatprep.subr.mxu0 0.0
        %3944 = vmatpush1.msra.mxu0 0.0
        %3945 = vmatprep.subr.mxu0 0.0
        %3946 = vmatpush1.msra.mxu0 0.0
        %3947 = vmatprep.subr.mxu0 0.0
        %3948 = vmatpush1.msra.mxu0 0.0
        %3949 = vmatprep.subr.mxu0 0.0
        %3950 = vmatpush1.msra.mxu0 0.0
        %3951 = vmatprep.subr.mxu0 0.0
        %3952 = vmatpush1.msra.mxu0 0.0
        %3953 = vmatprep.subr.mxu0 0.0
        %3954 = vmatpush1.msra.mxu0 0.0
        %3955 = vmatprep.mubr.f32.mxu0 0.0
        %3956 = vmatmul.mubr.f32.gmra.mrb[0].mxu0 %v3889
        %v3957 = vpop.f32.mrb[0].mxu0
        %v3958 = vadd.f32 0.0, %v3957
        %v3959 = vpop.f32.mrb[0].mxu0
        %3960 = vdwg.mxu0
        %v3962 = vsel %vm1335, %v3813, 0
        %3964 = vmatprep.subr.mxu0 0.0
        %3965 = vmatpush1.msra.mxu0 %v3390
        %3966 = vmatprep.subr.mxu0 0.0
        %3967 = vmatpush1.msra.mxu0 0.0
        %3968 = vmatprep.subr.mxu0 0.0
        %3969 = vmatpush1.msra.mxu0 0.0
        %3970 = vmatprep.subr.mxu0 0.0
        %3971 = vmatpush1.msra.mxu0 0.0
        %3972 = vmatprep.subr.mxu0 0.0
        %3973 = vmatpush1.msra.mxu0 0.0
        %3974 = vmatprep.subr.mxu0 0.0
        %3975 = vmatpush1.msra.mxu0 0.0
        %3976 = vmatprep.subr.mxu0 0.0
        %3977 = vmatpush1.msra.mxu0 0.0
        %3978 = vmatprep.subr.mxu0 0.0
        %3979 = vmatpush1.msra.mxu0 0.0
        %3980 = vmatprep.subr.mxu0 0.0
        %3981 = vmatpush1.msra.mxu0 0.0
        %3982 = vmatprep.subr.mxu0 0.0
        %3983 = vmatpush1.msra.mxu0 0.0
        %3984 = vmatprep.subr.mxu0 0.0
        %3985 = vmatpush1.msra.mxu0 0.0
        %3986 = vmatprep.subr.mxu0 0.0
        %3987 = vmatpush1.msra.mxu0 0.0
        %3988 = vmatprep.subr.mxu0 0.0
        %3989 = vmatpush1.msra.mxu0 0.0
        %3990 = vmatprep.subr.mxu0 0.0
        %3991 = vmatpush1.msra.mxu0 0.0
        %3992 = vmatprep.subr.mxu0 0.0
        %3993 = vmatpush1.msra.mxu0 0.0
        %3994 = vmatprep.subr.mxu0 0.0
        %3995 = vmatpush1.msra.mxu0 0.0
        %3996 = vmatprep.subr.mxu0 0.0
        %3997 = vmatpush1.msra.mxu0 0.0
        %3998 = vmatprep.subr.mxu0 0.0
        %3999 = vmatpush1.msra.mxu0 0.0
        %4000 = vmatprep.subr.mxu0 0.0
        %4001 = vmatpush1.msra.mxu0 0.0
        %4002 = vmatprep.subr.mxu0 0.0
        %4003 = vmatpush1.msra.mxu0 0.0
        %4004 = vmatprep.subr.mxu0 0.0
        %4005 = vmatpush1.msra.mxu0 0.0
        %4006 = vmatprep.subr.mxu0 0.0
        %4007 = vmatpush1.msra.mxu0 0.0
        %4008 = vmatprep.subr.mxu0 0.0
        %4009 = vmatpush1.msra.mxu0 0.0
        %4010 = vmatprep.subr.mxu0 0.0
        %4011 = vmatpush1.msra.mxu0 0.0
        %4012 = vmatprep.subr.mxu0 0.0
        %4013 = vmatpush1.msra.mxu0 0.0
        %4014 = vmatprep.subr.mxu0 0.0
        %4015 = vmatpush1.msra.mxu0 0.0
        %4016 = vmatprep.subr.mxu0 0.0
        %4017 = vmatpush1.msra.mxu0 0.0
        %4018 = vmatprep.subr.mxu0 0.0
        %4019 = vmatpush1.msra.mxu0 0.0
        %4020 = vmatprep.subr.mxu0 0.0
        %4021 = vmatpush1.msra.mxu0 0.0
        %4022 = vmatprep.subr.mxu0 0.0
        %4023 = vmatpush1.msra.mxu0 0.0
        %4024 = vmatprep.subr.mxu0 0.0
        %4025 = vmatpush1.msra.mxu0 0.0
        %4026 = vmatprep.subr.mxu0 0.0
        %4027 = vmatpush1.msra.mxu0 0.0
        %4028 = vmatprep.mubr.f32.mxu0 0.0
        %4029 = vmatmul.mubr.f32.gmra.mrb[0].mxu0 %v3962
        %v4030 = vpop.f32.mrb[0].mxu0
        %v4031 = vadd.f32 0.0, %v4030
        %v4032 = vpop.f32.mrb[0].mxu0
        %4033 = vdwg.mxu0
        %v4035 = vsel %vm1335, %v3814, 0
        %4037 = vmatprep.subr.mxu0 0.0
        %4038 = vmatpush1.msra.mxu0 %v3460
        %4039 = vmatprep.subr.mxu0 0.0
        %4040 = vmatpush1.msra.mxu0 0.0
        %4041 = vmatprep.subr.mxu0 0.0
        %4042 = vmatpush1.msra.mxu0 0.0
        %4043 = vmatprep.subr.mxu0 0.0
        %4044 = vmatpush1.msra.mxu0 0.0
        %4045 = vmatprep.subr.mxu0 0.0
        %4046 = vmatpush1.msra.mxu0 0.0
        %4047 = vmatprep.subr.mxu0 0.0
        %4048 = vmatpush1.msra.mxu0 0.0
        %4049 = vmatprep.subr.mxu0 0.0
        %4050 = vmatpush1.msra.mxu0 0.0
        %4051 = vmatprep.subr.mxu0 0.0
        %4052 = vmatpush1.msra.mxu0 0.0
        %4053 = vmatprep.subr.mxu0 0.0
        %4054 = vmatpush1.msra.mxu0 0.0
        %4055 = vmatprep.subr.mxu0 0.0
        %4056 = vmatpush1.msra.mxu0 0.0
        %4057 = vmatprep.subr.mxu0 0.0
        %4058 = vmatpush1.msra.mxu0 0.0
        %4059 = vmatprep.subr.mxu0 0.0
        %4060 = vmatpush1.msra.mxu0 0.0
        %4061 = vmatprep.subr.mxu0 0.0
        %4062 = vmatpush1.msra.mxu0 0.0
        %4063 = vmatprep.subr.mxu0 0.0
        %4064 = vmatpush1.msra.mxu0 0.0
        %4065 = vmatprep.subr.mxu0 0.0
        %4066 = vmatpush1.msra.mxu0 0.0
        %4067 = vmatprep.subr.mxu0 0.0
        %4068 = vmatpush1.msra.mxu0 0.0
        %4069 = vmatprep.subr.mxu0 0.0
        %4070 = vmatpush1.msra.mxu0 0.0
        %4071 = vmatprep.subr.mxu0 0.0
        %4072 = vmatpush1.msra.mxu0 0.0
        %4073 = vmatprep.subr.mxu0 0.0
        %4074 = vmatpush1.msra.mxu0 0.0
        %4075 = vmatprep.subr.mxu0 0.0
        %4076 = vmatpush1.msra.mxu0 0.0
        %4077 = vmatprep.subr.mxu0 0.0
        %4078 = vmatpush1.msra.mxu0 0.0
        %4079 = vmatprep.subr.mxu0 0.0
        %4080 = vmatpush1.msra.mxu0 0.0
        %4081 = vmatprep.subr.mxu0 0.0
        %4082 = vmatpush1.msra.mxu0 0.0
        %4083 = vmatprep.subr.mxu0 0.0
        %4084 = vmatpush1.msra.mxu0 0.0
        %4085 = vmatprep.subr.mxu0 0.0
        %4086 = vmatpush1.msra.mxu0 0.0
        %4087 = vmatprep.subr.mxu0 0.0
        %4088 = vmatpush1.msra.mxu0 0.0
        %4089 = vmatprep.subr.mxu0 0.0
        %4090 = vmatpush1.msra.mxu0 0.0
        %4091 = vmatprep.subr.mxu0 0.0
        %4092 = vmatpush1.msra.mxu0 0.0
        %4093 = vmatprep.subr.mxu0 0.0
        %4094 = vmatpush1.msra.mxu0 0.0
        %4095 = vmatprep.subr.mxu0 0.0
        %4096 = vmatpush1.msra.mxu0 0.0
        %4097 = vmatprep.subr.mxu0 0.0
        %4098 = vmatpush1.msra.mxu0 0.0
        %4099 = vmatprep.subr.mxu0 0.0
        %4100 = vmatpush1.msra.mxu0 0.0
        %4101 = vmatprep.mubr.f32.mxu0 0.0
        %4102 = vmatmul.mubr.f32.gmra.mrb[0].mxu0 %v4035
        %v4103 = vpop.f32.mrb[0].mxu0
        %v4104 = vadd.f32 0.0, %v4103
        %v4105 = vpop.f32.mrb[0].mxu0
        %4106 = vdwg.mxu0
        %v4108 = vsel %vm1335, %v3885, 0
        %v4111 = vsel %vm1335, %v2604, 0
        %v4114 = vsel %vm1335, %v2605, 0
        %v4117 = vsel %vm1335, %v2606, 0
        %v4120 = vsel %vm1335, %v2607, 0
        %4122 = vmatprep.subr.mxu0 0.0
        %4123 = vmatpush1.xpose.msra.mxu0 %v4111
        %4124 = vmatprep.subr.mxu0 0.0
        %4125 = vmatpush1.xpose.msra.mxu0 %v4114
        %4126 = vmatprep.subr.mxu0 0.0
        %4127 = vmatpush1.xpose.msra.mxu0 %v4117
        %4128 = vmatprep.subr.mxu0 0.0
        %4129 = vmatpush1.xpose.msra.mxu0 %v4120
        %4130 = vmatprep.subr.mxu0 0.0
        %4131 = vmatpush1.xpose.msra.mxu0 0.0
        %4132 = vmatprep.subr.mxu0 0.0
        %4133 = vmatpush1.xpose.msra.mxu0 0.0
        %4134 = vmatprep.subr.mxu0 0.0
        %4135 = vmatpush1.xpose.msra.mxu0 0.0
        %4136 = vmatprep.subr.mxu0 0.0
        %4137 = vmatpush1.xpose.msra.mxu0 0.0
        %4138 = vmatprep.subr.mxu0 0.0
        %4139 = vmatpush1.xpose.msra.mxu0 0.0
        %4140 = vmatprep.subr.mxu0 0.0
        %4141 = vmatpush1.xpose.msra.mxu0 0.0
        %4142 = vmatprep.subr.mxu0 0.0
        %4143 = vmatpush1.xpose.msra.mxu0 0.0
        %4144 = vmatprep.subr.mxu0 0.0
        %4145 = vmatpush1.xpose.msra.mxu0 0.0
        %4146 = vmatprep.subr.mxu0 0.0
        %4147 = vmatpush1.xpose.msra.mxu0 0.0
        %4148 = vmatprep.subr.mxu0 0.0
        %4149 = vmatpush1.xpose.msra.mxu0 0.0
        %4150 = vmatprep.subr.mxu0 0.0
        %4151 = vmatpush1.xpose.msra.mxu0 0.0
        %4152 = vmatprep.subr.mxu0 0.0
        %4153 = vmatpush1.xpose.msra.mxu0 0.0
        %4154 = vmatprep.subr.mxu0 0.0
        %4155 = vmatpush1.xpose.msra.mxu0 0.0
        %4156 = vmatprep.subr.mxu0 0.0
        %4157 = vmatpush1.xpose.msra.mxu0 0.0
        %4158 = vmatprep.subr.mxu0 0.0
        %4159 = vmatpush1.xpose.msra.mxu0 0.0
        %4160 = vmatprep.subr.mxu0 0.0
        %4161 = vmatpush1.xpose.msra.mxu0 0.0
        %4162 = vmatprep.subr.mxu0 0.0
        %4163 = vmatpush1.xpose.msra.mxu0 0.0
        %4164 = vmatprep.subr.mxu0 0.0
        %4165 = vmatpush1.xpose.msra.mxu0 0.0
        %4166 = vmatprep.subr.mxu0 0.0
        %4167 = vmatpush1.xpose.msra.mxu0 0.0
        %4168 = vmatprep.subr.mxu0 0.0
        %4169 = vmatpush1.xpose.msra.mxu0 0.0
        %4170 = vmatprep.subr.mxu0 0.0
        %4171 = vmatpush1.xpose.msra.mxu0 0.0
        %4172 = vmatprep.subr.mxu0 0.0
        %4173 = vmatpush1.xpose.msra.mxu0 0.0
        %4174 = vmatprep.subr.mxu0 0.0
        %4175 = vmatpush1.xpose.msra.mxu0 0.0
        %4176 = vmatprep.subr.mxu0 0.0
        %4177 = vmatpush1.xpose.msra.mxu0 0.0
        %4178 = vmatprep.subr.mxu0 0.0
        %4179 = vmatpush1.xpose.msra.mxu0 0.0
        %4180 = vmatprep.subr.mxu0 0.0
        %4181 = vmatpush1.xpose.msra.mxu0 0.0
        %4182 = vmatprep.subr.mxu0 0.0
        %4183 = vmatpush1.xpose.msra.mxu0 0.0
        %4184 = vmatprep.subr.mxu0 0.0
        %4185 = vmatpush1.xpose.msra.mxu0 0.0
        %4186 = vmatprep.mubr.f32.mxu0 0.0
        %4187 = vmatmul.mubr.f32.gmra.mrb[0].mxu0 %v4108
        %v4188 = vpop.f32.mrb[0].mxu0
        %v4189 = vadd.f32 0.0, %v4188
        %v4190 = vpop.f32.mrb[0].mxu0
        %4191 = vdwg.mxu0
        %v4193 = vsel %vm1335, %v3958, 0
        %v4196 = vsel %vm1335, %v2608, 0
        %v4199 = vsel %vm1335, %v2609, 0
        %v4202 = vsel %vm1335, %v2610, 0
        %v4205 = vsel %vm1335, %v2611, 0
        %4207 = vmatprep.subr.mxu0 0.0
        %4208 = vmatpush1.xpose.msra.mxu0 %v4196
        %4209 = vmatprep.subr.mxu0 0.0
        %4210 = vmatpush1.xpose.msra.mxu0 %v4199
        %4211 = vmatprep.subr.mxu0 0.0
        %4212 = vmatpush1.xpose.msra.mxu0 %v4202
        %4213 = vmatprep.subr.mxu0 0.0
        %4214 = vmatpush1.xpose.msra.mxu0 %v4205
        %4215 = vmatprep.subr.mxu0 0.0
        %4216 = vmatpush1.xpose.msra.mxu0 0.0
        %4217 = vmatprep.subr.mxu0 0.0
        %4218 = vmatpush1.xpose.msra.mxu0 0.0
        %4219 = vmatprep.subr.mxu0 0.0
        %4220 = vmatpush1.xpose.msra.mxu0 0.0
        %4221 = vmatprep.subr.mxu0 0.0
        %4222 = vmatpush1.xpose.msra.mxu0 0.0
        %4223 = vmatprep.subr.mxu0 0.0
        %4224 = vmatpush1.xpose.msra.mxu0 0.0
        %4225 = vmatprep.subr.mxu0 0.0
        %4226 = vmatpush1.xpose.msra.mxu0 0.0
        %4227 = vmatprep.subr.mxu0 0.0
        %4228 = vmatpush1.xpose.msra.mxu0 0.0
        %4229 = vmatprep.subr.mxu0 0.0
        %4230 = vmatpush1.xpose.msra.mxu0 0.0
        %4231 = vmatprep.subr.mxu0 0.0
        %4232 = vmatpush1.xpose.msra.mxu0 0.0
        %4233 = vmatprep.subr.mxu0 0.0
        %4234 = vmatpush1.xpose.msra.mxu0 0.0
        %4235 = vmatprep.subr.mxu0 0.0
        %4236 = vmatpush1.xpose.msra.mxu0 0.0
        %4237 = vmatprep.subr.mxu0 0.0
        %4238 = vmatpush1.xpose.msra.mxu0 0.0
        %4239 = vmatprep.subr.mxu0 0.0
        %4240 = vmatpush1.xpose.msra.mxu0 0.0
        %4241 = vmatprep.subr.mxu0 0.0
        %4242 = vmatpush1.xpose.msra.mxu0 0.0
        %4243 = vmatprep.subr.mxu0 0.0
        %4244 = vmatpush1.xpose.msra.mxu0 0.0
        %4245 = vmatprep.subr.mxu0 0.0
        %4246 = vmatpush1.xpose.msra.mxu0 0.0
        %4247 = vmatprep.subr.mxu0 0.0
        %4248 = vmatpush1.xpose.msra.mxu0 0.0
        %4249 = vmatprep.subr.mxu0 0.0
        %4250 = vmatpush1.xpose.msra.mxu0 0.0
        %4251 = vmatprep.subr.mxu0 0.0
        %4252 = vmatpush1.xpose.msra.mxu0 0.0
        %4253 = vmatprep.subr.mxu0 0.0
        %4254 = vmatpush1.xpose.msra.mxu0 0.0
        %4255 = vmatprep.subr.mxu0 0.0
        %4256 = vmatpush1.xpose.msra.mxu0 0.0
        %4257 = vmatprep.subr.mxu0 0.0
        %4258 = vmatpush1.xpose.msra.mxu0 0.0
        %4259 = vmatprep.subr.mxu0 0.0
        %4260 = vmatpush1.xpose.msra.mxu0 0.0
        %4261 = vmatprep.subr.mxu0 0.0
        %4262 = vmatpush1.xpose.msra.mxu0 0.0
        %4263 = vmatprep.subr.mxu0 0.0
        %4264 = vmatpush1.xpose.msra.mxu0 0.0
        %4265 = vmatprep.subr.mxu0 0.0
        %4266 = vmatpush1.xpose.msra.mxu0 0.0
        %4267 = vmatprep.subr.mxu0 0.0
        %4268 = vmatpush1.xpose.msra.mxu0 0.0
        %4269 = vmatprep.subr.mxu0 0.0
        %4270 = vmatpush1.xpose.msra.mxu0 0.0
        %4271 = vmatprep.mubr.f32.mxu0 0.0
        %4272 = vmatmul.mubr.f32.gmra.mrb[0].mxu0 %v4193
        %v4273 = vpop.f32.mrb[0].mxu0
        %v4274 = vadd.f32 0.0, %v4273
        %v4275 = vpop.f32.mrb[0].mxu0
        %4276 = vdwg.mxu0
        %v4278 = vsel %vm1335, %v4031, 0
        %v4281 = vsel %vm1335, %v2612, 0
        %v4284 = vsel %vm1335, %v2613, 0
        %v4287 = vsel %vm1335, %v2614, 0
        %v4290 = vsel %vm1335, %v2615, 0
        %4292 = vmatprep.subr.mxu0 0.0
        %4293 = vmatpush1.xpose.msra.mxu0 %v4281
        %4294 = vmatprep.subr.mxu0 0.0
        %4295 = vmatpush1.xpose.msra.mxu0 %v4284
        %4296 = vmatprep.subr.mxu0 0.0
        %4297 = vmatpush1.xpose.msra.mxu0 %v4287
        %4298 = vmatprep.subr.mxu0 0.0
        %4299 = vmatpush1.xpose.msra.mxu0 %v4290
        %4300 = vmatprep.subr.mxu0 0.0
        %4301 = vmatpush1.xpose.msra.mxu0 0.0
        %4302 = vmatprep.subr.mxu0 0.0
        %4303 = vmatpush1.xpose.msra.mxu0 0.0
        %4304 = vmatprep.subr.mxu0 0.0
        %4305 = vmatpush1.xpose.msra.mxu0 0.0
        %4306 = vmatprep.subr.mxu0 0.0
        %4307 = vmatpush1.xpose.msra.mxu0 0.0
        %4308 = vmatprep.subr.mxu0 0.0
        %4309 = vmatpush1.xpose.msra.mxu0 0.0
        %4310 = vmatprep.subr.mxu0 0.0
        %4311 = vmatpush1.xpose.msra.mxu0 0.0
        %4312 = vmatprep.subr.mxu0 0.0
        %4313 = vmatpush1.xpose.msra.mxu0 0.0
        %4314 = vmatprep.subr.mxu0 0.0
        %4315 = vmatpush1.xpose.msra.mxu0 0.0
        %4316 = vmatprep.subr.mxu0 0.0
        %4317 = vmatpush1.xpose.msra.mxu0 0.0
        %4318 = vmatprep.subr.mxu0 0.0
        %4319 = vmatpush1.xpose.msra.mxu0 0.0
        %4320 = vmatprep.subr.mxu0 0.0
        %4321 = vmatpush1.xpose.msra.mxu0 0.0
        %4322 = vmatprep.subr.mxu0 0.0
        %4323 = vmatpush1.xpose.msra.mxu0 0.0
        %4324 = vmatprep.subr.mxu0 0.0
        %4325 = vmatpush1.xpose.msra.mxu0 0.0
        %4326 = vmatprep.subr.mxu0 0.0
        %4327 = vmatpush1.xpose.msra.mxu0 0.0
        %4328 = vmatprep.subr.mxu0 0.0
        %4329 = vmatpush1.xpose.msra.mxu0 0.0
        %4330 = vmatprep.subr.mxu0 0.0
        %4331 = vmatpush1.xpose.msra.mxu0 0.0
        %4332 = vmatprep.subr.mxu0 0.0
        %4333 = vmatpush1.xpose.msra.mxu0 0.0
        %4334 = vmatprep.subr.mxu0 0.0
        %4335 = vmatpush1.xpose.msra.mxu0 0.0
        %4336 = vmatprep.subr.mxu0 0.0
        %4337 = vmatpush1.xpose.msra.mxu0 0.0
        %4338 = vmatprep.subr.mxu0 0.0
        %4339 = vmatpush1.xpose.msra.mxu0 0.0
        %4340 = vmatprep.subr.mxu0 0.0
        %4341 = vmatpush1.xpose.msra.mxu0 0.0
        %4342 = vmatprep.subr.mxu0 0.0
        %4343 = vmatpush1.xpose.msra.mxu0 0.0
        %4344 = vmatprep.subr.mxu0 0.0
        %4345 = vmatpush1.xpose.msra.mxu0 0.0
        %4346 = vmatprep.subr.mxu0 0.0
        %4347 = vmatpush1.xpose.msra.mxu0 0.0
        %4348 = vmatprep.subr.mxu0 0.0
        %4349 = vmatpush1.xpose.msra.mxu0 0.0
        %4350 = vmatprep.subr.mxu0 0.0
        %4351 = vmatpush1.xpose.msra.mxu0 0.0
        %4352 = vmatprep.subr.mxu0 0.0
        %4353 = vmatpush1.xpose.msra.mxu0 0.0
        %4354 = vmatprep.subr.mxu0 0.0
        %4355 = vmatpush1.xpose.msra.mxu0 0.0
        %4356 = vmatprep.mubr.f32.mxu0 0.0
        %4357 = vmatmul.mubr.f32.gmra.mrb[0].mxu0 %v4278
        %v4358 = vpop.f32.mrb[0].mxu0
        %v4359 = vadd.f32 0.0, %v4358
        %v4360 = vpop.f32.mrb[0].mxu0
        %4361 = vdwg.mxu0
        %v4363 = vsel %vm1335, %v4104, 0
        %v4366 = vsel %vm1335, %v2616, 0
        %v4369 = vsel %vm1335, %v2617, 0
        %v4372 = vsel %vm1335, %v2618, 0
        %v4375 = vsel %vm1335, %v2619, 0
        %4377 = vmatprep.subr.mxu0 0.0
        %4378 = vmatpush1.xpose.msra.mxu0 %v4366
        %4379 = vmatprep.subr.mxu0 0.0
        %4380 = vmatpush1.xpose.msra.mxu0 %v4369
        %4381 = vmatprep.subr.mxu0 0.0
        %4382 = vmatpush1.xpose.msra.mxu0 %v4372
        %4383 = vmatprep.subr.mxu0 0.0
        %4384 = vmatpush1.xpose.msra.mxu0 %v4375
        %4385 = vmatprep.subr.mxu0 0.0
        %4386 = vmatpush1.xpose.msra.mxu0 0.0
        %4387 = vmatprep.subr.mxu0 0.0
        %4388 = vmatpush1.xpose.msra.mxu0 0.0
        %4389 = vmatprep.subr.mxu0 0.0
        %4390 = vmatpush1.xpose.msra.mxu0 0.0
        %4391 = vmatprep.subr.mxu0 0.0
        %4392 = vmatpush1.xpose.msra.mxu0 0.0
        %4393 = vmatprep.subr.mxu0 0.0
        %4394 = vmatpush1.xpose.msra.mxu0 0.0
        %4395 = vmatprep.subr.mxu0 0.0
        %4396 = vmatpush1.xpose.msra.mxu0 0.0
        %4397 = vmatprep.subr.mxu0 0.0
        %4398 = vmatpush1.xpose.msra.mxu0 0.0
        %4399 = vmatprep.subr.mxu0 0.0
        %4400 = vmatpush1.xpose.msra.mxu0 0.0
        %4401 = vmatprep.subr.mxu0 0.0
        %4402 = vmatpush1.xpose.msra.mxu0 0.0
        %4403 = vmatprep.subr.mxu0 0.0
        %4404 = vmatpush1.xpose.msra.mxu0 0.0
        %4405 = vmatprep.subr.mxu0 0.0
        %4406 = vmatpush1.xpose.msra.mxu0 0.0
        %4407 = vmatprep.subr.mxu0 0.0
        %4408 = vmatpush1.xpose.msra.mxu0 0.0
        %4409 = vmatprep.subr.mxu0 0.0
        %4410 = vmatpush1.xpose.msra.mxu0 0.0
        %4411 = vmatprep.subr.mxu0 0.0
        %4412 = vmatpush1.xpose.msra.mxu0 0.0
        %4413 = vmatprep.subr.mxu0 0.0
        %4414 = vmatpush1.xpose.msra.mxu0 0.0
        %4415 = vmatprep.subr.mxu0 0.0
        %4416 = vmatpush1.xpose.msra.mxu0 0.0
        %4417 = vmatprep.subr.mxu0 0.0
        %4418 = vmatpush1.xpose.msra.mxu0 0.0
        %4419 = vmatprep.subr.mxu0 0.0
        %4420 = vmatpush1.xpose.msra.mxu0 0.0
        %4421 = vmatprep.subr.mxu0 0.0
        %4422 = vmatpush1.xpose.msra.mxu0 0.0
        %4423 = vmatprep.subr.mxu0 0.0
        %4424 = vmatpush1.xpose.msra.mxu0 0.0
        %4425 = vmatprep.subr.mxu0 0.0
        %4426 = vmatpush1.xpose.msra.mxu0 0.0
        %4427 = vmatprep.subr.mxu0 0.0
        %4428 = vmatpush1.xpose.msra.mxu0 0.0
        %4429 = vmatprep.subr.mxu0 0.0
        %4430 = vmatpush1.xpose.msra.mxu0 0.0
        %4431 = vmatprep.subr.mxu0 0.0
        %4432 = vmatpush1.xpose.msra.mxu0 0.0
        %4433 = vmatprep.subr.mxu0 0.0
        %4434 = vmatpush1.xpose.msra.mxu0 0.0
        %4435 = vmatprep.subr.mxu0 0.0
        %4436 = vmatpush1.xpose.msra.mxu0 0.0
        %4437 = vmatprep.subr.mxu0 0.0
        %4438 = vmatpush1.xpose.msra.mxu0 0.0
        %4439 = vmatprep.subr.mxu0 0.0
        %4440 = vmatpush1.xpose.msra.mxu0 0.0
        %4441 = vmatprep.mubr.f32.mxu0 0.0
        %4442 = vmatmul.mubr.f32.gmra.mrb[0].mxu0 %v4363
        %v4443 = vpop.f32.mrb[0].mxu0
        %v4444 = vadd.f32 0.0, %v4443
        %v4445 = vpop.f32.mrb[0].mxu0
        %4446 = vdwg.mxu0
        %v4447 = vsel %vm403, %v4189, 0.0
        %v4448 = vsel %vm403, %v4274, 0.0
        %v4449 = vadd.f32 %v4447, %v4448
        %v4450 = vsel %vm403, %v4359, 0.0
        %v4451 = vadd.f32 %v4449, %v4450
        %v4452 = vsel %vm403, %v4444, 0.0
        %v4453 = vadd.f32 %v4451, %v4452
        %v4454 = vadd.f32 %v2531, %v4453
        %v4455 = vlaneseq
        %v4456 = vshrl.u32 %v4455, 7
        %v4457 = vsub.s32 2, %v4456
        %v4458 = vrot.slane %v299, %v4457
        %v4459 = vadd.f32 %v4454, %v4458
        %v4460 = vsel %vm403, %v4459, 0.0
        %4461 = vadd.xlane.f32.xlu0 %v4460
        %v4462 = vpop.xlane.xlu0 %4461
        %v4463 = vmul.f32 %v4462, %v407
        %v4464 = vsub.f32 %v4459, %v4463
        %v4465 = vmul.f32 %v4464, %v4464
        %v4466 = vsel %vm403, %v4465, 0.0
        %4467 = vadd.xlane.f32.xlu0 %v4466
        %v4468 = vpop.xlane.xlu0 %4467
        %v4469 = vmul.f32 %v4468, %v407
        %v4470 = vadd.f32 %v4469, 1e-05
        %v4471 = vrsqrt.pop %v4470
        %v4472 = vmul.f32 %v4464, %v4471
        %v4473 = vlaneseq
        %v4474 = vshrl.u32 %v4473, 7
        %v4475 = vsub.s32 0, %v4474
        %v4476 = vrot.slane %v299, %v4475
        %v4477 = vmul.f32 %v4472, %v4476
        %v4478 = vlaneseq
        %v4479 = vshrl.u32 %v4478, 7
        %v4480 = vsub.s32 1, %v4479
        %v4481 = vrot.slane %v299, %v4480
        %v4482 = vadd.f32 %v4477, %v4481
        %s4483 = scalar_lea.vmem %s3, 32
        %v4484 = vld [vmem:[%s4483] sm:$0xff]
        %v4485 = vld [vmem:[%s4483 + $0x8] sm:$0xff]
        %v4486 = vld [vmem:[%s4483 + $0x10] sm:$0xff]
        %v4487 = vld [vmem:[%s4483 + $0x18] sm:$0xff]
        %v4488 = vlaneseq
        %v4489 = vshrl.u32 %v4488, 7
        %v4490 = vsub.s32 1, %v4489
        %v4491 = vrot.slane %v300, %v4490
        %v4493 = vsel %vm403, %v4482, 0
        %4495 = vmatprep.subr.mxu0 0.0
        %4496 = vmatpush1.msra.mxu0 %v4484
        %4497 = vmatprep.subr.mxu0 0.0
        %4498 = vmatpush1.msra.mxu0 %v4485
        %4499 = vmatprep.subr.mxu0 0.0
        %4500 = vmatpush1.msra.mxu0 %v4486
        %4501 = vmatprep.subr.mxu0 0.0
        %4502 = vmatpush1.msra.mxu0 %v4487
        %4503 = vmatprep.subr.mxu0 0.0
        %4504 = vmatpush1.msra.mxu0 0.0
        %4505 = vmatprep.subr.mxu0 0.0
        %4506 = vmatpush1.msra.mxu0 0.0
        %4507 = vmatprep.subr.mxu0 0.0
        %4508 = vmatpush1.msra.mxu0 0.0
        %4509 = vmatprep.subr.mxu0 0.0
        %4510 = vmatpush1.msra.mxu0 0.0
        %4511 = vmatprep.subr.mxu0 0.0
        %4512 = vmatpush1.msra.mxu0 0.0
        %4513 = vmatprep.subr.mxu0 0.0
        %4514 = vmatpush1.msra.mxu0 0.0
        %4515 = vmatprep.subr.mxu0 0.0
        %4516 = vmatpush1.msra.mxu0 0.0
        %4517 = vmatprep.subr.mxu0 0.0
        %4518 = vmatpush1.msra.mxu0 0.0
        %4519 = vmatprep.subr.mxu0 0.0
        %4520 = vmatpush1.msra.mxu0 0.0
        %4521 = vmatprep.subr.mxu0 0.0
        %4522 = vmatpush1.msra.mxu0 0.0
        %4523 = vmatprep.subr.mxu0 0.0
        %4524 = vmatpush1.msra.mxu0 0.0
        %4525 = vmatprep.subr.mxu0 0.0
        %4526 = vmatpush1.msra.mxu0 0.0
        %4527 = vmatprep.subr.mxu0 0.0
        %4528 = vmatpush1.msra.mxu0 0.0
        %4529 = vmatprep.subr.mxu0 0.0
        %4530 = vmatpush1.msra.mxu0 0.0
        %4531 = vmatprep.subr.mxu0 0.0
        %4532 = vmatpush1.msra.mxu0 0.0
        %4533 = vmatprep.subr.mxu0 0.0
        %4534 = vmatpush1.msra.mxu0 0.0
        %4535 = vmatprep.subr.mxu0 0.0
        %4536 = vmatpush1.msra.mxu0 0.0
        %4537 = vmatprep.subr.mxu0 0.0
        %4538 = vmatpush1.msra.mxu0 0.0
        %4539 = vmatprep.subr.mxu0 0.0
        %4540 = vmatpush1.msra.mxu0 0.0
        %4541 = vmatprep.subr.mxu0 0.0
        %4542 = vmatpush1.msra.mxu0 0.0
        %4543 = vmatprep.subr.mxu0 0.0
        %4544 = vmatpush1.msra.mxu0 0.0
        %4545 = vmatprep.subr.mxu0 0.0
        %4546 = vmatpush1.msra.mxu0 0.0
        %4547 = vmatprep.subr.mxu0 0.0
        %4548 = vmatpush1.msra.mxu0 0.0
        %4549 = vmatprep.subr.mxu0 0.0
        %4550 = vmatpush1.msra.mxu0 0.0
        %4551 = vmatprep.subr.mxu0 0.0
        %4552 = vmatpush1.msra.mxu0 0.0
        %4553 = vmatprep.subr.mxu0 0.0
        %4554 = vmatpush1.msra.mxu0 0.0
        %4555 = vmatprep.subr.mxu0 0.0
        %4556 = vmatpush1.msra.mxu0 0.0
        %4557 = vmatprep.subr.mxu0 0.0
        %4558 = vmatpush1.msra.mxu0 0.0
        %4559 = vmatprep.mubr.f32.mxu0 0.0
        %4560 = vmatmul.mubr.f32.gmra.mrb[0].mxu0 %v4493
        %v4561 = vpop.f32.mrb[0].mxu0
        %v4562 = vadd.f32 %v4491, %v4561
        %v4563 = vpop.f32.mrb[0].mxu0
        %4564 = vdwg.mxu0
        %v4565 = vmax.f32 %v4562, 0.0
        %s4566 = scalar_lea.vmem %s4, 128
        %v4567 = vld [vmem:[%s4566] sm:$0xff]
        %v4568 = vld [vmem:[%s4566 + $0x8] sm:$0xff]
        %v4569 = vld [vmem:[%s4566 + $0x10] sm:$0xff]
        %v4570 = vld [vmem:[%s4566 + $0x18] sm:$0xff]
        %v4571 = vld [vmem:[%s4566 + $0x20] sm:$0xff]
        %v4572 = vld [vmem:[%s4566 + $0x28] sm:$0xff]
        %v4573 = vld [vmem:[%s4566 + $0x30] sm:$0xff]
        %v4574 = vld [vmem:[%s4566 + $0x38] sm:$0xff]
        %v4575 = vld [vmem:[%s4566 + $0x40] sm:$0xff]
        %v4576 = vld [vmem:[%s4566 + $0x48] sm:$0xff]
        %v4577 = vld [vmem:[%s4566 + $0x50] sm:$0xff]
        %v4578 = vld [vmem:[%s4566 + $0x58] sm:$0xff]
        %v4579 = vld [vmem:[%s4566 + $0x60] sm:$0xff]
        %v4580 = vld [vmem:[%s4566 + $0x68] sm:$0xff]
        %v4581 = vld [vmem:[%s4566 + $0x70] sm:$0xff]
        %v4582 = vld [vmem:[%s4566 + $0x78] sm:$0xff]
        %4583 = vmatprep.subr.mxu0 0.0
        %4584 = vmatpush1.msra.mxu0 %v4567
        %4585 = vmatprep.subr.mxu0 0.0
        %4586 = vmatpush1.msra.mxu0 %v4568
        %4587 = vmatprep.subr.mxu0 0.0
        %4588 = vmatpush1.msra.mxu0 %v4569
        %4589 = vmatprep.subr.mxu0 0.0
        %4590 = vmatpush1.msra.mxu0 %v4570
        %4591 = vmatprep.subr.mxu0 0.0
        %4592 = vmatpush1.msra.mxu0 %v4571
        %4593 = vmatprep.subr.mxu0 0.0
        %4594 = vmatpush1.msra.mxu0 %v4572
        %4595 = vmatprep.subr.mxu0 0.0
        %4596 = vmatpush1.msra.mxu0 %v4573
        %4597 = vmatprep.subr.mxu0 0.0
        %4598 = vmatpush1.msra.mxu0 %v4574
        %4599 = vmatprep.subr.mxu0 0.0
        %4600 = vmatpush1.msra.mxu0 %v4575
        %4601 = vmatprep.subr.mxu0 0.0
        %4602 = vmatpush1.msra.mxu0 %v4576
        %4603 = vmatprep.subr.mxu0 0.0
        %4604 = vmatpush1.msra.mxu0 %v4577
        %4605 = vmatprep.subr.mxu0 0.0
        %4606 = vmatpush1.msra.mxu0 %v4578
        %4607 = vmatprep.subr.mxu0 0.0
        %4608 = vmatpush1.msra.mxu0 %v4579
        %4609 = vmatprep.subr.mxu0 0.0
        %4610 = vmatpush1.msra.mxu0 %v4580
        %4611 = vmatprep.subr.mxu0 0.0
        %4612 = vmatpush1.msra.mxu0 %v4581
        %4613 = vmatprep.subr.mxu0 0.0
        %4614 = vmatpush1.msra.mxu0 %v4582
        %4615 = vmatprep.subr.mxu0 0.0
        %4616 = vmatpush1.msra.mxu0 0.0
        %4617 = vmatprep.subr.mxu0 0.0
        %4618 = vmatpush1.msra.mxu0 0.0
        %4619 = vmatprep.subr.mxu0 0.0
        %4620 = vmatpush1.msra.mxu0 0.0
        %4621 = vmatprep.subr.mxu0 0.0
        %4622 = vmatpush1.msra.mxu0 0.0
        %4623 = vmatprep.subr.mxu0 0.0
        %4624 = vmatpush1.msra.mxu0 0.0
        %4625 = vmatprep.subr.mxu0 0.0
        %4626 = vmatpush1.msra.mxu0 0.0
        %4627 = vmatprep.subr.mxu0 0.0
        %4628 = vmatpush1.msra.mxu0 0.0
        %4629 = vmatprep.subr.mxu0 0.0
        %4630 = vmatpush1.msra.mxu0 0.0
        %4631 = vmatprep.subr.mxu0 0.0
        %4632 = vmatpush1.msra.mxu0 0.0
        %4633 = vmatprep.subr.mxu0 0.0
        %4634 = vmatpush1.msra.mxu0 0.0
        %4635 = vmatprep.subr.mxu0 0.0
        %4636 = vmatpush1.msra.mxu0 0.0
        %4637 = vmatprep.subr.mxu0 0.0
        %4638 = vmatpush1.msra.mxu0 0.0
        %4639 = vmatprep.subr.mxu0 0.0
        %4640 = vmatpush1.msra.mxu0 0.0
        %4641 = vmatprep.subr.mxu0 0.0
        %4642 = vmatpush1.msra.mxu0 0.0
        %4643 = vmatprep.subr.mxu0 0.0
        %4644 = vmatpush1.msra.mxu0 0.0
        %4645 = vmatprep.subr.mxu0 0.0
        %4646 = vmatpush1.msra.mxu0 0.0
        %4647 = vmatprep.mubr.f32.mxu0 0.0
        %4648 = vmatmul.mubr.f32.gmra.mrb[0].mxu0 %v4565
        %v4649 = vpop.f32.mrb[0].mxu0
        %v4650 = vadd.f32 0.0, %v4649
        %v4651 = vpop.f32.mrb[0].mxu0
        %4652 = vdwg.mxu0
        %v4653 = vadd.f32 %v4459, %v4650
        %v4654 = vlaneseq
        %v4655 = vshrl.u32 %v4654, 7
        %v4656 = vsub.s32 3, %v4655
        %v4657 = vrot.slane %v299, %v4656
        %v4658 = vadd.f32 %v4653, %v4657
        %v4659 = vsel %vm403, %v4658, 0.0
        %4660 = vadd.xlane.f32.xlu0 %v4659
        %v4661 = vpop.xlane.xlu0 %4660
        %v4662 = vmul.f32 %v4661, %v407
        %v4663 = vsub.f32 %v4658, %v4662
        %v4664 = vmul.f32 %v4663, %v4663
        %v4665 = vsel %vm403, %v4664, 0.0
        %4666 = vadd.xlane.f32.xlu0 %v4665
        %v4667 = vpop.xlane.xlu0 %4666
        %v4668 = vmul.f32 %v4667, %v407
        %v4669 = vadd.f32 %v4668, 1e-05
        %v4670 = vrsqrt.pop %v4669
        %v4671 = vmul.f32 %v4663, %v4670
        %v4672 = vlaneseq
        %v4673 = vshrl.u32 %v4672, 7
        %v4674 = vsub.s32 4, %v4673
        %v4675 = vrot.slane %v299, %v4674
        %v4676 = vmul.f32 %v4671, %v4675
        %v4677 = vlaneseq
        %v4678 = vshrl.u32 %v4677, 7
        %v4679 = vsub.s32 5, %v4678
        %v4680 = vrot.slane %v299, %v4679
        %v4681 = vadd.f32 %v4676, %v4680
        %v4682 = vld [vmem:[%s5] sm:$0xff]
        %v4683 = vld [vmem:[%s5 + $0x8] sm:$0xff]
        %v4684 = vld [vmem:[%s5 + $0x10] sm:$0xff]
        %v4685 = vld [vmem:[%s5 + $0x18] sm:$0xff]
        %v4686 = vlaneseq
        %v4687 = vshrl.u32 %v4686, 7
        %v4688 = vsub.s32 2, %v4687
        %v4689 = vrot.slane %v300, %v4688
        %v4691 = vsel %vm403, %v4681, 0
        %4693 = vmatprep.subr.mxu0 0.0
        %4694 = vmatpush1.msra.mxu0 %v4682
        %4695 = vmatprep.subr.mxu0 0.0
        %4696 = vmatpush1.msra.mxu0 %v4683
        %4697 = vmatprep.subr.mxu0 0.0
        %4698 = vmatpush1.msra.mxu0 %v4684
        %4699 = vmatprep.subr.mxu0 0.0
        %4700 = vmatpush1.msra.mxu0 %v4685
        %4701 = vmatprep.subr.mxu0 0.0
        %4702 = vmatpush1.msra.mxu0 0.0
        %4703 = vmatprep.subr.mxu0 0.0
        %4704 = vmatpush1.msra.mxu0 0.0
        %4705 = vmatprep.subr.mxu0 0.0
        %4706 = vmatpush1.msra.mxu0 0.0
        %4707 = vmatprep.subr.mxu0 0.0
        %4708 = vmatpush1.msra.mxu0 0.0
        %4709 = vmatprep.subr.mxu0 0.0
        %4710 = vmatpush1.msra.mxu0 0.0
        %4711 = vmatprep.subr.mxu0 0.0
        %4712 = vmatpush1.msra.mxu0 0.0
        %4713 = vmatprep.subr.mxu0 0.0
        %4714 = vmatpush1.msra.mxu0 0.0
        %4715 = vmatprep.subr.mxu0 0.0
        %4716 = vmatpush1.msra.mxu0 0.0
        %4717 = vmatprep.subr.mxu0 0.0
        %4718 = vmatpush1.msra.mxu0 0.0
        %4719 = vmatprep.subr.mxu0 0.0
        %4720 = vmatpush1.msra.mxu0 0.0
        %4721 = vmatprep.subr.mxu0 0.0
        %4722 = vmatpush1.msra.mxu0 0.0
        %4723 = vmatprep.subr.mxu0 0.0
        %4724 = vmatpush1.msra.mxu0 0.0
        %4725 = vmatprep.subr.mxu0 0.0
        %4726 = vmatpush1.msra.mxu0 0.0
        %4727 = vmatprep.subr.mxu0 0.0
        %4728 = vmatpush1.msra.mxu0 0.0
        %4729 = vmatprep.subr.mxu0 0.0
        %4730 = vmatpush1.msra.mxu0 0.0
        %4731 = vmatprep.subr.mxu0 0.0
        %4732 = vmatpush1.msra.mxu0 0.0
        %4733 = vmatprep.subr.mxu0 0.0
        %4734 = vmatpush1.msra.mxu0 0.0
        %4735 = vmatprep.subr.mxu0 0.0
        %4736 = vmatpush1.msra.mxu0 0.0
        %4737 = vmatprep.subr.mxu0 0.0
        %4738 = vmatpush1.msra.mxu0 0.0
        %4739 = vmatprep.subr.mxu0 0.0
        %4740 = vmatpush1.msra.mxu0 0.0
        %4741 = vmatprep.subr.mxu0 0.0
        %4742 = vmatpush1.msra.mxu0 0.0
        %4743 = vmatprep.subr.mxu0 0.0
        %4744 = vmatpush1.msra.mxu0 0.0
        %4745 = vmatprep.subr.mxu0 0.0
        %4746 = vmatpush1.msra.mxu0 0.0
        %4747 = vmatprep.subr.mxu0 0.0
        %4748 = vmatpush1.msra.mxu0 0.0
        %4749 = vmatprep.subr.mxu0 0.0
        %4750 = vmatpush1.msra.mxu0 0.0
        %4751 = vmatprep.subr.mxu0 0.0
        %4752 = vmatpush1.msra.mxu0 0.0
        %4753 = vmatprep.subr.mxu0 0.0
        %4754 = vmatpush1.msra.mxu0 0.0
        %4755 = vmatprep.subr.mxu0 0.0
        %4756 = vmatpush1.msra.mxu0 0.0
        %4757 = vmatprep.mubr.f32.mxu0 0.0
        %4758 = vmatmul.mubr.f32.gmra.mrb[0].mxu0 %v4691
        %v4759 = vpop.f32.mrb[0].mxu0
        %v4760 = vadd.f32 %v4689, %v4759
        %v4761 = vpop.f32.mrb[0].mxu0
        %4762 = vdwg.mxu0
        %4763 = vst [vmem:[%s294] sm:$0xff] %v4760
        %s4764 = sand.u32 %s203, 1
        %s4765 = scalar_lea.sflag [#allocation3], %s4764
        %s4766 = sand.u32 %s203, 1
        %s4767 = smul.addr %s4766, 8
        %s4768 = scalar_lea.vmem [#allocation2], %s4767
        // Predicated region
        $region53: #{gpt_forward.1} parent=51 // pred_check
          %p4769 = pneg %p213
        $region54: #{gpt_forward.1} parent=51 // pred_check_branch
          %4771 = sbr.rel (%p4769) target = $region56
        $region55: #{gpt_forward.1} parent=51 // pred_region
          %s4773 = ssub.s32 128, 128
          %4774 = vsyncadd %s4765, %s4773
          %s4775 = smul.addr %s22, 128
          %s4776 = scalar_lea.hbm %s8, %s4775
          %s4778 = sshll.u32 %s4768, 4
          %s4779 = int_to_ptr.vmem [resolvable:$true] %s4778
          %4781 = dma.vmem_to_hbm [thread:$0]  %s4779, 128, %s4776, %s4765
        $region56: #{gpt_forward.1} parent=51 // pred_fallthru
          _
      $region52: #{gpt_forward.1} parent=5 // pred_fallthru
        _
      %p4782 = scmp.le.s32.totalorder 2, %s17
      // Predicated region
      $region57: #{gpt_forward.1} parent=5 // pred_check
        %p4783 = pneg %p4782
      $region58: #{gpt_forward.1} parent=5 // pred_check_branch
        %4785 = sbr.rel (%p4783) target = $region60
      $region59: #{gpt_forward.1} parent=5 // pred_region
        %s4786 = ssub.s32 %s17, 2
        // Predicated region
        $region61: #{gpt_forward.1} parent=59 // pred_check
          %p4787 = pneg %p219
        $region62: #{gpt_forward.1} parent=59 // pred_check_branch
          %4789 = sbr.rel (%p4787) target = $region64
        $region63: #{gpt_forward.1} parent=59 // pred_region
          %s4790 = sand.u32 %s204, 1
          %s4791 = scalar_lea.sflag [#allocation3], %s4790
          %s4792 = sand.u32 %s204, 1
          %s4793 = smul.addr %s4792, 8
          %s4794 = scalar_lea.vmem [#allocation2], %s4793
          %4795 = dma.done %s4791, 128
        $region64: #{gpt_forward.1} parent=59 // pred_fallthru
          _
      $region60: #{gpt_forward.1} parent=5 // pred_fallthru
        _
    $region6: #{gpt_forward.1} parent=1 // loop_footer
      %s21 = sadd.s32 1, %s17
    $region7: #{gpt_forward.1} parent=1 // loop_footer_branch
      %16 = sbr.rel target = $region3
    $region8: #{gpt_forward.1} parent=1 // loop_exit
      _
    %4796 = vsyncpa [#allocation3], 1
    %s4797 = scalar_lea.sflag [#allocation3], 1
    %4798 = vsyncpa %s4797, 1

</llo_original>
